<compile_context>
chip_gen: v5e
topology: v5e:2x2
jax: 0.10.0
libtpu: 0.0.40
codegen_flags: <defaults>
</compile_context>

<pallas_src>
import functools

import numpy as np

import jax
import jax.numpy as jnp
from jax.experimental import pallas as pl
from jax.experimental.pallas import tpu as pltpu

# --- small synthetic model config (module defaults scaled down) --------------
NUM_CLASSES = 8
DEPTH = 2
NUM_HEADS = 4
EMBED_DIM = 32
MLP_RATIO = 4
PATCH_SIZE = 16
DIM_TOKENS_ENC = 32          # dim_tokens_enc passed to .init()
MAIN_TASKS = ("rgb",)
LN_EPS = 1e-6                # norm_layer = partial(nn.LayerNorm, eps=1e-6)

VEC_W = 128                  # packed-slab lane width (>= dhid, 3*d)
assert max(EMBED_DIM * MLP_RATIO, 3 * EMBED_DIM, EMBED_DIM,
           NUM_CLASSES) <= VEC_W


# ------------------------- packed parameter layouts ---------------------------
def _build_wmat_layout():
    d, dhid = EMBED_DIM, EMBED_DIM * MLP_RATIO
    ents = [("proj_dec", DIM_TOKENS_ENC, d)]
    for i in range(DEPTH):
        ents += [(f"qkv{i}", d, 3 * d), (f"proj{i}", d, d),
                 (f"fc1{i}", d, dhid), (f"fc2{i}", dhid, d)]
    ents += [("patch_proj", d, d), ("classes_proj", d, d)]
    layout, off = {}, 0
    for name, r, c in ents:
        layout[name] = (off, r, c)
        off += r
    return layout, off


def _build_vec_layout():
    d, dhid, c = EMBED_DIM, EMBED_DIM * MLP_RATIO, NUM_CLASSES
    ents = [("proj_dec_b", 1, d)]
    for i in range(DEPTH):
        ents += [(f"b{i}_n1w", 1, d), (f"b{i}_n1b", 1, d),
                 (f"b{i}_qkvb", 1, 3 * d), (f"b{i}_projb", 1, d),
                 (f"b{i}_n2w", 1, d), (f"b{i}_n2b", 1, d),
                 (f"b{i}_f1b", 1, dhid), (f"b{i}_f2b", 1, d)]
    ents += [("dec_nw", 1, d), ("dec_nb", 1, d),
             ("mask_norm", c, 2), ("cls_emb", c, d)]
    layout, off = {}, 0
    for name, r, cc in ents:
        layout[name] = (off, r, cc)
        off += r
    return layout, off


WMAT_LAYOUT, WMAT_ROWS = _build_wmat_layout()
VEC_LAYOUT, VEC_ROWS = _build_vec_layout()


# ----------------------------- in-kernel helpers -----------------------------
def _layernorm(x, w, b, eps=LN_EPS):
    mu = jnp.mean(x, axis=-1, keepdims=True)
    xc = x - mu
    var = jnp.mean(xc * xc, axis=-1, keepdims=True)
    return xc * jax.lax.rsqrt(var + eps) * w + b


def _l2_normalize(x, eps=1e-12):
    # F.normalize(p=2, dim=-1): x / max(||x||_2, eps)  (rsqrt rides the EUP)
    ss = jnp.sum(x * x, axis=-1, keepdims=True)
    return x * jax.lax.rsqrt(jnp.maximum(ss, eps * eps))


def _gelu_tanh(x):
    # tanh-approximate GELU (EUP tanh); ~1e-3 max abs deviation vs exact erf.
    c = 0.7978845608028654  # sqrt(2/pi)
    return 0.5 * x * (1.0 + jnp.tanh(c * (x + 0.044715 * x * x * x)))


# --------------------------------- kernel ------------------------------------
def segmenter_kernel(depth, num_heads, num_classes, bt, n_h, n_w, fold, *refs):
    tokens_ref, vec_ref, wmat_ref, iwt_ref, bigih_ref, out_ref = refs
    f32, bf16 = jnp.float32, jnp.bfloat16

    d = EMBED_DIM
    dh = d // num_heads
    C = num_classes
    N = n_h * n_w
    S = N + C
    H2 = bigih_ref.shape[0] // (fold * C)
    scale = float(dh) ** -0.5

    def wslab(name):
        off, r, c = WMAT_LAYOUT[name]
        return wmat_ref[off:off + r, 0:c]

    def vslab(name):
        off, r, c = VEC_LAYOUT[name]
        return vec_ref[off:off + r, 0:c]

    # ---- proj_dec on all Bt images at once: (Bt*N, Din) @ (Din, D) + b ----
    tok = jnp.concatenate([tokens_ref[b] for b in range(bt)], axis=0)
    pd = jnp.dot(tok.astype(bf16), wslab("proj_dec"),
                 preferred_element_type=f32) + vslab("proj_dec_b")

    # append class embeddings per image -> stacked (Bt*S, D)
    cls_emb = vslab("cls_emb")                                     # (C, D) f32
    pieces = []
    for b in range(bt):
        pieces += [pd[b * N:(b + 1) * N], cls_emb]
    x = jnp.concatenate(pieces, axis=0)

    # ---- transformer decoder blocks (timm Block, eval mode) ----
    for i in range(depth):
        qkvw, projw = wslab(f"qkv{i}"), wslab(f"proj{i}")
        f1w, f2w = wslab(f"fc1{i}"), wslab(f"fc2{i}")

        xn = _layernorm(x, vslab(f"b{i}_n1w"), vslab(f"b{i}_n1b"))
        qkv = jnp.dot(xn.astype(bf16), qkvw,
                      preferred_element_type=f32) + vslab(f"b{i}_qkvb")

        # attention is per image (static, 8-aligned row slices); per-head
        # contexts are lane-concatenated and fed through ONE output proj.
        ctx_parts = []
        for b in range(bt):
            qkv_b = qkv[b * S:(b + 1) * S]
            heads = []
            for h in range(num_heads):
                qh = qkv_b[:, h * dh:(h + 1) * dh]
                kh = qkv_b[:, d + h * dh:d + (h + 1) * dh]
                vh = qkv_b[:, 2 * d + h * dh:2 * d + (h + 1) * dh]
                s = jnp.dot(qh, kh.T, preferred_element_type=f32) * scale
                s = s - jnp.max(s, axis=-1, keepdims=True)
                p = jnp.exp(s)
                p = p * pl.reciprocal(jnp.sum(p, axis=-1, keepdims=True),
                                      approx=True)
                heads.append(jnp.dot(p, vh, preferred_element_type=f32))
            ctx_parts.append(jnp.concatenate(heads, axis=1))       # (S, D)
        ctx = jnp.concatenate(ctx_parts, axis=0)                   # (Bt*S, D)
        x = x + jnp.dot(ctx.astype(bf16), projw,
                        preferred_element_type=f32) + vslab(f"b{i}_projb")

        # ---- MLP ----
        xn = _layernorm(x, vslab(f"b{i}_n2w"), vslab(f"b{i}_n2b"))
        h1 = _gelu_tanh(jnp.dot(xn.astype(bf16), f1w,
                                preferred_element_type=f32)
                        + vslab(f"b{i}_f1b"))
        x = x + jnp.dot(h1.astype(bf16), f2w,
                        preferred_element_type=f32) + vslab(f"b{i}_f2b")

    # ---- decoder norm, batched patch/class projections, cosine-sim masks ----
    x = _layernorm(x, vslab("dec_nw"), vslab("dec_nb"))
    pat_rows = jnp.concatenate([x[b * S:b * S + N] for b in range(bt)], axis=0)
    cls_rows = jnp.concatenate([x[b * S + N:(b + 1) * S] for b in range(bt)],
                               axis=0)
    patches = _l2_normalize(jnp.dot(pat_rows.astype(bf16), wslab("patch_proj"),
                                    preferred_element_type=f32))   # (Bt*N, D)
    cls_feat = _l2_normalize(jnp.dot(cls_rows.astype(bf16),
                                     wslab("classes_proj"),
                                     preferred_element_type=f32))  # (Bt*C, D)
    mn = vslab("mask_norm")                                        # (C, 2)
    mnw, mnb = mn[:, 0:1], mn[:, 1:2]

    for b in range(bt):
        patches_b = patches[b * N:(b + 1) * N]                     # (N, D)
        cls_b = cls_feat[b * C:(b + 1) * C]                        # (C, D)
        # class-major masks (C, N); mask_norm = LayerNorm over classes (axis 0)
        masks = jnp.dot(cls_b, patches_b.T, preferred_element_type=f32)
        mu = jnp.mean(masks, axis=0, keepdims=True)
        var = jnp.mean((masks - mu) ** 2, axis=0, keepdims=True)
        masks = (masks - mu) * jax.lax.rsqrt(var + LN_EPS) * mnw + mnb

        # separable bilinear upsample, all on the MXU:
        #   rows (i*C + c, j) -> width matmul -> class-block-diag height matmul
        m_rows = jnp.concatenate(
            [masks[:, i * n_w:(i + 1) * n_w] for i in range(n_h)], axis=0)
        t_all = jnp.dot(m_rows, iwt_ref[...],
                        preferred_element_type=f32)                # (n_h*C, W)
        u = jnp.dot(bigih_ref[...], t_all,
                    preferred_element_type=f32)                    # (fold*C*H2, W)
        # fold the H axis onto lanes: (C*H2, fold*W) is a contiguous NCHW view
        tile = jnp.concatenate(
            [u[f * C * H2:(f + 1) * C * H2] for f in range(fold)], axis=1)
        out_ref[b] = tile


# ------------------------------ host-side glue --------------------------------
def _interp_matrix_np(out_size, in_size):
    # PyTorch F.interpolate(mode="bilinear", align_corners=False) along one
    # axis expressed as a dense (out_size, in_size) linear operator.
    scale = in_size / out_size
    src = (np.arange(out_size, dtype=np.float64) + 0.5) * scale - 0.5
    src = np.clip(src, 0.0, in_size - 1)
    lo = np.floor(src).astype(np.int64)
    hi = np.minimum(lo + 1, in_size - 1)
    w_hi = (src - lo).astype(np.float32)
    w_lo = 1.0 - w_hi
    m = np.zeros((out_size, in_size), np.float32)
    rows = np.arange(out_size)
    m[rows, lo] += w_lo
    m[rows, hi] += w_hi
    return m


@functools.lru_cache(maxsize=None)
def _interp_cols_t(out_size, in_size):
    return jnp.asarray(_interp_matrix_np(out_size, in_size).T)     # (in, out)


@functools.lru_cache(maxsize=None)
def _bigih(H, n_h, num_classes, fold):
    # Height operator, block-diagonal over classes and stacked over fold
    # offsets: BIGIH[f*C*H2 + c*H2 + h0, i*C + c] = IH[h0*fold + f, i]
    ih = _interp_matrix_np(H, n_h)                                  # (H, n_h)
    H2, C = H // fold, num_classes
    big = np.zeros((fold * C * H2, C * n_h), np.float32)
    for f in range(fold):
        sub = ih[f::fold]                                           # (H2, n_h)
        for c in range(C):
            big[f * C * H2 + c * H2:f * C * H2 + (c + 1) * H2, c::C] = sub
    return jnp.asarray(big)


def init_params(key):
    d, dhid, C = EMBED_DIM, EMBED_DIM * MLP_RATIO, NUM_CLASSES
    keys = iter(jax.random.split(key, 32))

    def tn(shape, std=0.02):
        return np.asarray(
            std * jax.random.truncated_normal(next(keys), -2.0, 2.0, shape),
            np.float32)

    # one packed bf16 weight slab
    wmat = np.zeros((WMAT_ROWS, VEC_W), np.float32)

    def put_w(name, arr):
        off, r, c = WMAT_LAYOUT[name]
        wmat[off:off + r, 0:c] = arr

    put_w("proj_dec", tn((DIM_TOKENS_ENC, d)))
    for i in range(DEPTH):
        put_w(f"qkv{i}", tn((d, 3 * d)))
        put_w(f"proj{i}", tn((d, d)))
        put_w(f"fc1{i}", tn((d, dhid)))
        put_w(f"fc2{i}", tn((dhid, d)))
    put_w("patch_proj", tn((d, d)))
    put_w("classes_proj", tn((d, d)))

    # one packed f32 vector slab (PyTorch init: linear bias 0, LN w=1 / b=0)
    vec = np.zeros((VEC_ROWS, VEC_W), np.float32)

    def put_v(name, arr):
        off, r, c = VEC_LAYOUT[name]
        vec[off:off + r, 0:c] = arr

    for i in range(DEPTH):
        put_v(f"b{i}_n1w", np.ones((1, d), np.float32))
        put_v(f"b{i}_n2w", np.ones((1, d), np.float32))
    put_v("dec_nw", np.ones((1, d), np.float32))
    mn = np.zeros((C, 2), np.float32)
    mn[:, 0] = 1.0                                                  # mask_norm w
    put_v("mask_norm", mn)
    put_v("cls_emb", tn((C, d)))

    return dict(vec=jnp.asarray(vec),
                wmat=jnp.asarray(wmat).astype(jnp.bfloat16))


def _full_spec(a):
    zeros = (0,) * a.ndim
    return pl.BlockSpec(a.shape, lambda g, _z=zeros: _z)


def segmenter_forward(encoder_tokens, input_info, params):
    H, W = input_info["image_size"]
    n_h, n_w = H // PATCH_SIZE, W // PATCH_SIZE
    C = NUM_CLASSES
    d, dhid = EMBED_DIM, EMBED_DIM * MLP_RATIO

    # adapt_tokens (glue): keep only tokens from the main tasks, concat on C.
    xs = []
    for task in MAIN_TASKS:
        t = input_info["tasks"][task]
        xs.append(encoder_tokens[:, t["start_idx"]:t["end_idx"]])
    tokens = jnp.concatenate(xs, axis=-1)
    B, N, Din = tokens.shape
    assert N == n_h * n_w

    # images per grid step (amortizes per-step overhead, raises matmul M)
    bt = min(B, 4)
    while B % bt:
        bt -= 1

    # fold the H axis so the stored tile is lane-dense (fold*W % 128 == 0)
    fold = 1
    if W % 128 != 0:
        for f in (2, 4, 8):
            if H % f == 0 and (f * W) % 128 == 0:
                fold = f
                break
    H2 = H // fold

    iw_t = _interp_cols_t(W, n_w)            # (n_w, W)
    bigih = _bigih(H, n_h, C, fold)          # (fold*C*H2, C*n_h)

    inputs = [tokens, params["vec"], params["wmat"], iw_t, bigih]
    in_specs = [pl.BlockSpec((bt, N, Din), lambda g: (g, 0, 0))]
    in_specs += [_full_spec(a) for a in inputs[1:]]

    # rough advisory cost estimate
    S = N + C
    per_img = (2 * N * Din * d
               + DEPTH * (2 * S * d * 3 * d + 4 * S * S * d
                          + 2 * S * d * d + 4 * S * d * dhid)
               + 2 * (N + C) * d * d + 2 * C * N * d
               + 2 * n_h * C * n_w * W + 2 * fold * C * H2 * C * n_h * W)
    transc = DEPTH * (NUM_HEADS * S * S + S * dhid)
    bytes_accessed = int(sum(int(np.prod(a.shape)) * a.dtype.itemsize
                             for a in inputs)) + B * C * H * W * 4
    cost = pl.CostEstimate(flops=int(B * per_img),
                           transcendentals=int(B * transc),
                           bytes_accessed=int(bytes_accessed))

    out = pl.pallas_call(
        functools.partial(segmenter_kernel, DEPTH, NUM_HEADS, C,
                          bt, n_h, n_w, fold),
        out_shape=jax.ShapeDtypeStruct((B, C * H2, fold * W), jnp.float32),
        grid=(B // bt,),
        in_specs=in_specs,
        out_specs=pl.BlockSpec((bt, C * H2, fold * W), lambda g: (g, 0, 0)),
        compiler_params=pltpu.CompilerParams(
            dimension_semantics=("parallel",)),
        cost_estimate=cost,
    )(*inputs)

    # (B, C*H2, fold*W) is the contiguous view of NCHW with H folded by `fold`
    return out.reshape(B, NUM_CLASSES, H, W)


if __name__ == "__main__":
    key = jax.random.PRNGKey(0)
    k_param, k_tok = jax.random.split(key)
    params = init_params(k_param)

    B = 2
    H = W = 64                                   # -> 4x4 = 16 patch tokens
    n_patches = (H // PATCH_SIZE) * (W // PATCH_SIZE)
    total_tokens = n_patches + 1                 # 1 extra non-rgb token
    encoder_tokens = jax.random.normal(
        k_tok, (B, total_tokens, DIM_TOKENS_ENC), jnp.float32)

    input_info = {
        "image_size": (H, W),
        "tasks": {"rgb": {"start_idx": 1, "end_idx": 1 + n_patches}},
    }

    masks = segmenter_forward(encoder_tokens, input_info, params)
    jax.block_until_ready(masks)
    assert masks.shape == (B, NUM_CLASSES, H, W)
    assert bool(jnp.all(jnp.isfinite(masks)))
    print("KERNEL_OK")
</pallas_src>

<mosaic_0001>
module attributes {stable_mosaic.version = 11 : i64} {
  func.func @segmenter_kernel(%arg0: i32, %arg1: memref<2x16x32xf32, #tpu.memory_space<vmem>>, %arg2: memref<35x128xf32, #tpu.memory_space<vmem>>, %arg3: memref<544x128xbf16, #tpu.memory_space<vmem>>, %arg4: memref<4x64xf32, #tpu.memory_space<vmem>>, %arg5: memref<512x32xf32, #tpu.memory_space<vmem>>, %arg6: memref<2x256x128xf32, #tpu.memory_space<vmem>>) attributes {dimension_semantics = [#tpu.dimension_semantics<parallel>], iteration_bounds = array<i64: 1>, scalar_prefetch = 0 : i64, scratch_operands = 0 : i64, tpu.core_type = #tpu.core_type<tc>, window_params = [{transform_indices = @transform_0, window_bounds = array<i64: 2, 16, 32>}, {pipeline_mode = #tpu.pipeline_mode<synchronous>, transform_indices = @transform_1, window_bounds = array<i64: 35, 128>}, {pipeline_mode = #tpu.pipeline_mode<synchronous>, transform_indices = @transform_2, window_bounds = array<i64: 544, 128>}, {pipeline_mode = #tpu.pipeline_mode<synchronous>, transform_indices = @transform_3, window_bounds = array<i64: 4, 64>}, {pipeline_mode = #tpu.pipeline_mode<synchronous>, transform_indices = @transform_4, window_bounds = array<i64: 512, 32>}, {transform_indices = @transform_5, window_bounds = array<i64: 2, 256, 128>}]} {
    %c0 = arith.constant 0 : index
    %c0_0 = arith.constant 0 : index
    %c0_1 = arith.constant 0 : index
    %0 = vector.load %arg1[%c0, %c0_0, %c0_1] : memref<2x16x32xf32, #tpu.memory_space<vmem>>, vector<1x16x32xf32>
    %1 = vector.shape_cast %0 : vector<1x16x32xf32> to vector<16x32xf32>
    %c1 = arith.constant 1 : index
    %c0_2 = arith.constant 0 : index
    %c0_3 = arith.constant 0 : index
    %2 = vector.load %arg1[%c1, %c0_2, %c0_3] : memref<2x16x32xf32, #tpu.memory_space<vmem>>, vector<1x16x32xf32>
    %3 = vector.shape_cast %2 : vector<1x16x32xf32> to vector<16x32xf32>
    %4 = tpu.concatenate %1, %3 in 0 : vector<16x32xf32>, vector<16x32xf32> -> vector<32x32xf32>
    %5 = arith.truncf %4 : vector<32x32xf32> to vector<32x32xbf16>
    %c0_4 = arith.constant 0 : index
    %c0_5 = arith.constant 0 : index
    %6 = vector.load %arg3[%c0_4, %c0_5] : memref<544x128xbf16, #tpu.memory_space<vmem>>, vector<32x32xbf16>
    %cst = arith.constant dense<0.000000e+00> : vector<32x32xf32>
    %7 = tpu.matmul %5, %6, %cst {dimension_numbers = #tpu.dot_dimension_numbers<[1], [0], [0], [1], [0, 0, 1, 1], [], []>} : vector<32x32xbf16>, vector<32x32xbf16>, vector<32x32xf32> -> vector<32x32xf32>
    %c0_6 = arith.constant 0 : index
    %c0_7 = arith.constant 0 : index
    %8 = vector.load %arg2[%c0_6, %c0_7] : memref<35x128xf32, #tpu.memory_space<vmem>>, vector<1x32xf32>
    %9 = vector.broadcast %8 : vector<1x32xf32> to vector<32x32xf32>
    %10 = arith.addf %7, %9 : vector<32x32xf32>
    %c27 = arith.constant 27 : index
    %c0_8 = arith.constant 0 : index
    %11 = vector.load %arg2[%c27, %c0_8] : memref<35x128xf32, #tpu.memory_space<vmem>>, vector<8x32xf32>
    %12 = vector.extract_strided_slice %10 {offsets = [0, 0], sizes = [16, 32], strides = [1, 1]} : vector<32x32xf32> to vector<16x32xf32>
    %13 = vector.extract_strided_slice %10 {offsets = [16, 0], sizes = [16, 32], strides = [1, 1]} : vector<32x32xf32> to vector<16x32xf32>
    %14 = tpu.concatenate %12, %11, %13, %11 in 0 : vector<16x32xf32>, vector<8x32xf32>, vector<16x32xf32>, vector<8x32xf32> -> vector<48x32xf32>
    %c32 = arith.constant 32 : index
    %c0_9 = arith.constant 0 : index
    %15 = vector.load %arg3[%c32, %c0_9] : memref<544x128xbf16, #tpu.memory_space<vmem>>, vector<32x96xbf16>
    %c64 = arith.constant 64 : index
    %c0_10 = arith.constant 0 : index
    %16 = vector.load %arg3[%c64, %c0_10] : memref<544x128xbf16, #tpu.memory_space<vmem>>, vector<32x32xbf16>
    %c96 = arith.constant 96 : index
    %c0_11 = arith.constant 0 : index
    %17 = vector.load %arg3[%c96, %c0_11] : memref<544x128xbf16, #tpu.memory_space<vmem>>, vector<32x128xbf16>
    %c128 = arith.constant 128 : index
    %c0_12 = arith.constant 0 : index
    %18 = vector.load %arg3[%c128, %c0_12] : memref<544x128xbf16, #tpu.memory_space<vmem>>, vector<128x32xbf16>
    %c1_13 = arith.constant 1 : index
    %c0_14 = arith.constant 0 : index
    %19 = vector.load %arg2[%c1_13, %c0_14] : memref<35x128xf32, #tpu.memory_space<vmem>>, vector<1x32xf32>
    %c2 = arith.constant 2 : index
    %c0_15 = arith.constant 0 : index
    %20 = vector.load %arg2[%c2, %c0_15] : memref<35x128xf32, #tpu.memory_space<vmem>>, vector<1x32xf32>
    %cst_16 = arith.constant dense<0.000000e+00> : vector<48xf32>
    %21 = vector.multi_reduction <add>, %14, %cst_16 [1] : vector<48x32xf32> to vector<48xf32>
    %22 = vector.shape_cast %21 : vector<48xf32> to vector<48x1xf32>
    %cst_17 = arith.constant 3.200000e+01 : f32
    %23 = vector.broadcast %cst_17 : f32 to vector<48x1xf32>
    %24 = arith.divf %22, %23 : vector<48x1xf32>
    %25 = vector.broadcast %24 : vector<48x1xf32> to vector<48x32xf32>
    %26 = arith.subf %14, %25 : vector<48x32xf32>
    %27 = arith.mulf %26, %26 : vector<48x32xf32>
    %cst_18 = arith.constant dense<0.000000e+00> : vector<48xf32>
    %28 = vector.multi_reduction <add>, %27, %cst_18 [1] : vector<48x32xf32> to vector<48xf32>
    %29 = vector.shape_cast %28 : vector<48xf32> to vector<48x1xf32>
    %cst_19 = arith.constant 3.200000e+01 : f32
    %30 = vector.broadcast %cst_19 : f32 to vector<48x1xf32>
    %31 = arith.divf %29, %30 : vector<48x1xf32>
    %cst_20 = arith.constant 9.99999997E-7 : f32
    %32 = vector.broadcast %cst_20 : f32 to vector<48x1xf32>
    %33 = arith.addf %31, %32 : vector<48x1xf32>
    %34 = math.rsqrt %33 : vector<48x1xf32>
    %35 = vector.broadcast %34 : vector<48x1xf32> to vector<48x32xf32>
    %36 = arith.mulf %26, %35 : vector<48x32xf32>
    %37 = vector.broadcast %19 : vector<1x32xf32> to vector<48x32xf32>
    %38 = arith.mulf %36, %37 : vector<48x32xf32>
    %39 = vector.broadcast %20 : vector<1x32xf32> to vector<48x32xf32>
    %40 = arith.addf %38, %39 : vector<48x32xf32>
    %41 = arith.truncf %40 : vector<48x32xf32> to vector<48x32xbf16>
    %cst_21 = arith.constant dense<0.000000e+00> : vector<48x96xf32>
    %42 = tpu.matmul %41, %15, %cst_21 {dimension_numbers = #tpu.dot_dimension_numbers<[1], [0], [0], [1], [0, 0, 1, 1], [], []>} : vector<48x32xbf16>, vector<32x96xbf16>, vector<48x96xf32> -> vector<48x96xf32>
    %c3 = arith.constant 3 : index
    %c0_22 = arith.constant 0 : index
    %43 = vector.load %arg2[%c3, %c0_22] : memref<35x128xf32, #tpu.memory_space<vmem>>, vector<1x96xf32>
    %44 = vector.broadcast %43 : vector<1x96xf32> to vector<48x96xf32>
    %45 = arith.addf %42, %44 : vector<48x96xf32>
    %46 = vector.extract_strided_slice %45 {offsets = [0, 0], sizes = [24, 96], strides = [1, 1]} : vector<48x96xf32> to vector<24x96xf32>
    %47 = vector.extract_strided_slice %46 {offsets = [0, 0], sizes = [24, 8], strides = [1, 1]} : vector<24x96xf32> to vector<24x8xf32>
    %48 = vector.extract_strided_slice %46 {offsets = [0, 32], sizes = [24, 8], strides = [1, 1]} : vector<24x96xf32> to vector<24x8xf32>
    %49 = vector.extract_strided_slice %46 {offsets = [0, 64], sizes = [24, 8], strides = [1, 1]} : vector<24x96xf32> to vector<24x8xf32>
    %50 = tpu.transpose %48, [1, 0] : vector<24x8xf32> -> vector<8x24xf32>
    %cst_23 = arith.constant dense<0.000000e+00> : vector<24x24xf32>
    %51 = tpu.matmul %47, %50, %cst_23 {dimension_numbers = #tpu.dot_dimension_numbers<[1], [0], [0], [1], [0, 0, 1, 1], [], []>} : vector<24x8xf32>, vector<8x24xf32>, vector<24x24xf32> -> vector<24x24xf32>
    %cst_24 = arith.constant 0.353553385 : f32
    %52 = vector.broadcast %cst_24 : f32 to vector<24x24xf32>
    %53 = arith.mulf %51, %52 : vector<24x24xf32>
    %cst_25 = arith.constant dense<0xFF800000> : vector<24xf32>
    %54 = vector.multi_reduction <maximumf>, %53, %cst_25 [1] : vector<24x24xf32> to vector<24xf32>
    %55 = vector.shape_cast %54 : vector<24xf32> to vector<24x1xf32>
    %56 = vector.broadcast %55 : vector<24x1xf32> to vector<24x24xf32>
    %57 = arith.subf %53, %56 : vector<24x24xf32>
    %58 = math.exp %57 : vector<24x24xf32>
    %cst_26 = arith.constant dense<0.000000e+00> : vector<24xf32>
    %59 = vector.multi_reduction <add>, %58, %cst_26 [1] : vector<24x24xf32> to vector<24xf32>
    %60 = vector.shape_cast %59 : vector<24xf32> to vector<24x1xf32>
    %61 = tpu.reciprocal %60 {approx = true} : vector<24x1xf32> -> vector<24x1xf32>
    %62 = vector.broadcast %61 : vector<24x1xf32> to vector<24x24xf32>
    %63 = arith.mulf %58, %62 : vector<24x24xf32>
    %cst_27 = arith.constant dense<0.000000e+00> : vector<24x8xf32>
    %64 = tpu.matmul %63, %49, %cst_27 {dimension_numbers = #tpu.dot_dimension_numbers<[1], [0], [0], [1], [0, 0, 1, 1], [], []>} : vector<24x24xf32>, vector<24x8xf32>, vector<24x8xf32> -> vector<24x8xf32>
    %65 = vector.extract_strided_slice %46 {offsets = [0, 8], sizes = [24, 8], strides = [1, 1]} : vector<24x96xf32> to vector<24x8xf32>
    %66 = vector.extract_strided_slice %46 {offsets = [0, 40], sizes = [24, 8], strides = [1, 1]} : vector<24x96xf32> to vector<24x8xf32>
    %67 = vector.extract_strided_slice %46 {offsets = [0, 72], sizes = [24, 8], strides = [1, 1]} : vector<24x96xf32> to vector<24x8xf32>
    %68 = tpu.transpose %66, [1, 0] : vector<24x8xf32> -> vector<8x24xf32>
    %cst_28 = arith.constant dense<0.000000e+00> : vector<24x24xf32>
    %69 = tpu.matmul %65, %68, %cst_28 {dimension_numbers = #tpu.dot_dimension_numbers<[1], [0], [0], [1], [0, 0, 1, 1], [], []>} : vector<24x8xf32>, vector<8x24xf32>, vector<24x24xf32> -> vector<24x24xf32>
    %cst_29 = arith.constant 0.353553385 : f32
    %70 = vector.broadcast %cst_29 : f32 to vector<24x24xf32>
    %71 = arith.mulf %69, %70 : vector<24x24xf32>
    %cst_30 = arith.constant dense<0xFF800000> : vector<24xf32>
    %72 = vector.multi_reduction <maximumf>, %71, %cst_30 [1] : vector<24x24xf32> to vector<24xf32>
    %73 = vector.shape_cast %72 : vector<24xf32> to vector<24x1xf32>
    %74 = vector.broadcast %73 : vector<24x1xf32> to vector<24x24xf32>
    %75 = arith.subf %71, %74 : vector<24x24xf32>
    %76 = math.exp %75 : vector<24x24xf32>
    %cst_31 = arith.constant dense<0.000000e+00> : vector<24xf32>
    %77 = vector.multi_reduction <add>, %76, %cst_31 [1] : vector<24x24xf32> to vector<24xf32>
    %78 = vector.shape_cast %77 : vector<24xf32> to vector<24x1xf32>
    %79 = tpu.reciprocal %78 {approx = true} : vector<24x1xf32> -> vector<24x1xf32>
    %80 = vector.broadcast %79 : vector<24x1xf32> to vector<24x24xf32>
    %81 = arith.mulf %76, %80 : vector<24x24xf32>
    %cst_32 = arith.constant dense<0.000000e+00> : vector<24x8xf32>
    %82 = tpu.matmul %81, %67, %cst_32 {dimension_numbers = #tpu.dot_dimension_numbers<[1], [0], [0], [1], [0, 0, 1, 1], [], []>} : vector<24x24xf32>, vector<24x8xf32>, vector<24x8xf32> -> vector<24x8xf32>
    %83 = vector.extract_strided_slice %46 {offsets = [0, 16], sizes = [24, 8], strides = [1, 1]} : vector<24x96xf32> to vector<24x8xf32>
    %84 = vector.extract_strided_slice %46 {offsets = [0, 48], sizes = [24, 8], strides = [1, 1]} : vector<24x96xf32> to vector<24x8xf32>
    %85 = vector.extract_strided_slice %46 {offsets = [0, 80], sizes = [24, 8], strides = [1, 1]} : vector<24x96xf32> to vector<24x8xf32>
    %86 = tpu.transpose %84, [1, 0] : vector<24x8xf32> -> vector<8x24xf32>
    %cst_33 = arith.constant dense<0.000000e+00> : vector<24x24xf32>
    %87 = tpu.matmul %83, %86, %cst_33 {dimension_numbers = #tpu.dot_dimension_numbers<[1], [0], [0], [1], [0, 0, 1, 1], [], []>} : vector<24x8xf32>, vector<8x24xf32>, vector<24x24xf32> -> vector<24x24xf32>
    %cst_34 = arith.constant 0.353553385 : f32
    %88 = vector.broadcast %cst_34 : f32 to vector<24x24xf32>
    %89 = arith.mulf %87, %88 : vector<24x24xf32>
    %cst_35 = arith.constant dense<0xFF800000> : vector<24xf32>
    %90 = vector.multi_reduction <maximumf>, %89, %cst_35 [1] : vector<24x24xf32> to vector<24xf32>
    %91 = vector.shape_cast %90 : vector<24xf32> to vector<24x1xf32>
    %92 = vector.broadcast %91 : vector<24x1xf32> to vector<24x24xf32>
    %93 = arith.subf %89, %92 : vector<24x24xf32>
    %94 = math.exp %93 : vector<24x24xf32>
    %cst_36 = arith.constant dense<0.000000e+00> : vector<24xf32>
    %95 = vector.multi_reduction <add>, %94, %cst_36 [1] : vector<24x24xf32> to vector<24xf32>
    %96 = vector.shape_cast %95 : vector<24xf32> to vector<24x1xf32>
    %97 = tpu.reciprocal %96 {approx = true} : vector<24x1xf32> -> vector<24x1xf32>
    %98 = vector.broadcast %97 : vector<24x1xf32> to vector<24x24xf32>
    %99 = arith.mulf %94, %98 : vector<24x24xf32>
    %cst_37 = arith.constant dense<0.000000e+00> : vector<24x8xf32>
    %100 = tpu.matmul %99, %85, %cst_37 {dimension_numbers = #tpu.dot_dimension_numbers<[1], [0], [0], [1], [0, 0, 1, 1], [], []>} : vector<24x24xf32>, vector<24x8xf32>, vector<24x8xf32> -> vector<24x8xf32>
    %101 = vector.extract_strided_slice %46 {offsets = [0, 24], sizes = [24, 8], strides = [1, 1]} : vector<24x96xf32> to vector<24x8xf32>
    %102 = vector.extract_strided_slice %46 {offsets = [0, 56], sizes = [24, 8], strides = [1, 1]} : vector<24x96xf32> to vector<24x8xf32>
    %103 = vector.extract_strided_slice %46 {offsets = [0, 88], sizes = [24, 8], strides = [1, 1]} : vector<24x96xf32> to vector<24x8xf32>
    %104 = tpu.transpose %102, [1, 0] : vector<24x8xf32> -> vector<8x24xf32>
    %cst_38 = arith.constant dense<0.000000e+00> : vector<24x24xf32>
    %105 = tpu.matmul %101, %104, %cst_38 {dimension_numbers = #tpu.dot_dimension_numbers<[1], [0], [0], [1], [0, 0, 1, 1], [], []>} : vector<24x8xf32>, vector<8x24xf32>, vector<24x24xf32> -> vector<24x24xf32>
    %cst_39 = arith.constant 0.353553385 : f32
    %106 = vector.broadcast %cst_39 : f32 to vector<24x24xf32>
    %107 = arith.mulf %105, %106 : vector<24x24xf32>
    %cst_40 = arith.constant dense<0xFF800000> : vector<24xf32>
    %108 = vector.multi_reduction <maximumf>, %107, %cst_40 [1] : vector<24x24xf32> to vector<24xf32>
    %109 = vector.shape_cast %108 : vector<24xf32> to vector<24x1xf32>
    %110 = vector.broadcast %109 : vector<24x1xf32> to vector<24x24xf32>
    %111 = arith.subf %107, %110 : vector<24x24xf32>
    %112 = math.exp %111 : vector<24x24xf32>
    %cst_41 = arith.constant dense<0.000000e+00> : vector<24xf32>
    %113 = vector.multi_reduction <add>, %112, %cst_41 [1] : vector<24x24xf32> to vector<24xf32>
    %114 = vector.shape_cast %113 : vector<24xf32> to vector<24x1xf32>
    %115 = tpu.reciprocal %114 {approx = true} : vector<24x1xf32> -> vector<24x1xf32>
    %116 = vector.broadcast %115 : vector<24x1xf32> to vector<24x24xf32>
    %117 = arith.mulf %112, %116 : vector<24x24xf32>
    %cst_42 = arith.constant dense<0.000000e+00> : vector<24x8xf32>
    %118 = tpu.matmul %117, %103, %cst_42 {dimension_numbers = #tpu.dot_dimension_numbers<[1], [0], [0], [1], [0, 0, 1, 1], [], []>} : vector<24x24xf32>, vector<24x8xf32>, vector<24x8xf32> -> vector<24x8xf32>
    %119 = tpu.concatenate %64, %82, %100, %118 in 1 : vector<24x8xf32>, vector<24x8xf32>, vector<24x8xf32>, vector<24x8xf32> -> vector<24x32xf32>
    %120 = vector.extract_strided_slice %45 {offsets = [24, 0], sizes = [24, 96], strides = [1, 1]} : vector<48x96xf32> to vector<24x96xf32>
    %121 = vector.extract_strided_slice %120 {offsets = [0, 0], sizes = [24, 8], strides = [1, 1]} : vector<24x96xf32> to vector<24x8xf32>
    %122 = vector.extract_strided_slice %120 {offsets = [0, 32], sizes = [24, 8], strides = [1, 1]} : vector<24x96xf32> to vector<24x8xf32>
    %123 = vector.extract_strided_slice %120 {offsets = [0, 64], sizes = [24, 8], strides = [1, 1]} : vector<24x96xf32> to vector<24x8xf32>
    %124 = tpu.transpose %122, [1, 0] : vector<24x8xf32> -> vector<8x24xf32>
    %cst_43 = arith.constant dense<0.000000e+00> : vector<24x24xf32>
    %125 = tpu.matmul %121, %124, %cst_43 {dimension_numbers = #tpu.dot_dimension_numbers<[1], [0], [0], [1], [0, 0, 1, 1], [], []>} : vector<24x8xf32>, vector<8x24xf32>, vector<24x24xf32> -> vector<24x24xf32>
    %cst_44 = arith.constant 0.353553385 : f32
    %126 = vector.broadcast %cst_44 : f32 to vector<24x24xf32>
    %127 = arith.mulf %125, %126 : vector<24x24xf32>
    %cst_45 = arith.constant dense<0xFF800000> : vector<24xf32>
    %128 = vector.multi_reduction <maximumf>, %127, %cst_45 [1] : vector<24x24xf32> to vector<24xf32>
    %129 = vector.shape_cast %128 : vector<24xf32> to vector<24x1xf32>
    %130 = vector.broadcast %129 : vector<24x1xf32> to vector<24x24xf32>
    %131 = arith.subf %127, %130 : vector<24x24xf32>
    %132 = math.exp %131 : vector<24x24xf32>
    %cst_46 = arith.constant dense<0.000000e+00> : vector<24xf32>
    %133 = vector.multi_reduction <add>, %132, %cst_46 [1] : vector<24x24xf32> to vector<24xf32>
    %134 = vector.shape_cast %133 : vector<24xf32> to vector<24x1xf32>
    %135 = tpu.reciprocal %134 {approx = true} : vector<24x1xf32> -> vector<24x1xf32>
    %136 = vector.broadcast %135 : vector<24x1xf32> to vector<24x24xf32>
    %137 = arith.mulf %132, %136 : vector<24x24xf32>
    %cst_47 = arith.constant dense<0.000000e+00> : vector<24x8xf32>
    %138 = tpu.matmul %137, %123, %cst_47 {dimension_numbers = #tpu.dot_dimension_numbers<[1], [0], [0], [1], [0, 0, 1, 1], [], []>} : vector<24x24xf32>, vector<24x8xf32>, vector<24x8xf32> -> vector<24x8xf32>
    %139 = vector.extract_strided_slice %120 {offsets = [0, 8], sizes = [24, 8], strides = [1, 1]} : vector<24x96xf32> to vector<24x8xf32>
    %140 = vector.extract_strided_slice %120 {offsets = [0, 40], sizes = [24, 8], strides = [1, 1]} : vector<24x96xf32> to vector<24x8xf32>
    %141 = vector.extract_strided_slice %120 {offsets = [0, 72], sizes = [24, 8], strides = [1, 1]} : vector<24x96xf32> to vector<24x8xf32>
    %142 = tpu.transpose %140, [1, 0] : vector<24x8xf32> -> vector<8x24xf32>
    %cst_48 = arith.constant dense<0.000000e+00> : vector<24x24xf32>
    %143 = tpu.matmul %139, %142, %cst_48 {dimension_numbers = #tpu.dot_dimension_numbers<[1], [0], [0], [1], [0, 0, 1, 1], [], []>} : vector<24x8xf32>, vector<8x24xf32>, vector<24x24xf32> -> vector<24x24xf32>
    %cst_49 = arith.constant 0.353553385 : f32
    %144 = vector.broadcast %cst_49 : f32 to vector<24x24xf32>
    %145 = arith.mulf %143, %144 : vector<24x24xf32>
    %cst_50 = arith.constant dense<0xFF800000> : vector<24xf32>
    %146 = vector.multi_reduction <maximumf>, %145, %cst_50 [1] : vector<24x24xf32> to vector<24xf32>
    %147 = vector.shape_cast %146 : vector<24xf32> to vector<24x1xf32>
    %148 = vector.broadcast %147 : vector<24x1xf32> to vector<24x24xf32>
    %149 = arith.subf %145, %148 : vector<24x24xf32>
    %150 = math.exp %149 : vector<24x24xf32>
    %cst_51 = arith.constant dense<0.000000e+00> : vector<24xf32>
    %151 = vector.multi_reduction <add>, %150, %cst_51 [1] : vector<24x24xf32> to vector<24xf32>
    %152 = vector.shape_cast %151 : vector<24xf32> to vector<24x1xf32>
    %153 = tpu.reciprocal %152 {approx = true} : vector<24x1xf32> -> vector<24x1xf32>
    %154 = vector.broadcast %153 : vector<24x1xf32> to vector<24x24xf32>
    %155 = arith.mulf %150, %154 : vector<24x24xf32>
    %cst_52 = arith.constant dense<0.000000e+00> : vector<24x8xf32>
    %156 = tpu.matmul %155, %141, %cst_52 {dimension_numbers = #tpu.dot_dimension_numbers<[1], [0], [0], [1], [0, 0, 1, 1], [], []>} : vector<24x24xf32>, vector<24x8xf32>, vector<24x8xf32> -> vector<24x8xf32>
    %157 = vector.extract_strided_slice %120 {offsets = [0, 16], sizes = [24, 8], strides = [1, 1]} : vector<24x96xf32> to vector<24x8xf32>
    %158 = vector.extract_strided_slice %120 {offsets = [0, 48], sizes = [24, 8], strides = [1, 1]} : vector<24x96xf32> to vector<24x8xf32>
    %159 = vector.extract_strided_slice %120 {offsets = [0, 80], sizes = [24, 8], strides = [1, 1]} : vector<24x96xf32> to vector<24x8xf32>
    %160 = tpu.transpose %158, [1, 0] : vector<24x8xf32> -> vector<8x24xf32>
    %cst_53 = arith.constant dense<0.000000e+00> : vector<24x24xf32>
    %161 = tpu.matmul %157, %160, %cst_53 {dimension_numbers = #tpu.dot_dimension_numbers<[1], [0], [0], [1], [0, 0, 1, 1], [], []>} : vector<24x8xf32>, vector<8x24xf32>, vector<24x24xf32> -> vector<24x24xf32>
    %cst_54 = arith.constant 0.353553385 : f32
    %162 = vector.broadcast %cst_54 : f32 to vector<24x24xf32>
    %163 = arith.mulf %161, %162 : vector<24x24xf32>
    %cst_55 = arith.constant dense<0xFF800000> : vector<24xf32>
    %164 = vector.multi_reduction <maximumf>, %163, %cst_55 [1] : vector<24x24xf32> to vector<24xf32>
    %165 = vector.shape_cast %164 : vector<24xf32> to vector<24x1xf32>
    %166 = vector.broadcast %165 : vector<24x1xf32> to vector<24x24xf32>
    %167 = arith.subf %163, %166 : vector<24x24xf32>
    %168 = math.exp %167 : vector<24x24xf32>
    %cst_56 = arith.constant dense<0.000000e+00> : vector<24xf32>
    %169 = vector.multi_reduction <add>, %168, %cst_56 [1] : vector<24x24xf32> to vector<24xf32>
    %170 = vector.shape_cast %169 : vector<24xf32> to vector<24x1xf32>
    %171 = tpu.reciprocal %170 {approx = true} : vector<24x1xf32> -> vector<24x1xf32>
    %172 = vector.broadcast %171 : vector<24x1xf32> to vector<24x24xf32>
    %173 = arith.mulf %168, %172 : vector<24x24xf32>
    %cst_57 = arith.constant dense<0.000000e+00> : vector<24x8xf32>
    %174 = tpu.matmul %173, %159, %cst_57 {dimension_numbers = #tpu.dot_dimension_numbers<[1], [0], [0], [1], [0, 0, 1, 1], [], []>} : vector<24x24xf32>, vector<24x8xf32>, vector<24x8xf32> -> vector<24x8xf32>
    %175 = vector.extract_strided_slice %120 {offsets = [0, 24], sizes = [24, 8], strides = [1, 1]} : vector<24x96xf32> to vector<24x8xf32>
    %176 = vector.extract_strided_slice %120 {offsets = [0, 56], sizes = [24, 8], strides = [1, 1]} : vector<24x96xf32> to vector<24x8xf32>
    %177 = vector.extract_strided_slice %120 {offsets = [0, 88], sizes = [24, 8], strides = [1, 1]} : vector<24x96xf32> to vector<24x8xf32>
    %178 = tpu.transpose %176, [1, 0] : vector<24x8xf32> -> vector<8x24xf32>
    %cst_58 = arith.constant dense<0.000000e+00> : vector<24x24xf32>
    %179 = tpu.matmul %175, %178, %cst_58 {dimension_numbers = #tpu.dot_dimension_numbers<[1], [0], [0], [1], [0, 0, 1, 1], [], []>} : vector<24x8xf32>, vector<8x24xf32>, vector<24x24xf32> -> vector<24x24xf32>
    %cst_59 = arith.constant 0.353553385 : f32
    %180 = vector.broadcast %cst_59 : f32 to vector<24x24xf32>
    %181 = arith.mulf %179, %180 : vector<24x24xf32>
    %cst_60 = arith.constant dense<0xFF800000> : vector<24xf32>
    %182 = vector.multi_reduction <maximumf>, %181, %cst_60 [1] : vector<24x24xf32> to vector<24xf32>
    %183 = vector.shape_cast %182 : vector<24xf32> to vector<24x1xf32>
    %184 = vector.broadcast %183 : vector<24x1xf32> to vector<24x24xf32>
    %185 = arith.subf %181, %184 : vector<24x24xf32>
    %186 = math.exp %185 : vector<24x24xf32>
    %cst_61 = arith.constant dense<0.000000e+00> : vector<24xf32>
    %187 = vector.multi_reduction <add>, %186, %cst_61 [1] : vector<24x24xf32> to vector<24xf32>
    %188 = vector.shape_cast %187 : vector<24xf32> to vector<24x1xf32>
    %189 = tpu.reciprocal %188 {approx = true} : vector<24x1xf32> -> vector<24x1xf32>
    %190 = vector.broadcast %189 : vector<24x1xf32> to vector<24x24xf32>
    %191 = arith.mulf %186, %190 : vector<24x24xf32>
    %cst_62 = arith.constant dense<0.000000e+00> : vector<24x8xf32>
    %192 = tpu.matmul %191, %177, %cst_62 {dimension_numbers = #tpu.dot_dimension_numbers<[1], [0], [0], [1], [0, 0, 1, 1], [], []>} : vector<24x24xf32>, vector<24x8xf32>, vector<24x8xf32> -> vector<24x8xf32>
    %193 = tpu.concatenate %138, %156, %174, %192 in 1 : vector<24x8xf32>, vector<24x8xf32>, vector<24x8xf32>, vector<24x8xf32> -> vector<24x32xf32>
    %194 = tpu.concatenate %119, %193 in 0 : vector<24x32xf32>, vector<24x32xf32> -> vector<48x32xf32>
    %195 = arith.truncf %194 : vector<48x32xf32> to vector<48x32xbf16>
    %cst_63 = arith.constant dense<0.000000e+00> : vector<48x32xf32>
    %196 = tpu.matmul %195, %16, %cst_63 {dimension_numbers = #tpu.dot_dimension_numbers<[1], [0], [0], [1], [0, 0, 1, 1], [], []>} : vector<48x32xbf16>, vector<32x32xbf16>, vector<48x32xf32> -> vector<48x32xf32>
    %197 = arith.addf %14, %196 : vector<48x32xf32>
    %c4 = arith.constant 4 : index
    %c0_64 = arith.constant 0 : index
    %198 = vector.load %arg2[%c4, %c0_64] : memref<35x128xf32, #tpu.memory_space<vmem>>, vector<1x32xf32>
    %199 = vector.broadcast %198 : vector<1x32xf32> to vector<48x32xf32>
    %200 = arith.addf %197, %199 : vector<48x32xf32>
    %c5 = arith.constant 5 : index
    %c0_65 = arith.constant 0 : index
    %201 = vector.load %arg2[%c5, %c0_65] : memref<35x128xf32, #tpu.memory_space<vmem>>, vector<1x32xf32>
    %c6 = arith.constant 6 : index
    %c0_66 = arith.constant 0 : index
    %202 = vector.load %arg2[%c6, %c0_66] : memref<35x128xf32, #tpu.memory_space<vmem>>, vector<1x32xf32>
    %cst_67 = arith.constant dense<0.000000e+00> : vector<48xf32>
    %203 = vector.multi_reduction <add>, %200, %cst_67 [1] : vector<48x32xf32> to vector<48xf32>
    %204 = vector.shape_cast %203 : vector<48xf32> to vector<48x1xf32>
    %cst_68 = arith.constant 3.200000e+01 : f32
    %205 = vector.broadcast %cst_68 : f32 to vector<48x1xf32>
    %206 = arith.divf %204, %205 : vector<48x1xf32>
    %207 = vector.broadcast %206 : vector<48x1xf32> to vector<48x32xf32>
    %208 = arith.subf %200, %207 : vector<48x32xf32>
    %209 = arith.mulf %208, %208 : vector<48x32xf32>
    %cst_69 = arith.constant dense<0.000000e+00> : vector<48xf32>
    %210 = vector.multi_reduction <add>, %209, %cst_69 [1] : vector<48x32xf32> to vector<48xf32>
    %211 = vector.shape_cast %210 : vector<48xf32> to vector<48x1xf32>
    %cst_70 = arith.constant 3.200000e+01 : f32
    %212 = vector.broadcast %cst_70 : f32 to vector<48x1xf32>
    %213 = arith.divf %211, %212 : vector<48x1xf32>
    %cst_71 = arith.constant 9.99999997E-7 : f32
    %214 = vector.broadcast %cst_71 : f32 to vector<48x1xf32>
    %215 = arith.addf %213, %214 : vector<48x1xf32>
    %216 = math.rsqrt %215 : vector<48x1xf32>
    %217 = vector.broadcast %216 : vector<48x1xf32> to vector<48x32xf32>
    %218 = arith.mulf %208, %217 : vector<48x32xf32>
    %219 = vector.broadcast %201 : vector<1x32xf32> to vector<48x32xf32>
    %220 = arith.mulf %218, %219 : vector<48x32xf32>
    %221 = vector.broadcast %202 : vector<1x32xf32> to vector<48x32xf32>
    %222 = arith.addf %220, %221 : vector<48x32xf32>
    %223 = arith.truncf %222 : vector<48x32xf32> to vector<48x32xbf16>
    %cst_72 = arith.constant dense<0.000000e+00> : vector<48x128xf32>
    %224 = tpu.matmul %223, %17, %cst_72 {dimension_numbers = #tpu.dot_dimension_numbers<[1], [0], [0], [1], [0, 0, 1, 1], [], []>} : vector<48x32xbf16>, vector<32x128xbf16>, vector<48x128xf32> -> vector<48x128xf32>
    %c7 = arith.constant 7 : index
    %c0_73 = arith.constant 0 : index
    %225 = vector.load %arg2[%c7, %c0_73] : memref<35x128xf32, #tpu.memory_space<vmem>>, vector<1x128xf32>
    %226 = vector.broadcast %225 : vector<1x128xf32> to vector<48x128xf32>
    %227 = arith.addf %224, %226 : vector<48x128xf32>
    %cst_74 = arith.constant 5.000000e-01 : f32
    %228 = vector.broadcast %cst_74 : f32 to vector<48x128xf32>
    %229 = arith.mulf %228, %227 : vector<48x128xf32>
    %cst_75 = arith.constant 4.471500e-02 : f32
    %230 = vector.broadcast %cst_75 : f32 to vector<48x128xf32>
    %231 = arith.mulf %230, %227 : vector<48x128xf32>
    %232 = arith.mulf %231, %227 : vector<48x128xf32>
    %233 = arith.mulf %232, %227 : vector<48x128xf32>
    %234 = arith.addf %227, %233 : vector<48x128xf32>
    %cst_76 = arith.constant 0.797884583 : f32
    %235 = vector.broadcast %cst_76 : f32 to vector<48x128xf32>
    %236 = arith.mulf %235, %234 : vector<48x128xf32>
    %237 = math.tanh %236 : vector<48x128xf32>
    %cst_77 = arith.constant 1.000000e+00 : f32
    %238 = vector.broadcast %cst_77 : f32 to vector<48x128xf32>
    %239 = arith.addf %238, %237 : vector<48x128xf32>
    %240 = arith.mulf %229, %239 : vector<48x128xf32>
    %241 = arith.truncf %240 : vector<48x128xf32> to vector<48x128xbf16>
    %cst_78 = arith.constant dense<0.000000e+00> : vector<48x32xf32>
    %242 = tpu.matmul %241, %18, %cst_78 {dimension_numbers = #tpu.dot_dimension_numbers<[1], [0], [0], [1], [0, 0, 1, 1], [], []>} : vector<48x128xbf16>, vector<128x32xbf16>, vector<48x32xf32> -> vector<48x32xf32>
    %243 = arith.addf %200, %242 : vector<48x32xf32>
    %c8 = arith.constant 8 : index
    %c0_79 = arith.constant 0 : index
    %244 = vector.load %arg2[%c8, %c0_79] : memref<35x128xf32, #tpu.memory_space<vmem>>, vector<1x32xf32>
    %245 = vector.broadcast %244 : vector<1x32xf32> to vector<48x32xf32>
    %246 = arith.addf %243, %245 : vector<48x32xf32>
    %c256 = arith.constant 256 : index
    %c0_80 = arith.constant 0 : index
    %247 = vector.load %arg3[%c256, %c0_80] : memref<544x128xbf16, #tpu.memory_space<vmem>>, vector<32x96xbf16>
    %c288 = arith.constant 288 : index
    %c0_81 = arith.constant 0 : index
    %248 = vector.load %arg3[%c288, %c0_81] : memref<544x128xbf16, #tpu.memory_space<vmem>>, vector<32x32xbf16>
    %c320 = arith.constant 320 : index
    %c0_82 = arith.constant 0 : index
    %249 = vector.load %arg3[%c320, %c0_82] : memref<544x128xbf16, #tpu.memory_space<vmem>>, vector<32x128xbf16>
    %c352 = arith.constant 352 : index
    %c0_83 = arith.constant 0 : index
    %250 = vector.load %arg3[%c352, %c0_83] : memref<544x128xbf16, #tpu.memory_space<vmem>>, vector<128x32xbf16>
    %c9 = arith.constant 9 : index
    %c0_84 = arith.constant 0 : index
    %251 = vector.load %arg2[%c9, %c0_84] : memref<35x128xf32, #tpu.memory_space<vmem>>, vector<1x32xf32>
    %c10 = arith.constant 10 : index
    %c0_85 = arith.constant 0 : index
    %252 = vector.load %arg2[%c10, %c0_85] : memref<35x128xf32, #tpu.memory_space<vmem>>, vector<1x32xf32>
    %cst_86 = arith.constant dense<0.000000e+00> : vector<48xf32>
    %253 = vector.multi_reduction <add>, %246, %cst_86 [1] : vector<48x32xf32> to vector<48xf32>
    %254 = vector.shape_cast %253 : vector<48xf32> to vector<48x1xf32>
    %cst_87 = arith.constant 3.200000e+01 : f32
    %255 = vector.broadcast %cst_87 : f32 to vector<48x1xf32>
    %256 = arith.divf %254, %255 : vector<48x1xf32>
    %257 = vector.broadcast %256 : vector<48x1xf32> to vector<48x32xf32>
    %258 = arith.subf %246, %257 : vector<48x32xf32>
    %259 = arith.mulf %258, %258 : vector<48x32xf32>
    %cst_88 = arith.constant dense<0.000000e+00> : vector<48xf32>
    %260 = vector.multi_reduction <add>, %259, %cst_88 [1] : vector<48x32xf32> to vector<48xf32>
    %261 = vector.shape_cast %260 : vector<48xf32> to vector<48x1xf32>
    %cst_89 = arith.constant 3.200000e+01 : f32
    %262 = vector.broadcast %cst_89 : f32 to vector<48x1xf32>
    %263 = arith.divf %261, %262 : vector<48x1xf32>
    %cst_90 = arith.constant 9.99999997E-7 : f32
    %264 = vector.broadcast %cst_90 : f32 to vector<48x1xf32>
    %265 = arith.addf %263, %264 : vector<48x1xf32>
    %266 = math.rsqrt %265 : vector<48x1xf32>
    %267 = vector.broadcast %266 : vector<48x1xf32> to vector<48x32xf32>
    %268 = arith.mulf %258, %267 : vector<48x32xf32>
    %269 = vector.broadcast %251 : vector<1x32xf32> to vector<48x32xf32>
    %270 = arith.mulf %268, %269 : vector<48x32xf32>
    %271 = vector.broadcast %252 : vector<1x32xf32> to vector<48x32xf32>
    %272 = arith.addf %270, %271 : vector<48x32xf32>
    %273 = arith.truncf %272 : vector<48x32xf32> to vector<48x32xbf16>
    %cst_91 = arith.constant dense<0.000000e+00> : vector<48x96xf32>
    %274 = tpu.matmul %273, %247, %cst_91 {dimension_numbers = #tpu.dot_dimension_numbers<[1], [0], [0], [1], [0, 0, 1, 1], [], []>} : vector<48x32xbf16>, vector<32x96xbf16>, vector<48x96xf32> -> vector<48x96xf32>
    %c11 = arith.constant 11 : index
    %c0_92 = arith.constant 0 : index
    %275 = vector.load %arg2[%c11, %c0_92] : memref<35x128xf32, #tpu.memory_space<vmem>>, vector<1x96xf32>
    %276 = vector.broadcast %275 : vector<1x96xf32> to vector<48x96xf32>
    %277 = arith.addf %274, %276 : vector<48x96xf32>
    %278 = vector.extract_strided_slice %277 {offsets = [0, 0], sizes = [24, 96], strides = [1, 1]} : vector<48x96xf32> to vector<24x96xf32>
    %279 = vector.extract_strided_slice %278 {offsets = [0, 0], sizes = [24, 8], strides = [1, 1]} : vector<24x96xf32> to vector<24x8xf32>
    %280 = vector.extract_strided_slice %278 {offsets = [0, 32], sizes = [24, 8], strides = [1, 1]} : vector<24x96xf32> to vector<24x8xf32>
    %281 = vector.extract_strided_slice %278 {offsets = [0, 64], sizes = [24, 8], strides = [1, 1]} : vector<24x96xf32> to vector<24x8xf32>
    %282 = tpu.transpose %280, [1, 0] : vector<24x8xf32> -> vector<8x24xf32>
    %cst_93 = arith.constant dense<0.000000e+00> : vector<24x24xf32>
    %283 = tpu.matmul %279, %282, %cst_93 {dimension_numbers = #tpu.dot_dimension_numbers<[1], [0], [0], [1], [0, 0, 1, 1], [], []>} : vector<24x8xf32>, vector<8x24xf32>, vector<24x24xf32> -> vector<24x24xf32>
    %cst_94 = arith.constant 0.353553385 : f32
    %284 = vector.broadcast %cst_94 : f32 to vector<24x24xf32>
    %285 = arith.mulf %283, %284 : vector<24x24xf32>
    %cst_95 = arith.constant dense<0xFF800000> : vector<24xf32>
    %286 = vector.multi_reduction <maximumf>, %285, %cst_95 [1] : vector<24x24xf32> to vector<24xf32>
    %287 = vector.shape_cast %286 : vector<24xf32> to vector<24x1xf32>
    %288 = vector.broadcast %287 : vector<24x1xf32> to vector<24x24xf32>
    %289 = arith.subf %285, %288 : vector<24x24xf32>
    %290 = math.exp %289 : vector<24x24xf32>
    %cst_96 = arith.constant dense<0.000000e+00> : vector<24xf32>
    %291 = vector.multi_reduction <add>, %290, %cst_96 [1] : vector<24x24xf32> to vector<24xf32>
    %292 = vector.shape_cast %291 : vector<24xf32> to vector<24x1xf32>
    %293 = tpu.reciprocal %292 {approx = true} : vector<24x1xf32> -> vector<24x1xf32>
    %294 = vector.broadcast %293 : vector<24x1xf32> to vector<24x24xf32>
    %295 = arith.mulf %290, %294 : vector<24x24xf32>
    %cst_97 = arith.constant dense<0.000000e+00> : vector<24x8xf32>
    %296 = tpu.matmul %295, %281, %cst_97 {dimension_numbers = #tpu.dot_dimension_numbers<[1], [0], [0], [1], [0, 0, 1, 1], [], []>} : vector<24x24xf32>, vector<24x8xf32>, vector<24x8xf32> -> vector<24x8xf32>
    %297 = vector.extract_strided_slice %278 {offsets = [0, 8], sizes = [24, 8], strides = [1, 1]} : vector<24x96xf32> to vector<24x8xf32>
    %298 = vector.extract_strided_slice %278 {offsets = [0, 40], sizes = [24, 8], strides = [1, 1]} : vector<24x96xf32> to vector<24x8xf32>
    %299 = vector.extract_strided_slice %278 {offsets = [0, 72], sizes = [24, 8], strides = [1, 1]} : vector<24x96xf32> to vector<24x8xf32>
    %300 = tpu.transpose %298, [1, 0] : vector<24x8xf32> -> vector<8x24xf32>
    %cst_98 = arith.constant dense<0.000000e+00> : vector<24x24xf32>
    %301 = tpu.matmul %297, %300, %cst_98 {dimension_numbers = #tpu.dot_dimension_numbers<[1], [0], [0], [1], [0, 0, 1, 1], [], []>} : vector<24x8xf32>, vector<8x24xf32>, vector<24x24xf32> -> vector<24x24xf32>
    %cst_99 = arith.constant 0.353553385 : f32
    %302 = vector.broadcast %cst_99 : f32 to vector<24x24xf32>
    %303 = arith.mulf %301, %302 : vector<24x24xf32>
    %cst_100 = arith.constant dense<0xFF800000> : vector<24xf32>
    %304 = vector.multi_reduction <maximumf>, %303, %cst_100 [1] : vector<24x24xf32> to vector<24xf32>
    %305 = vector.shape_cast %304 : vector<24xf32> to vector<24x1xf32>
    %306 = vector.broadcast %305 : vector<24x1xf32> to vector<24x24xf32>
    %307 = arith.subf %303, %306 : vector<24x24xf32>
    %308 = math.exp %307 : vector<24x24xf32>
    %cst_101 = arith.constant dense<0.000000e+00> : vector<24xf32>
    %309 = vector.multi_reduction <add>, %308, %cst_101 [1] : vector<24x24xf32> to vector<24xf32>
    %310 = vector.shape_cast %309 : vector<24xf32> to vector<24x1xf32>
    %311 = tpu.reciprocal %310 {approx = true} : vector<24x1xf32> -> vector<24x1xf32>
    %312 = vector.broadcast %311 : vector<24x1xf32> to vector<24x24xf32>
    %313 = arith.mulf %308, %312 : vector<24x24xf32>
    %cst_102 = arith.constant dense<0.000000e+00> : vector<24x8xf32>
    %314 = tpu.matmul %313, %299, %cst_102 {dimension_numbers = #tpu.dot_dimension_numbers<[1], [0], [0], [1], [0, 0, 1, 1], [], []>} : vector<24x24xf32>, vector<24x8xf32>, vector<24x8xf32> -> vector<24x8xf32>
    %315 = vector.extract_strided_slice %278 {offsets = [0, 16], sizes = [24, 8], strides = [1, 1]} : vector<24x96xf32> to vector<24x8xf32>
    %316 = vector.extract_strided_slice %278 {offsets = [0, 48], sizes = [24, 8], strides = [1, 1]} : vector<24x96xf32> to vector<24x8xf32>
    %317 = vector.extract_strided_slice %278 {offsets = [0, 80], sizes = [24, 8], strides = [1, 1]} : vector<24x96xf32> to vector<24x8xf32>
    %318 = tpu.transpose %316, [1, 0] : vector<24x8xf32> -> vector<8x24xf32>
    %cst_103 = arith.constant dense<0.000000e+00> : vector<24x24xf32>
    %319 = tpu.matmul %315, %318, %cst_103 {dimension_numbers = #tpu.dot_dimension_numbers<[1], [0], [0], [1], [0, 0, 1, 1], [], []>} : vector<24x8xf32>, vector<8x24xf32>, vector<24x24xf32> -> vector<24x24xf32>
    %cst_104 = arith.constant 0.353553385 : f32
    %320 = vector.broadcast %cst_104 : f32 to vector<24x24xf32>
    %321 = arith.mulf %319, %320 : vector<24x24xf32>
    %cst_105 = arith.constant dense<0xFF800000> : vector<24xf32>
    %322 = vector.multi_reduction <maximumf>, %321, %cst_105 [1] : vector<24x24xf32> to vector<24xf32>
    %323 = vector.shape_cast %322 : vector<24xf32> to vector<24x1xf32>
    %324 = vector.broadcast %323 : vector<24x1xf32> to vector<24x24xf32>
    %325 = arith.subf %321, %324 : vector<24x24xf32>
    %326 = math.exp %325 : vector<24x24xf32>
    %cst_106 = arith.constant dense<0.000000e+00> : vector<24xf32>
    %327 = vector.multi_reduction <add>, %326, %cst_106 [1] : vector<24x24xf32> to vector<24xf32>
    %328 = vector.shape_cast %327 : vector<24xf32> to vector<24x1xf32>
    %329 = tpu.reciprocal %328 {approx = true} : vector<24x1xf32> -> vector<24x1xf32>
    %330 = vector.broadcast %329 : vector<24x1xf32> to vector<24x24xf32>
    %331 = arith.mulf %326, %330 : vector<24x24xf32>
    %cst_107 = arith.constant dense<0.000000e+00> : vector<24x8xf32>
    %332 = tpu.matmul %331, %317, %cst_107 {dimension_numbers = #tpu.dot_dimension_numbers<[1], [0], [0], [1], [0, 0, 1, 1], [], []>} : vector<24x24xf32>, vector<24x8xf32>, vector<24x8xf32> -> vector<24x8xf32>
    %333 = vector.extract_strided_slice %278 {offsets = [0, 24], sizes = [24, 8], strides = [1, 1]} : vector<24x96xf32> to vector<24x8xf32>
    %334 = vector.extract_strided_slice %278 {offsets = [0, 56], sizes = [24, 8], strides = [1, 1]} : vector<24x96xf32> to vector<24x8xf32>
    %335 = vector.extract_strided_slice %278 {offsets = [0, 88], sizes = [24, 8], strides = [1, 1]} : vector<24x96xf32> to vector<24x8xf32>
    %336 = tpu.transpose %334, [1, 0] : vector<24x8xf32> -> vector<8x24xf32>
    %cst_108 = arith.constant dense<0.000000e+00> : vector<24x24xf32>
    %337 = tpu.matmul %333, %336, %cst_108 {dimension_numbers = #tpu.dot_dimension_numbers<[1], [0], [0], [1], [0, 0, 1, 1], [], []>} : vector<24x8xf32>, vector<8x24xf32>, vector<24x24xf32> -> vector<24x24xf32>
    %cst_109 = arith.constant 0.353553385 : f32
    %338 = vector.broadcast %cst_109 : f32 to vector<24x24xf32>
    %339 = arith.mulf %337, %338 : vector<24x24xf32>
    %cst_110 = arith.constant dense<0xFF800000> : vector<24xf32>
    %340 = vector.multi_reduction <maximumf>, %339, %cst_110 [1] : vector<24x24xf32> to vector<24xf32>
    %341 = vector.shape_cast %340 : vector<24xf32> to vector<24x1xf32>
    %342 = vector.broadcast %341 : vector<24x1xf32> to vector<24x24xf32>
    %343 = arith.subf %339, %342 : vector<24x24xf32>
    %344 = math.exp %343 : vector<24x24xf32>
    %cst_111 = arith.constant dense<0.000000e+00> : vector<24xf32>
    %345 = vector.multi_reduction <add>, %344, %cst_111 [1] : vector<24x24xf32> to vector<24xf32>
    %346 = vector.shape_cast %345 : vector<24xf32> to vector<24x1xf32>
    %347 = tpu.reciprocal %346 {approx = true} : vector<24x1xf32> -> vector<24x1xf32>
    %348 = vector.broadcast %347 : vector<24x1xf32> to vector<24x24xf32>
    %349 = arith.mulf %344, %348 : vector<24x24xf32>
    %cst_112 = arith.constant dense<0.000000e+00> : vector<24x8xf32>
    %350 = tpu.matmul %349, %335, %cst_112 {dimension_numbers = #tpu.dot_dimension_numbers<[1], [0], [0], [1], [0, 0, 1, 1], [], []>} : vector<24x24xf32>, vector<24x8xf32>, vector<24x8xf32> -> vector<24x8xf32>
    %351 = tpu.concatenate %296, %314, %332, %350 in 1 : vector<24x8xf32>, vector<24x8xf32>, vector<24x8xf32>, vector<24x8xf32> -> vector<24x32xf32>
    %352 = vector.extract_strided_slice %277 {offsets = [24, 0], sizes = [24, 96], strides = [1, 1]} : vector<48x96xf32> to vector<24x96xf32>
    %353 = vector.extract_strided_slice %352 {offsets = [0, 0], sizes = [24, 8], strides = [1, 1]} : vector<24x96xf32> to vector<24x8xf32>
    %354 = vector.extract_strided_slice %352 {offsets = [0, 32], sizes = [24, 8], strides = [1, 1]} : vector<24x96xf32> to vector<24x8xf32>
    %355 = vector.extract_strided_slice %352 {offsets = [0, 64], sizes = [24, 8], strides = [1, 1]} : vector<24x96xf32> to vector<24x8xf32>
    %356 = tpu.transpose %354, [1, 0] : vector<24x8xf32> -> vector<8x24xf32>
    %cst_113 = arith.constant dense<0.000000e+00> : vector<24x24xf32>
    %357 = tpu.matmul %353, %356, %cst_113 {dimension_numbers = #tpu.dot_dimension_numbers<[1], [0], [0], [1], [0, 0, 1, 1], [], []>} : vector<24x8xf32>, vector<8x24xf32>, vector<24x24xf32> -> vector<24x24xf32>
    %cst_114 = arith.constant 0.353553385 : f32
    %358 = vector.broadcast %cst_114 : f32 to vector<24x24xf32>
    %359 = arith.mulf %357, %358 : vector<24x24xf32>
    %cst_115 = arith.constant dense<0xFF800000> : vector<24xf32>
    %360 = vector.multi_reduction <maximumf>, %359, %cst_115 [1] : vector<24x24xf32> to vector<24xf32>
    %361 = vector.shape_cast %360 : vector<24xf32> to vector<24x1xf32>
    %362 = vector.broadcast %361 : vector<24x1xf32> to vector<24x24xf32>
    %363 = arith.subf %359, %362 : vector<24x24xf32>
    %364 = math.exp %363 : vector<24x24xf32>
    %cst_116 = arith.constant dense<0.000000e+00> : vector<24xf32>
    %365 = vector.multi_reduction <add>, %364, %cst_116 [1] : vector<24x24xf32> to vector<24xf32>
    %366 = vector.shape_cast %365 : vector<24xf32> to vector<24x1xf32>
    %367 = tpu.reciprocal %366 {approx = true} : vector<24x1xf32> -> vector<24x1xf32>
    %368 = vector.broadcast %367 : vector<24x1xf32> to vector<24x24xf32>
    %369 = arith.mulf %364, %368 : vector<24x24xf32>
    %cst_117 = arith.constant dense<0.000000e+00> : vector<24x8xf32>
    %370 = tpu.matmul %369, %355, %cst_117 {dimension_numbers = #tpu.dot_dimension_numbers<[1], [0], [0], [1], [0, 0, 1, 1], [], []>} : vector<24x24xf32>, vector<24x8xf32>, vector<24x8xf32> -> vector<24x8xf32>
    %371 = vector.extract_strided_slice %352 {offsets = [0, 8], sizes = [24, 8], strides = [1, 1]} : vector<24x96xf32> to vector<24x8xf32>
    %372 = vector.extract_strided_slice %352 {offsets = [0, 40], sizes = [24, 8], strides = [1, 1]} : vector<24x96xf32> to vector<24x8xf32>
    %373 = vector.extract_strided_slice %352 {offsets = [0, 72], sizes = [24, 8], strides = [1, 1]} : vector<24x96xf32> to vector<24x8xf32>
    %374 = tpu.transpose %372, [1, 0] : vector<24x8xf32> -> vector<8x24xf32>
    %cst_118 = arith.constant dense<0.000000e+00> : vector<24x24xf32>
    %375 = tpu.matmul %371, %374, %cst_118 {dimension_numbers = #tpu.dot_dimension_numbers<[1], [0], [0], [1], [0, 0, 1, 1], [], []>} : vector<24x8xf32>, vector<8x24xf32>, vector<24x24xf32> -> vector<24x24xf32>
    %cst_119 = arith.constant 0.353553385 : f32
    %376 = vector.broadcast %cst_119 : f32 to vector<24x24xf32>
    %377 = arith.mulf %375, %376 : vector<24x24xf32>
    %cst_120 = arith.constant dense<0xFF800000> : vector<24xf32>
    %378 = vector.multi_reduction <maximumf>, %377, %cst_120 [1] : vector<24x24xf32> to vector<24xf32>
    %379 = vector.shape_cast %378 : vector<24xf32> to vector<24x1xf32>
    %380 = vector.broadcast %379 : vector<24x1xf32> to vector<24x24xf32>
    %381 = arith.subf %377, %380 : vector<24x24xf32>
    %382 = math.exp %381 : vector<24x24xf32>
    %cst_121 = arith.constant dense<0.000000e+00> : vector<24xf32>
    %383 = vector.multi_reduction <add>, %382, %cst_121 [1] : vector<24x24xf32> to vector<24xf32>
    %384 = vector.shape_cast %383 : vector<24xf32> to vector<24x1xf32>
    %385 = tpu.reciprocal %384 {approx = true} : vector<24x1xf32> -> vector<24x1xf32>
    %386 = vector.broadcast %385 : vector<24x1xf32> to vector<24x24xf32>
    %387 = arith.mulf %382, %386 : vector<24x24xf32>
    %cst_122 = arith.constant dense<0.000000e+00> : vector<24x8xf32>
    %388 = tpu.matmul %387, %373, %cst_122 {dimension_numbers = #tpu.dot_dimension_numbers<[1], [0], [0], [1], [0, 0, 1, 1], [], []>} : vector<24x24xf32>, vector<24x8xf32>, vector<24x8xf32> -> vector<24x8xf32>
    %389 = vector.extract_strided_slice %352 {offsets = [0, 16], sizes = [24, 8], strides = [1, 1]} : vector<24x96xf32> to vector<24x8xf32>
    %390 = vector.extract_strided_slice %352 {offsets = [0, 48], sizes = [24, 8], strides = [1, 1]} : vector<24x96xf32> to vector<24x8xf32>
    %391 = vector.extract_strided_slice %352 {offsets = [0, 80], sizes = [24, 8], strides = [1, 1]} : vector<24x96xf32> to vector<24x8xf32>
    %392 = tpu.transpose %390, [1, 0] : vector<24x8xf32> -> vector<8x24xf32>
    %cst_123 = arith.constant dense<0.000000e+00> : vector<24x24xf32>
    %393 = tpu.matmul %389, %392, %cst_123 {dimension_numbers = #tpu.dot_dimension_numbers<[1], [0], [0], [1], [0, 0, 1, 1], [], []>} : vector<24x8xf32>, vector<8x24xf32>, vector<24x24xf32> -> vector<24x24xf32>
    %cst_124 = arith.constant 0.353553385 : f32
    %394 = vector.broadcast %cst_124 : f32 to vector<24x24xf32>
    %395 = arith.mulf %393, %394 : vector<24x24xf32>
    %cst_125 = arith.constant dense<0xFF800000> : vector<24xf32>
    %396 = vector.multi_reduction <maximumf>, %395, %cst_125 [1] : vector<24x24xf32> to vector<24xf32>
    %397 = vector.shape_cast %396 : vector<24xf32> to vector<24x1xf32>
    %398 = vector.broadcast %397 : vector<24x1xf32> to vector<24x24xf32>
    %399 = arith.subf %395, %398 : vector<24x24xf32>
    %400 = math.exp %399 : vector<24x24xf32>
    %cst_126 = arith.constant dense<0.000000e+00> : vector<24xf32>
    %401 = vector.multi_reduction <add>, %400, %cst_126 [1] : vector<24x24xf32> to vector<24xf32>
    %402 = vector.shape_cast %401 : vector<24xf32> to vector<24x1xf32>
    %403 = tpu.reciprocal %402 {approx = true} : vector<24x1xf32> -> vector<24x1xf32>
    %404 = vector.broadcast %403 : vector<24x1xf32> to vector<24x24xf32>
    %405 = arith.mulf %400, %404 : vector<24x24xf32>
    %cst_127 = arith.constant dense<0.000000e+00> : vector<24x8xf32>
    %406 = tpu.matmul %405, %391, %cst_127 {dimension_numbers = #tpu.dot_dimension_numbers<[1], [0], [0], [1], [0, 0, 1, 1], [], []>} : vector<24x24xf32>, vector<24x8xf32>, vector<24x8xf32> -> vector<24x8xf32>
    %407 = vector.extract_strided_slice %352 {offsets = [0, 24], sizes = [24, 8], strides = [1, 1]} : vector<24x96xf32> to vector<24x8xf32>
    %408 = vector.extract_strided_slice %352 {offsets = [0, 56], sizes = [24, 8], strides = [1, 1]} : vector<24x96xf32> to vector<24x8xf32>
    %409 = vector.extract_strided_slice %352 {offsets = [0, 88], sizes = [24, 8], strides = [1, 1]} : vector<24x96xf32> to vector<24x8xf32>
    %410 = tpu.transpose %408, [1, 0] : vector<24x8xf32> -> vector<8x24xf32>
    %cst_128 = arith.constant dense<0.000000e+00> : vector<24x24xf32>
    %411 = tpu.matmul %407, %410, %cst_128 {dimension_numbers = #tpu.dot_dimension_numbers<[1], [0], [0], [1], [0, 0, 1, 1], [], []>} : vector<24x8xf32>, vector<8x24xf32>, vector<24x24xf32> -> vector<24x24xf32>
    %cst_129 = arith.constant 0.353553385 : f32
    %412 = vector.broadcast %cst_129 : f32 to vector<24x24xf32>
    %413 = arith.mulf %411, %412 : vector<24x24xf32>
    %cst_130 = arith.constant dense<0xFF800000> : vector<24xf32>
    %414 = vector.multi_reduction <maximumf>, %413, %cst_130 [1] : vector<24x24xf32> to vector<24xf32>
    %415 = vector.shape_cast %414 : vector<24xf32> to vector<24x1xf32>
    %416 = vector.broadcast %415 : vector<24x1xf32> to vector<24x24xf32>
    %417 = arith.subf %413, %416 : vector<24x24xf32>
    %418 = math.exp %417 : vector<24x24xf32>
    %cst_131 = arith.constant dense<0.000000e+00> : vector<24xf32>
    %419 = vector.multi_reduction <add>, %418, %cst_131 [1] : vector<24x24xf32> to vector<24xf32>
    %420 = vector.shape_cast %419 : vector<24xf32> to vector<24x1xf32>
    %421 = tpu.reciprocal %420 {approx = true} : vector<24x1xf32> -> vector<24x1xf32>
    %422 = vector.broadcast %421 : vector<24x1xf32> to vector<24x24xf32>
    %423 = arith.mulf %418, %422 : vector<24x24xf32>
    %cst_132 = arith.constant dense<0.000000e+00> : vector<24x8xf32>
    %424 = tpu.matmul %423, %409, %cst_132 {dimension_numbers = #tpu.dot_dimension_numbers<[1], [0], [0], [1], [0, 0, 1, 1], [], []>} : vector<24x24xf32>, vector<24x8xf32>, vector<24x8xf32> -> vector<24x8xf32>
    %425 = tpu.concatenate %370, %388, %406, %424 in 1 : vector<24x8xf32>, vector<24x8xf32>, vector<24x8xf32>, vector<24x8xf32> -> vector<24x32xf32>
    %426 = tpu.concatenate %351, %425 in 0 : vector<24x32xf32>, vector<24x32xf32> -> vector<48x32xf32>
    %427 = arith.truncf %426 : vector<48x32xf32> to vector<48x32xbf16>
    %cst_133 = arith.constant dense<0.000000e+00> : vector<48x32xf32>
    %428 = tpu.matmul %427, %248, %cst_133 {dimension_numbers = #tpu.dot_dimension_numbers<[1], [0], [0], [1], [0, 0, 1, 1], [], []>} : vector<48x32xbf16>, vector<32x32xbf16>, vector<48x32xf32> -> vector<48x32xf32>
    %429 = arith.addf %246, %428 : vector<48x32xf32>
    %c12 = arith.constant 12 : index
    %c0_134 = arith.constant 0 : index
    %430 = vector.load %arg2[%c12, %c0_134] : memref<35x128xf32, #tpu.memory_space<vmem>>, vector<1x32xf32>
    %431 = vector.broadcast %430 : vector<1x32xf32> to vector<48x32xf32>
    %432 = arith.addf %429, %431 : vector<48x32xf32>
    %c13 = arith.constant 13 : index
    %c0_135 = arith.constant 0 : index
    %433 = vector.load %arg2[%c13, %c0_135] : memref<35x128xf32, #tpu.memory_space<vmem>>, vector<1x32xf32>
    %c14 = arith.constant 14 : index
    %c0_136 = arith.constant 0 : index
    %434 = vector.load %arg2[%c14, %c0_136] : memref<35x128xf32, #tpu.memory_space<vmem>>, vector<1x32xf32>
    %cst_137 = arith.constant dense<0.000000e+00> : vector<48xf32>
    %435 = vector.multi_reduction <add>, %432, %cst_137 [1] : vector<48x32xf32> to vector<48xf32>
    %436 = vector.shape_cast %435 : vector<48xf32> to vector<48x1xf32>
    %cst_138 = arith.constant 3.200000e+01 : f32
    %437 = vector.broadcast %cst_138 : f32 to vector<48x1xf32>
    %438 = arith.divf %436, %437 : vector<48x1xf32>
    %439 = vector.broadcast %438 : vector<48x1xf32> to vector<48x32xf32>
    %440 = arith.subf %432, %439 : vector<48x32xf32>
    %441 = arith.mulf %440, %440 : vector<48x32xf32>
    %cst_139 = arith.constant dense<0.000000e+00> : vector<48xf32>
    %442 = vector.multi_reduction <add>, %441, %cst_139 [1] : vector<48x32xf32> to vector<48xf32>
    %443 = vector.shape_cast %442 : vector<48xf32> to vector<48x1xf32>
    %cst_140 = arith.constant 3.200000e+01 : f32
    %444 = vector.broadcast %cst_140 : f32 to vector<48x1xf32>
    %445 = arith.divf %443, %444 : vector<48x1xf32>
    %cst_141 = arith.constant 9.99999997E-7 : f32
    %446 = vector.broadcast %cst_141 : f32 to vector<48x1xf32>
    %447 = arith.addf %445, %446 : vector<48x1xf32>
    %448 = math.rsqrt %447 : vector<48x1xf32>
    %449 = vector.broadcast %448 : vector<48x1xf32> to vector<48x32xf32>
    %450 = arith.mulf %440, %449 : vector<48x32xf32>
    %451 = vector.broadcast %433 : vector<1x32xf32> to vector<48x32xf32>
    %452 = arith.mulf %450, %451 : vector<48x32xf32>
    %453 = vector.broadcast %434 : vector<1x32xf32> to vector<48x32xf32>
    %454 = arith.addf %452, %453 : vector<48x32xf32>
    %455 = arith.truncf %454 : vector<48x32xf32> to vector<48x32xbf16>
    %cst_142 = arith.constant dense<0.000000e+00> : vector<48x128xf32>
    %456 = tpu.matmul %455, %249, %cst_142 {dimension_numbers = #tpu.dot_dimension_numbers<[1], [0], [0], [1], [0, 0, 1, 1], [], []>} : vector<48x32xbf16>, vector<32x128xbf16>, vector<48x128xf32> -> vector<48x128xf32>
    %c15 = arith.constant 15 : index
    %c0_143 = arith.constant 0 : index
    %457 = vector.load %arg2[%c15, %c0_143] : memref<35x128xf32, #tpu.memory_space<vmem>>, vector<1x128xf32>
    %458 = vector.broadcast %457 : vector<1x128xf32> to vector<48x128xf32>
    %459 = arith.addf %456, %458 : vector<48x128xf32>
    %cst_144 = arith.constant 5.000000e-01 : f32
    %460 = vector.broadcast %cst_144 : f32 to vector<48x128xf32>
    %461 = arith.mulf %460, %459 : vector<48x128xf32>
    %cst_145 = arith.constant 4.471500e-02 : f32
    %462 = vector.broadcast %cst_145 : f32 to vector<48x128xf32>
    %463 = arith.mulf %462, %459 : vector<48x128xf32>
    %464 = arith.mulf %463, %459 : vector<48x128xf32>
    %465 = arith.mulf %464, %459 : vector<48x128xf32>
    %466 = arith.addf %459, %465 : vector<48x128xf32>
    %cst_146 = arith.constant 0.797884583 : f32
    %467 = vector.broadcast %cst_146 : f32 to vector<48x128xf32>
    %468 = arith.mulf %467, %466 : vector<48x128xf32>
    %469 = math.tanh %468 : vector<48x128xf32>
    %cst_147 = arith.constant 1.000000e+00 : f32
    %470 = vector.broadcast %cst_147 : f32 to vector<48x128xf32>
    %471 = arith.addf %470, %469 : vector<48x128xf32>
    %472 = arith.mulf %461, %471 : vector<48x128xf32>
    %473 = arith.truncf %472 : vector<48x128xf32> to vector<48x128xbf16>
    %cst_148 = arith.constant dense<0.000000e+00> : vector<48x32xf32>
    %474 = tpu.matmul %473, %250, %cst_148 {dimension_numbers = #tpu.dot_dimension_numbers<[1], [0], [0], [1], [0, 0, 1, 1], [], []>} : vector<48x128xbf16>, vector<128x32xbf16>, vector<48x32xf32> -> vector<48x32xf32>
    %475 = arith.addf %432, %474 : vector<48x32xf32>
    %c16 = arith.constant 16 : index
    %c0_149 = arith.constant 0 : index
    %476 = vector.load %arg2[%c16, %c0_149] : memref<35x128xf32, #tpu.memory_space<vmem>>, vector<1x32xf32>
    %477 = vector.broadcast %476 : vector<1x32xf32> to vector<48x32xf32>
    %478 = arith.addf %475, %477 : vector<48x32xf32>
    %c17 = arith.constant 17 : index
    %c0_150 = arith.constant 0 : index
    %479 = vector.load %arg2[%c17, %c0_150] : memref<35x128xf32, #tpu.memory_space<vmem>>, vector<1x32xf32>
    %c18 = arith.constant 18 : index
    %c0_151 = arith.constant 0 : index
    %480 = vector.load %arg2[%c18, %c0_151] : memref<35x128xf32, #tpu.memory_space<vmem>>, vector<1x32xf32>
    %cst_152 = arith.constant dense<0.000000e+00> : vector<48xf32>
    %481 = vector.multi_reduction <add>, %478, %cst_152 [1] : vector<48x32xf32> to vector<48xf32>
    %482 = vector.shape_cast %481 : vector<48xf32> to vector<48x1xf32>
    %cst_153 = arith.constant 3.200000e+01 : f32
    %483 = vector.broadcast %cst_153 : f32 to vector<48x1xf32>
    %484 = arith.divf %482, %483 : vector<48x1xf32>
    %485 = vector.broadcast %484 : vector<48x1xf32> to vector<48x32xf32>
    %486 = arith.subf %478, %485 : vector<48x32xf32>
    %487 = arith.mulf %486, %486 : vector<48x32xf32>
    %cst_154 = arith.constant dense<0.000000e+00> : vector<48xf32>
    %488 = vector.multi_reduction <add>, %487, %cst_154 [1] : vector<48x32xf32> to vector<48xf32>
    %489 = vector.shape_cast %488 : vector<48xf32> to vector<48x1xf32>
    %cst_155 = arith.constant 3.200000e+01 : f32
    %490 = vector.broadcast %cst_155 : f32 to vector<48x1xf32>
    %491 = arith.divf %489, %490 : vector<48x1xf32>
    %cst_156 = arith.constant 9.99999997E-7 : f32
    %492 = vector.broadcast %cst_156 : f32 to vector<48x1xf32>
    %493 = arith.addf %491, %492 : vector<48x1xf32>
    %494 = math.rsqrt %493 : vector<48x1xf32>
    %495 = vector.broadcast %494 : vector<48x1xf32> to vector<48x32xf32>
    %496 = arith.mulf %486, %495 : vector<48x32xf32>
    %497 = vector.broadcast %479 : vector<1x32xf32> to vector<48x32xf32>
    %498 = arith.mulf %496, %497 : vector<48x32xf32>
    %499 = vector.broadcast %480 : vector<1x32xf32> to vector<48x32xf32>
    %500 = arith.addf %498, %499 : vector<48x32xf32>
    %501 = vector.extract_strided_slice %500 {offsets = [0, 0], sizes = [16, 32], strides = [1, 1]} : vector<48x32xf32> to vector<16x32xf32>
    %502 = vector.extract_strided_slice %500 {offsets = [24, 0], sizes = [16, 32], strides = [1, 1]} : vector<48x32xf32> to vector<16x32xf32>
    %503 = tpu.concatenate %501, %502 in 0 : vector<16x32xf32>, vector<16x32xf32> -> vector<32x32xf32>
    %504 = vector.extract_strided_slice %500 {offsets = [16, 0], sizes = [8, 32], strides = [1, 1]} : vector<48x32xf32> to vector<8x32xf32>
    %505 = vector.extract_strided_slice %500 {offsets = [40, 0], sizes = [8, 32], strides = [1, 1]} : vector<48x32xf32> to vector<8x32xf32>
    %506 = tpu.concatenate %504, %505 in 0 : vector<8x32xf32>, vector<8x32xf32> -> vector<16x32xf32>
    %507 = arith.truncf %503 : vector<32x32xf32> to vector<32x32xbf16>
    %c480 = arith.constant 480 : index
    %c0_157 = arith.constant 0 : index
    %508 = vector.load %arg3[%c480, %c0_157] : memref<544x128xbf16, #tpu.memory_space<vmem>>, vector<32x32xbf16>
    %cst_158 = arith.constant dense<0.000000e+00> : vector<32x32xf32>
    %509 = tpu.matmul %507, %508, %cst_158 {dimension_numbers = #tpu.dot_dimension_numbers<[1], [0], [0], [1], [0, 0, 1, 1], [], []>} : vector<32x32xbf16>, vector<32x32xbf16>, vector<32x32xf32> -> vector<32x32xf32>
    %510 = arith.mulf %509, %509 : vector<32x32xf32>
    %cst_159 = arith.constant dense<0.000000e+00> : vector<32xf32>
    %511 = vector.multi_reduction <add>, %510, %cst_159 [1] : vector<32x32xf32> to vector<32xf32>
    %512 = vector.shape_cast %511 : vector<32xf32> to vector<32x1xf32>
    %cst_160 = arith.constant 1.000000e-24 : f32
    %513 = vector.broadcast %cst_160 : f32 to vector<32x1xf32>
    %514 = arith.maximumf %512, %513 : vector<32x1xf32>
    %515 = math.rsqrt %514 : vector<32x1xf32>
    %516 = vector.broadcast %515 : vector<32x1xf32> to vector<32x32xf32>
    %517 = arith.mulf %509, %516 : vector<32x32xf32>
    %518 = arith.truncf %506 : vector<16x32xf32> to vector<16x32xbf16>
    %c512 = arith.constant 512 : index
    %c0_161 = arith.constant 0 : index
    %519 = vector.load %arg3[%c512, %c0_161] : memref<544x128xbf16, #tpu.memory_space<vmem>>, vector<32x32xbf16>
    %cst_162 = arith.constant dense<0.000000e+00> : vector<16x32xf32>
    %520 = tpu.matmul %518, %519, %cst_162 {dimension_numbers = #tpu.dot_dimension_numbers<[1], [0], [0], [1], [0, 0, 1, 1], [], []>} : vector<16x32xbf16>, vector<32x32xbf16>, vector<16x32xf32> -> vector<16x32xf32>
    %521 = arith.mulf %520, %520 : vector<16x32xf32>
    %cst_163 = arith.constant dense<0.000000e+00> : vector<16xf32>
    %522 = vector.multi_reduction <add>, %521, %cst_163 [1] : vector<16x32xf32> to vector<16xf32>
    %523 = vector.shape_cast %522 : vector<16xf32> to vector<16x1xf32>
    %cst_164 = arith.constant 1.000000e-24 : f32
    %524 = vector.broadcast %cst_164 : f32 to vector<16x1xf32>
    %525 = arith.maximumf %523, %524 : vector<16x1xf32>
    %526 = math.rsqrt %525 : vector<16x1xf32>
    %527 = vector.broadcast %526 : vector<16x1xf32> to vector<16x32xf32>
    %528 = arith.mulf %520, %527 : vector<16x32xf32>
    %c19 = arith.constant 19 : index
    %c0_165 = arith.constant 0 : index
    %529 = vector.load %arg2[%c19, %c0_165] : memref<35x128xf32, #tpu.memory_space<vmem>>, vector<8x2xf32>
    %530 = vector.extract_strided_slice %529 {offsets = [0, 0], sizes = [8, 1], strides = [1, 1]} : vector<8x2xf32> to vector<8x1xf32>
    %531 = vector.extract_strided_slice %529 {offsets = [0, 1], sizes = [8, 1], strides = [1, 1]} : vector<8x2xf32> to vector<8x1xf32>
    %532 = vector.extract_strided_slice %517 {offsets = [0, 0], sizes = [16, 32], strides = [1, 1]} : vector<32x32xf32> to vector<16x32xf32>
    %533 = vector.extract_strided_slice %528 {offsets = [0, 0], sizes = [8, 32], strides = [1, 1]} : vector<16x32xf32> to vector<8x32xf32>
    %534 = tpu.transpose %532, [1, 0] : vector<16x32xf32> -> vector<32x16xf32>
    %cst_166 = arith.constant dense<0.000000e+00> : vector<8x16xf32>
    %535 = tpu.matmul %533, %534, %cst_166 {dimension_numbers = #tpu.dot_dimension_numbers<[1], [0], [0], [1], [0, 0, 1, 1], [], []>} : vector<8x32xf32>, vector<32x16xf32>, vector<8x16xf32> -> vector<8x16xf32>
    %cst_167 = arith.constant dense<0.000000e+00> : vector<16xf32>
    %536 = vector.multi_reduction <add>, %535, %cst_167 [0] : vector<8x16xf32> to vector<16xf32>
    %537 = vector.shape_cast %536 : vector<16xf32> to vector<1x16xf32>
    %cst_168 = arith.constant 8.000000e+00 : f32
    %538 = vector.broadcast %cst_168 : f32 to vector<1x16xf32>
    %539 = arith.divf %537, %538 : vector<1x16xf32>
    %540 = vector.broadcast %539 : vector<1x16xf32> to vector<8x16xf32>
    %541 = arith.subf %535, %540 : vector<8x16xf32>
    %542 = arith.mulf %541, %541 : vector<8x16xf32>
    %cst_169 = arith.constant dense<0.000000e+00> : vector<16xf32>
    %543 = vector.multi_reduction <add>, %542, %cst_169 [0] : vector<8x16xf32> to vector<16xf32>
    %544 = vector.shape_cast %543 : vector<16xf32> to vector<1x16xf32>
    %cst_170 = arith.constant 8.000000e+00 : f32
    %545 = vector.broadcast %cst_170 : f32 to vector<1x16xf32>
    %546 = arith.divf %544, %545 : vector<1x16xf32>
    %547 = vector.broadcast %539 : vector<1x16xf32> to vector<8x16xf32>
    %548 = arith.subf %535, %547 : vector<8x16xf32>
    %cst_171 = arith.constant 9.99999997E-7 : f32
    %549 = vector.broadcast %cst_171 : f32 to vector<1x16xf32>
    %550 = arith.addf %546, %549 : vector<1x16xf32>
    %551 = math.rsqrt %550 : vector<1x16xf32>
    %552 = vector.broadcast %551 : vector<1x16xf32> to vector<8x16xf32>
    %553 = arith.mulf %548, %552 : vector<8x16xf32>
    %554 = vector.broadcast %530 : vector<8x1xf32> to vector<8x16xf32>
    %555 = arith.mulf %553, %554 : vector<8x16xf32>
    %556 = vector.broadcast %531 : vector<8x1xf32> to vector<8x16xf32>
    %557 = arith.addf %555, %556 : vector<8x16xf32>
    %558 = vector.extract_strided_slice %557 {offsets = [0, 0], sizes = [8, 4], strides = [1, 1]} : vector<8x16xf32> to vector<8x4xf32>
    %559 = vector.extract_strided_slice %557 {offsets = [0, 4], sizes = [8, 4], strides = [1, 1]} : vector<8x16xf32> to vector<8x4xf32>
    %560 = vector.extract_strided_slice %557 {offsets = [0, 8], sizes = [8, 4], strides = [1, 1]} : vector<8x16xf32> to vector<8x4xf32>
    %561 = vector.extract_strided_slice %557 {offsets = [0, 12], sizes = [8, 4], strides = [1, 1]} : vector<8x16xf32> to vector<8x4xf32>
    %562 = tpu.concatenate %558, %559, %560, %561 in 0 : vector<8x4xf32>, vector<8x4xf32>, vector<8x4xf32>, vector<8x4xf32> -> vector<32x4xf32>
    %c0_172 = arith.constant 0 : index
    %c0_173 = arith.constant 0 : index
    %563 = vector.load %arg4[%c0_172, %c0_173] : memref<4x64xf32, #tpu.memory_space<vmem>>, vector<4x64xf32>
    %cst_174 = arith.constant dense<0.000000e+00> : vector<32x64xf32>
    %564 = tpu.matmul %562, %563, %cst_174 {dimension_numbers = #tpu.dot_dimension_numbers<[1], [0], [0], [1], [0, 0, 1, 1], [], []>} : vector<32x4xf32>, vector<4x64xf32>, vector<32x64xf32> -> vector<32x64xf32>
    %c0_175 = arith.constant 0 : index
    %c0_176 = arith.constant 0 : index
    %565 = vector.load %arg5[%c0_175, %c0_176] : memref<512x32xf32, #tpu.memory_space<vmem>>, vector<512x32xf32>
    %cst_177 = arith.constant dense<0.000000e+00> : vector<512x64xf32>
    %566 = tpu.matmul %565, %564, %cst_177 {dimension_numbers = #tpu.dot_dimension_numbers<[1], [0], [0], [1], [0, 0, 1, 1], [], []>} : vector<512x32xf32>, vector<32x64xf32>, vector<512x64xf32> -> vector<512x64xf32>
    %567 = vector.extract_strided_slice %566 {offsets = [0, 0], sizes = [256, 64], strides = [1, 1]} : vector<512x64xf32> to vector<256x64xf32>
    %568 = vector.extract_strided_slice %566 {offsets = [256, 0], sizes = [256, 64], strides = [1, 1]} : vector<512x64xf32> to vector<256x64xf32>
    %569 = tpu.concatenate %567, %568 in 1 : vector<256x64xf32>, vector<256x64xf32> -> vector<256x128xf32>
    %c0_178 = arith.constant 0 : index
    %c0_179 = arith.constant 0 : index
    %c0_180 = arith.constant 0 : index
    %570 = vector.load %arg6[%c0_178, %c0_179, %c0_180] : memref<2x256x128xf32, #tpu.memory_space<vmem>>, vector<1x256x128xf32>
    %571 = vector.shape_cast %570 : vector<1x256x128xf32> to vector<256x128xf32>
    %572 = vector.shape_cast %569 : vector<256x128xf32> to vector<1x256x128xf32>
    tpu.vector_store %arg6[%c0_178, %c0_179, %c0_180], %572 {strides = array<i32>} : memref<2x256x128xf32, #tpu.memory_space<vmem>>, vector<1x256x128xf32>,
    %573 = vector.extract_strided_slice %517 {offsets = [16, 0], sizes = [16, 32], strides = [1, 1]} : vector<32x32xf32> to vector<16x32xf32>
    %574 = vector.extract_strided_slice %528 {offsets = [8, 0], sizes = [8, 32], strides = [1, 1]} : vector<16x32xf32> to vector<8x32xf32>
    %575 = tpu.transpose %573, [1, 0] : vector<16x32xf32> -> vector<32x16xf32>
    %cst_181 = arith.constant dense<0.000000e+00> : vector<8x16xf32>
    %576 = tpu.matmul %574, %575, %cst_181 {dimension_numbers = #tpu.dot_dimension_numbers<[1], [0], [0], [1], [0, 0, 1, 1], [], []>} : vector<8x32xf32>, vector<32x16xf32>, vector<8x16xf32> -> vector<8x16xf32>
    %cst_182 = arith.constant dense<0.000000e+00> : vector<16xf32>
    %577 = vector.multi_reduction <add>, %576, %cst_182 [0] : vector<8x16xf32> to vector<16xf32>
    %578 = vector.shape_cast %577 : vector<16xf32> to vector<1x16xf32>
    %cst_183 = arith.constant 8.000000e+00 : f32
    %579 = vector.broadcast %cst_183 : f32 to vector<1x16xf32>
    %580 = arith.divf %578, %579 : vector<1x16xf32>
    %581 = vector.broadcast %580 : vector<1x16xf32> to vector<8x16xf32>
    %582 = arith.subf %576, %581 : vector<8x16xf32>
    %583 = arith.mulf %582, %582 : vector<8x16xf32>
    %cst_184 = arith.constant dense<0.000000e+00> : vector<16xf32>
    %584 = vector.multi_reduction <add>, %583, %cst_184 [0] : vector<8x16xf32> to vector<16xf32>
    %585 = vector.shape_cast %584 : vector<16xf32> to vector<1x16xf32>
    %cst_185 = arith.constant 8.000000e+00 : f32
    %586 = vector.broadcast %cst_185 : f32 to vector<1x16xf32>
    %587 = arith.divf %585, %586 : vector<1x16xf32>
    %588 = vector.broadcast %580 : vector<1x16xf32> to vector<8x16xf32>
    %589 = arith.subf %576, %588 : vector<8x16xf32>
    %cst_186 = arith.constant 9.99999997E-7 : f32
    %590 = vector.broadcast %cst_186 : f32 to vector<1x16xf32>
    %591 = arith.addf %587, %590 : vector<1x16xf32>
    %592 = math.rsqrt %591 : vector<1x16xf32>
    %593 = vector.broadcast %592 : vector<1x16xf32> to vector<8x16xf32>
    %594 = arith.mulf %589, %593 : vector<8x16xf32>
    %595 = vector.broadcast %530 : vector<8x1xf32> to vector<8x16xf32>
    %596 = arith.mulf %594, %595 : vector<8x16xf32>
    %597 = vector.broadcast %531 : vector<8x1xf32> to vector<8x16xf32>
    %598 = arith.addf %596, %597 : vector<8x16xf32>
    %599 = vector.extract_strided_slice %598 {offsets = [0, 0], sizes = [8, 4], strides = [1, 1]} : vector<8x16xf32> to vector<8x4xf32>
    %600 = vector.extract_strided_slice %598 {offsets = [0, 4], sizes = [8, 4], strides = [1, 1]} : vector<8x16xf32> to vector<8x4xf32>
    %601 = vector.extract_strided_slice %598 {offsets = [0, 8], sizes = [8, 4], strides = [1, 1]} : vector<8x16xf32> to vector<8x4xf32>
    %602 = vector.extract_strided_slice %598 {offsets = [0, 12], sizes = [8, 4], strides = [1, 1]} : vector<8x16xf32> to vector<8x4xf32>
    %603 = tpu.concatenate %599, %600, %601, %602 in 0 : vector<8x4xf32>, vector<8x4xf32>, vector<8x4xf32>, vector<8x4xf32> -> vector<32x4xf32>
    %c0_187 = arith.constant 0 : index
    %c0_188 = arith.constant 0 : index
    %604 = vector.load %arg4[%c0_187, %c0_188] : memref<4x64xf32, #tpu.memory_space<vmem>>, vector<4x64xf32>
    %cst_189 = arith.constant dense<0.000000e+00> : vector<32x64xf32>
    %605 = tpu.matmul %603, %604, %cst_189 {dimension_numbers = #tpu.dot_dimension_numbers<[1], [0], [0], [1], [0, 0, 1, 1], [], []>} : vector<32x4xf32>, vector<4x64xf32>, vector<32x64xf32> -> vector<32x64xf32>
    %c0_190 = arith.constant 0 : index
    %c0_191 = arith.constant 0 : index
    %606 = vector.load %arg5[%c0_190, %c0_191] : memref<512x32xf32, #tpu.memory_space<vmem>>, vector<512x32xf32>
    %cst_192 = arith.constant dense<0.000000e+00> : vector<512x64xf32>
    %607 = tpu.matmul %606, %605, %cst_192 {dimension_numbers = #tpu.dot_dimension_numbers<[1], [0], [0], [1], [0, 0, 1, 1], [], []>} : vector<512x32xf32>, vector<32x64xf32>, vector<512x64xf32> -> vector<512x64xf32>
    %608 = vector.extract_strided_slice %607 {offsets = [0, 0], sizes = [256, 64], strides = [1, 1]} : vector<512x64xf32> to vector<256x64xf32>
    %609 = vector.extract_strided_slice %607 {offsets = [256, 0], sizes = [256, 64], strides = [1, 1]} : vector<512x64xf32> to vector<256x64xf32>
    %610 = tpu.concatenate %608, %609 in 1 : vector<256x64xf32>, vector<256x64xf32> -> vector<256x128xf32>
    %c1_193 = arith.constant 1 : index
    %c0_194 = arith.constant 0 : index
    %c0_195 = arith.constant 0 : index
    %611 = vector.load %arg6[%c1_193, %c0_194, %c0_195] : memref<2x256x128xf32, #tpu.memory_space<vmem>>, vector<1x256x128xf32>
    %612 = vector.shape_cast %611 : vector<1x256x128xf32> to vector<256x128xf32>
    %613 = vector.shape_cast %610 : vector<256x128xf32> to vector<1x256x128xf32>
    tpu.vector_store %arg6[%c1_193, %c0_194, %c0_195], %613 {strides = array<i32>} : memref<2x256x128xf32, #tpu.memory_space<vmem>>, vector<1x256x128xf32>,
    return
  }
  func.func @transform_0(%arg0: i32) -> (i32, i32, i32) {
    %c0_i32 = arith.constant 0 : i32
    %c0_i32_0 = arith.constant 0 : i32
    %c0_i32_1 = arith.constant 0 : i32
    return %arg0, %c0_i32, %c0_i32_0 : i32, i32, i32
  }
  func.func @transform_1(%arg0: i32) -> (i32, i32) {
    %c0_i32 = arith.constant 0 : i32
    %c0_i32_0 = arith.constant 0 : i32
    %c0_i32_1 = arith.constant 0 : i32
    return %c0_i32, %c0_i32_0 : i32, i32
  }
  func.func @transform_2(%arg0: i32) -> (i32, i32) {
    %c0_i32 = arith.constant 0 : i32
    %c0_i32_0 = arith.constant 0 : i32
    %c0_i32_1 = arith.constant 0 : i32
    return %c0_i32, %c0_i32_0 : i32, i32
  }
  func.func @transform_3(%arg0: i32) -> (i32, i32) {
    %c0_i32 = arith.constant 0 : i32
    %c0_i32_0 = arith.constant 0 : i32
    %c0_i32_1 = arith.constant 0 : i32
    return %c0_i32, %c0_i32_0 : i32, i32
  }
  func.func @transform_4(%arg0: i32) -> (i32, i32) {
    %c0_i32 = arith.constant 0 : i32
    %c0_i32_0 = arith.constant 0 : i32
    %c0_i32_1 = arith.constant 0 : i32
    return %c0_i32, %c0_i32_0 : i32, i32
  }
  func.func @transform_5(%arg0: i32) -> (i32, i32, i32) {
    %c0_i32 = arith.constant 0 : i32
    %c0_i32_0 = arith.constant 0 : i32
    %c0_i32_1 = arith.constant 0 : i32
    return %arg0, %c0_i32, %c0_i32_0 : i32, i32, i32
  }
}

</mosaic_0001>

<llo_original>
// kernel: tpu_custom_call.1
$region0: #{tpu_custom_call.1}
  #allocation0 [shape = 'u32[]', space=smem, size = 0x4, offset = 0x4, fixed_abs, tag = 'smem constant byte address 0x4 - core index']
  #allocation1 [shape = 'u32[72,128]{1,0:T(1,128)}', space=vmem, size = 0x9000, scoped, tag = 'internal scratch']
  %s0 = inlined_call_operand.vmem [shape: f32[2,16,32], index: 0, kind: input, shape index: {}]
  %s1 = inlined_call_operand.vmem [shape: f32[35,128], index: 1, kind: input, shape index: {}]
  %s2 = inlined_call_operand.vmem [shape: bf16[544,128], index: 2, kind: input, shape index: {}]
  %s3 = inlined_call_operand.vmem [shape: f32[4,64], index: 3, kind: input, shape index: {}]
  %s4 = inlined_call_operand.vmem [shape: f32[512,32], index: 4, kind: input, shape index: {}]
  %s5 = inlined_call_operand.hbm [shape: f32[2,256,128], index: 5, kind: output, shape index: {}]
  %s6 = sld [smem:[#allocation0]]
  $region30: #{tpu_custom_call.1} parent=0
    _
  %s8 = ssub.s32 1, %s6
  %s9 = scalar_select 0, %s8, %s6
  $region1: #{tpu_custom_call.1} parent=0
    #allocation2 [shape = 'u8[262144]{0}', space=vmem, size = 0x40000, scoped, tag = 'output window, operand 0, single buffered']
    #allocation3 [shape = 's32[1]{0}', space=sflag, size = 0x4, scoped, tag = 'scoped memory for tpu_custom_call.1']
    %10 = vsyncpa [#allocation3], 0
    // Predicated region
    $region2: #{tpu_custom_call.1} parent=1 // pred_check
      _
    $region3: #{tpu_custom_call.1} parent=1 // pred_check_branch
      %12 = sbr.rel (0) target = $region5
    $region4: #{tpu_custom_call.1} parent=1 // pred_region
      _
    $region5: #{tpu_custom_call.1} parent=1 // pred_fallthru
      _
    // Predicated region
    $region6: #{tpu_custom_call.1} parent=1 // pred_check
      _
    $region7: #{tpu_custom_call.1} parent=1 // pred_check_branch
      %14 = sbr.rel (0) target = $region9
    $region8: #{tpu_custom_call.1} parent=1 // pred_region
      _
    $region9: #{tpu_custom_call.1} parent=1 // pred_fallthru
      _
    // Predicated region
    $region10: #{tpu_custom_call.1} parent=1 // pred_check
      _
    $region11: #{tpu_custom_call.1} parent=1 // pred_check_branch
      %16 = sbr.rel (0) target = $region13
    $region12: #{tpu_custom_call.1} parent=1 // pred_region
      _
    $region13: #{tpu_custom_call.1} parent=1 // pred_fallthru
      _
    // Predicated region
    $region14: #{tpu_custom_call.1} parent=1 // pred_check
      _
    $region15: #{tpu_custom_call.1} parent=1 // pred_check_branch
      %18 = sbr.rel (0) target = $region17
    $region16: #{tpu_custom_call.1} parent=1 // pred_region
      _
    $region17: #{tpu_custom_call.1} parent=1 // pred_fallthru
      _
    // Predicated region
    $region18: #{tpu_custom_call.1} parent=1 // pred_check
      _
    $region19: #{tpu_custom_call.1} parent=1 // pred_check_branch
      %20 = sbr.rel (0) target = $region21
    $region20: #{tpu_custom_call.1} parent=1 // pred_region
      _
    $region21: #{tpu_custom_call.1} parent=1 // pred_fallthru
      _
    %v22 = vld [vmem:[%s0] sm:$0xff]
    %v23 = vld [vmem:[%s0 + $0x8] sm:$0xff]
    %s24 = scalar_lea.vmem %s0, 16
    %v25 = vld [vmem:[%s24] sm:$0xff]
    %v26 = vld [vmem:[%s24 + $0x8] sm:$0xff]
    %v27 = vpack.c.bf16 %v23, %v22
    %v28 = vpack.c.bf16 %v26, %v25
    %v29 = vld [vmem:[%s2] sm:$0xf]
    %v30 = vld [vmem:[%s2 + $0x4] sm:$0xf]
    %v31 = vld [vmem:[%s2 + $0x8] sm:$0xf]
    %v32 = vld [vmem:[%s2 + $0xc] sm:$0xf]
    %v33 = vld [vmem:[%s1] sm:$0x1]
    %v34 = vperm.slane %v33, 0
    %v39 = vunpack.c.l.b16 %v29
    %v40 = vunpack.c.l.b16 %v30
    %v41 = vunpack.c.l.b16 %v31
    %v42 = vunpack.c.l.b16 %v32
    %v43 = vpack.c.b16 %v40, %v39
    %v44 = vpack.c.b16 %v42, %v41
    %vm47 = vcmask 261120
    %v49 = vsel %vm47, %v27, 0
    %v52 = vsel %vm47, %v28, 0
    %54 = vmatpush.bf16.msra.mxu0 0
    %55 = vmatpush.bf16.msra.mxu0 0
    %56 = vmatpush.bf16.msra.mxu0 0
    %57 = vmatpush.bf16.msra.mxu0 0
    %58 = vmatpush.bf16.msra.mxu0 0
    %59 = vmatpush.bf16.msra.mxu0 0
    %60 = vmatpush.bf16.msra.mxu0 %v44
    %61 = vmatpush.bf16.msra.mxu0 %v43
    %62 = vmatmul.bf16.gmra.mxu0 %v49
    %v63 = vpop.f32.mrf.mxu0
    %v64 = vadd.f32 %v34, %v63
    %v65 = vpop.f32.mrf.mxu0
    %v66 = vadd.f32 %v34, %v65
    %67 = vmatmul.bf16.gmra.mxu0 %v52
    %v68 = vpop.f32.mrf.mxu0
    %v69 = vadd.f32 %v34, %v68
    %v70 = vpop.f32.mrf.mxu0
    %v71 = vadd.f32 %v34, %v70
    %72 = vdwg.mxu0
    %v73 = vld [vmem:[%s1 + $0x1b] sm:$0xff]
    %v74 = vld [vmem:[%s2 + $0x10] sm:$0xf]
    %v75 = vld [vmem:[%s2 + $0x14] sm:$0xf]
    %v76 = vld [vmem:[%s2 + $0x18] sm:$0xf]
    %v77 = vld [vmem:[%s2 + $0x1c] sm:$0xf]
    %v78 = vld [vmem:[%s2 + $0x20] sm:$0xf]
    %v79 = vld [vmem:[%s2 + $0x24] sm:$0xf]
    %v80 = vld [vmem:[%s2 + $0x28] sm:$0xf]
    %v81 = vld [vmem:[%s2 + $0x2c] sm:$0xf]
    %v82 = vld [vmem:[%s2 + $0x30] sm:$0xf]
    %v83 = vld [vmem:[%s2 + $0x34] sm:$0xf]
    %v84 = vld [vmem:[%s2 + $0x38] sm:$0xf]
    %v85 = vld [vmem:[%s2 + $0x3c] sm:$0xf]
    %v86 = vld [vmem:[%s2 + $0x40] sm:$0xf]
    %v87 = vld [vmem:[%s2 + $0x44] sm:$0xf]
    %v88 = vld [vmem:[%s2 + $0x48] sm:$0xf]
    %v89 = vld [vmem:[%s2 + $0x4c] sm:$0xf]
    %v90 = vld [vmem:[%s2 + $0x50] sm:$0xf]
    %v91 = vld [vmem:[%s2 + $0x54] sm:$0xf]
    %v92 = vld [vmem:[%s2 + $0x58] sm:$0xf]
    %v93 = vld [vmem:[%s2 + $0x5c] sm:$0xf]
    %v94 = vld [vmem:[%s2 + $0x60] sm:$0xf]
    %v95 = vld [vmem:[%s2 + $0x64] sm:$0xf]
    %v96 = vld [vmem:[%s2 + $0x68] sm:$0xf]
    %v97 = vld [vmem:[%s2 + $0x6c] sm:$0xf]
    %v98 = vld [vmem:[%s2 + $0x70] sm:$0xf]
    %v99 = vld [vmem:[%s2 + $0x74] sm:$0xf]
    %v100 = vld [vmem:[%s2 + $0x78] sm:$0xf]
    %v101 = vld [vmem:[%s2 + $0x7c] sm:$0xf]
    %v102 = vld [vmem:[%s1 + $0x1] sm:$0x1]
    %v103 = vld [vmem:[%s1 + $0x2] sm:$0x1]
    %v104 = vsel %vm47, %v64, 0.0
    %105 = vadd.xlane.f32.xlu0 %v104
    %v106 = vpop.xlane.xlu0 %105
    %v107 = vsel %vm47, %v66, 0.0
    %108 = vadd.xlane.f32.xlu0 %v107
    %v109 = vpop.xlane.xlu0 %108
    %v110 = vsel %vm47, %v73, 0.0
    %111 = vadd.xlane.f32.xlu0 %v110
    %v112 = vpop.xlane.xlu0 %111
    %v113 = vsel %vm47, %v69, 0.0
    %114 = vadd.xlane.f32.xlu0 %v113
    %v115 = vpop.xlane.xlu0 %114
    %v116 = vsel %vm47, %v71, 0.0
    %117 = vadd.xlane.f32.xlu0 %v116
    %v118 = vpop.xlane.xlu0 %117
    %v119 = vrcp.pop 32.0
    %v120 = vmul.f32 32.0, %v119
    %v121 = vsub.f32 1.0, %v120
    %v122 = vmul.f32 %v119, %v121
    %v123 = vadd.f32 %v119, %v122
    %vm124 = vweird.f32 %v119
    %v125 = vsel %vm124, %v119, %v123
    %v126 = vmul.f32 %v106, %v125
    %v127 = vmul.f32 %v109, %v125
    %v128 = vmul.f32 %v112, %v125
    %v129 = vmul.f32 %v115, %v125
    %v130 = vmul.f32 %v118, %v125
    %v131 = vsub.f32 %v64, %v126
    %v132 = vsub.f32 %v66, %v127
    %v133 = vsub.f32 %v73, %v128
    %v134 = vsub.f32 %v69, %v129
    %v135 = vsub.f32 %v71, %v130
    %v136 = vmul.f32 %v131, %v131
    %v137 = vmul.f32 %v132, %v132
    %v138 = vmul.f32 %v133, %v133
    %v139 = vmul.f32 %v134, %v134
    %v140 = vmul.f32 %v135, %v135
    %v141 = vsel %vm47, %v136, 0.0
    %142 = vadd.xlane.f32.xlu0 %v141
    %v143 = vpop.xlane.xlu0 %142
    %v144 = vsel %vm47, %v137, 0.0
    %145 = vadd.xlane.f32.xlu0 %v144
    %v146 = vpop.xlane.xlu0 %145
    %v147 = vsel %vm47, %v138, 0.0
    %148 = vadd.xlane.f32.xlu0 %v147
    %v149 = vpop.xlane.xlu0 %148
    %v150 = vsel %vm47, %v139, 0.0
    %151 = vadd.xlane.f32.xlu0 %v150
    %v152 = vpop.xlane.xlu0 %151
    %v153 = vsel %vm47, %v140, 0.0
    %154 = vadd.xlane.f32.xlu0 %v153
    %v155 = vpop.xlane.xlu0 %154
    %v156 = vmul.f32 %v143, %v125
    %v157 = vmul.f32 %v146, %v125
    %v158 = vmul.f32 %v149, %v125
    %v159 = vmul.f32 %v152, %v125
    %v160 = vmul.f32 %v155, %v125
    %v161 = vadd.f32 %v156, 1e-06
    %v162 = vadd.f32 %v157, 1e-06
    %v163 = vadd.f32 %v158, 1e-06
    %v164 = vadd.f32 %v159, 1e-06
    %v165 = vadd.f32 %v160, 1e-06
    %v166 = vrsqrt.pop %v161
    %v167 = vmul.f32 %v166, %v161
    %v168 = vmul.f32 %v167, %v166
    %v169 = vmul.f32 0.5, %v168
    %v170 = vsub.f32 1.5, %v169
    %v171 = vmul.f32 %v166, %v170
    %vm172 = vweird.f32 %v161
    %vm173 = vweird.f32 %v166
    %vm174 = vmor %vm172, %vm173
    %v175 = vsel %vm174, %v166, %v171
    %v176 = vrsqrt.pop %v162
    %v177 = vmul.f32 %v176, %v162
    %v178 = vmul.f32 %v177, %v176
    %v179 = vmul.f32 0.5, %v178
    %v180 = vsub.f32 1.5, %v179
    %v181 = vmul.f32 %v176, %v180
    %vm182 = vweird.f32 %v162
    %vm183 = vweird.f32 %v176
    %vm184 = vmor %vm182, %vm183
    %v185 = vsel %vm184, %v176, %v181
    %v186 = vrsqrt.pop %v163
    %v187 = vmul.f32 %v186, %v163
    %v188 = vmul.f32 %v187, %v186
    %v189 = vmul.f32 0.5, %v188
    %v190 = vsub.f32 1.5, %v189
    %v191 = vmul.f32 %v186, %v190
    %vm192 = vweird.f32 %v163
    %vm193 = vweird.f32 %v186
    %vm194 = vmor %vm192, %vm193
    %v195 = vsel %vm194, %v186, %v191
    %v196 = vrsqrt.pop %v164
    %v197 = vmul.f32 %v196, %v164
    %v198 = vmul.f32 %v197, %v196
    %v199 = vmul.f32 0.5, %v198
    %v200 = vsub.f32 1.5, %v199
    %v201 = vmul.f32 %v196, %v200
    %vm202 = vweird.f32 %v164
    %vm203 = vweird.f32 %v196
    %vm204 = vmor %vm202, %vm203
    %v205 = vsel %vm204, %v196, %v201
    %v206 = vrsqrt.pop %v165
    %v207 = vmul.f32 %v206, %v165
    %v208 = vmul.f32 %v207, %v206
    %v209 = vmul.f32 0.5, %v208
    %v210 = vsub.f32 1.5, %v209
    %v211 = vmul.f32 %v206, %v210
    %vm212 = vweird.f32 %v165
    %vm213 = vweird.f32 %v206
    %vm214 = vmor %vm212, %vm213
    %v215 = vsel %vm214, %v206, %v211
    %v216 = vmul.f32 %v131, %v175
    %v217 = vmul.f32 %v132, %v185
    %v218 = vmul.f32 %v133, %v195
    %v219 = vmul.f32 %v134, %v205
    %v220 = vmul.f32 %v135, %v215
    %v221 = vperm.slane %v102, 0
    %v222 = vmul.f32 %v216, %v221
    %v223 = vmul.f32 %v217, %v221
    %v224 = vmul.f32 %v218, %v221
    %v225 = vmul.f32 %v219, %v221
    %v226 = vmul.f32 %v220, %v221
    %v227 = vperm.slane %v103, 0
    %v228 = vadd.f32 %v222, %v227
    %v229 = vadd.f32 %v223, %v227
    %v230 = vadd.f32 %v224, %v227
    %v231 = vadd.f32 %v225, %v227
    %v232 = vadd.f32 %v226, %v227
    %v233 = vpack.c.bf16 %v229, %v228
    %v234 = vpack.c.bf16 %v231, %v230
    %v235 = vpack.c.bf16 %v230, %v232
    %v236 = vld [vmem:[%s1 + $0x3] sm:$0x1]
    %v237 = vperm.slane %v236, 0
    %v242 = vunpack.c.l.b16 %v74
    %v243 = vunpack.c.l.b16 %v75
    %v244 = vunpack.c.l.b16 %v76
    %v245 = vunpack.c.l.b16 %v77
    %v246 = vpack.c.b16 %v243, %v242
    %v247 = vpack.c.b16 %v245, %v244
    %v251 = vsel %vm47, %v233, 0
    %v254 = vsel %vm47, %v234, 0
    %v257 = vsel %vm47, %v235, 0
    %259 = vmatpush.bf16.msra.mxu0 0
    %260 = vmatpush.bf16.msra.mxu0 0
    %261 = vmatpush.bf16.msra.mxu0 0
    %262 = vmatpush.bf16.msra.mxu0 0
    %263 = vmatpush.bf16.msra.mxu0 0
    %264 = vmatpush.bf16.msra.mxu0 0
    %265 = vmatpush.bf16.msra.mxu0 %v247
    %266 = vmatpush.bf16.msra.mxu0 %v246
    %267 = vmatmul.bf16.gmra.mxu0 %v251
    %v268 = vpop.f32.mrf.mxu0
    %v269 = vadd.f32 %v237, %v268
    %v270 = vpop.f32.mrf.mxu0
    %v271 = vadd.f32 %v237, %v270
    %272 = vmatmul.bf16.gmra.mxu0 %v254
    %v273 = vpop.f32.mrf.mxu0
    %v274 = vadd.f32 %v237, %v273
    %v275 = vpop.f32.mrf.mxu0
    %v276 = vadd.f32 %v237, %v275
    %277 = vmatmul.bf16.gmra.mxu0 %v257
    %v278 = vpop.f32.mrf.mxu0
    %v279 = vadd.f32 %v237, %v278
    %v280 = vpop.f32.mrf.mxu0
    %v281 = vadd.f32 %v237, %v280
    %282 = vdwg.mxu0
    %286 = vrot.lane.b32.xlu0 %v269, 96
    %v287 = vpop.permute.xlu0 %286
    %288 = vrot.lane.b32.xlu0 %v271, 96
    %v289 = vpop.permute.xlu0 %288
    %290 = vrot.lane.b32.xlu0 %v274, 96
    %v291 = vpop.permute.xlu0 %290
    %vm292 = vcmask 64512
    %v293 = vsel %vm292, %v269, 0
    %v295 = vsel %vm292, %v271, 0
    %v297 = vsel %vm292, %v274, 0
    %v299 = vsel %vm292, %v287, 0
    %v301 = vsel %vm292, %v289, 0
    %v303 = vsel %vm292, %v291, 0
    %305 = vmatpush.xpose.msra.mxu0 0.0
    %306 = vmatpush.xpose.msra.mxu0 0.0
    %307 = vmatpush.xpose.msra.mxu0 0.0
    %308 = vmatpush.xpose.msra.mxu0 0.0
    %309 = vmatpush.xpose.msra.mxu0 0.0
    %310 = vmatpush.xpose.msra.mxu0 0.0
    %311 = vmatpush.xpose.msra.mxu0 0.0
    %312 = vmatpush.xpose.msra.mxu0 0.0
    %313 = vmatpush.xpose.msra.mxu0 0.0
    %314 = vmatpush.xpose.msra.mxu0 0.0
    %315 = vmatpush.xpose.msra.mxu0 0.0
    %316 = vmatpush.xpose.msra.mxu0 0.0
    %317 = vmatpush.xpose.msra.mxu0 0.0
    %318 = vmatpush.xpose.msra.mxu0 %v303
    %319 = vmatpush.xpose.msra.mxu0 %v301
    %320 = vmatpush.xpose.msra.mxu0 %v299
    %321 = vmatmul.f32.gmra.mxu0 %v293
    %v322 = vpop.f32.mrf.mxu0
    %v323 = vadd.f32 0.0, %v322
    %324 = vmatmul.f32.gmra.mxu0 %v295
    %v325 = vpop.f32.mrf.mxu0
    %v326 = vadd.f32 0.0, %v325
    %327 = vmatmul.f32.gmra.mxu0 %v297
    %v328 = vpop.f32.mrf.mxu0
    %v329 = vadd.f32 0.0, %v328
    %330 = vdwg.mxu0
    %v331 = vmul.f32 %v323, 0.35355338
    %v332 = vmul.f32 %v326, 0.35355338
    %v333 = vmul.f32 %v329, 0.35355338
    %vm334 = vcmask 195584
    %v335 = vsel %vm334, %v331, -inf
    %336 = vmax.xlane.f32.xlu0 %v335
    %v337 = vpop.xlane.xlu0 %336
    %v338 = vsel %vm334, %v332, -inf
    %339 = vmax.xlane.f32.xlu0 %v338
    %v340 = vpop.xlane.xlu0 %339
    %v341 = vsel %vm334, %v333, -inf
    %342 = vmax.xlane.f32.xlu0 %v341
    %v343 = vpop.xlane.xlu0 %342
    %v344 = vsub.f32 %v331, %v337
    %v345 = vsub.f32 %v332, %v340
    %v346 = vsub.f32 %v333, %v343
    %v347 = vmul.f32 %v344, 1.442695
    %v348 = vpow.pop %v347
    %v349 = vmul.f32 %v345, 1.442695
    %v350 = vpow.pop %v349
    %v351 = vmul.f32 %v346, 1.442695
    %v352 = vpow.pop %v351
    %v353 = vsel %vm334, %v348, 0.0
    %354 = vadd.xlane.f32.xlu0 %v353
    %v355 = vpop.xlane.xlu0 %354
    %v356 = vsel %vm334, %v350, 0.0
    %357 = vadd.xlane.f32.xlu0 %v356
    %v358 = vpop.xlane.xlu0 %357
    %v359 = vsel %vm334, %v352, 0.0
    %360 = vadd.xlane.f32.xlu0 %v359
    %v361 = vpop.xlane.xlu0 %360
    %v362 = vrcp.pop %v355
    %v363 = vrcp.pop %v358
    %v364 = vrcp.pop %v361
    %v365 = vmul.f32 %v348, %v362
    %v366 = vmul.f32 %v350, %v363
    %v367 = vmul.f32 %v352, %v364
    %368 = vrot.lane.b32.xlu0 %v269, 64
    %v369 = vpop.permute.xlu0 %368
    %370 = vrot.lane.b32.xlu0 %v271, 64
    %v371 = vpop.permute.xlu0 %370
    %372 = vrot.lane.b32.xlu0 %v274, 64
    %v373 = vpop.permute.xlu0 %372
    %v378 = vsel %vm334, %v365, 0
    %v381 = vsel %vm334, %v366, 0
    %v384 = vsel %vm334, %v367, 0
    %386 = vmatpush.msra.mxu0 0.0
    %387 = vmatpush.msra.mxu0 0.0
    %388 = vmatpush.msra.mxu0 0.0
    %389 = vmatpush.msra.mxu0 0.0
    %390 = vmatpush.msra.mxu0 0.0
    %391 = vmatpush.msra.mxu0 0.0
    %392 = vmatpush.msra.mxu0 0.0
    %393 = vmatpush.msra.mxu0 0.0
    %394 = vmatpush.msra.mxu0 0.0
    %395 = vmatpush.msra.mxu0 0.0
    %396 = vmatpush.msra.mxu0 0.0
    %397 = vmatpush.msra.mxu0 0.0
    %398 = vmatpush.msra.mxu0 0.0
    %399 = vmatpush.msra.mxu0 %v373
    %400 = vmatpush.msra.mxu0 %v371
    %401 = vmatpush.msra.mxu0 %v369
    %402 = vmatmul.f32.gmra.mxu0 %v378
    %v403 = vpop.f32.mrf.mxu0
    %v404 = vadd.f32 0.0, %v403
    %405 = vmatmul.f32.gmra.mxu0 %v381
    %v406 = vpop.f32.mrf.mxu0
    %v407 = vadd.f32 0.0, %v406
    %408 = vmatmul.f32.gmra.mxu0 %v384
    %v409 = vpop.f32.mrf.mxu0
    %v410 = vadd.f32 0.0, %v409
    %411 = vdwg.mxu0
    %412 = vrot.lane.b32.xlu0 %v269, 120
    %v413 = vpop.permute.xlu0 %412
    %414 = vrot.lane.b32.xlu0 %v271, 120
    %v415 = vpop.permute.xlu0 %414
    %416 = vrot.lane.b32.xlu0 %v274, 120
    %v417 = vpop.permute.xlu0 %416
    %418 = vrot.lane.b32.xlu0 %v269, 88
    %v419 = vpop.permute.xlu0 %418
    %420 = vrot.lane.b32.xlu0 %v271, 88
    %v421 = vpop.permute.xlu0 %420
    %422 = vrot.lane.b32.xlu0 %v274, 88
    %v423 = vpop.permute.xlu0 %422
    %v424 = vsel %vm292, %v413, 0
    %v426 = vsel %vm292, %v415, 0
    %v428 = vsel %vm292, %v417, 0
    %v430 = vsel %vm292, %v419, 0
    %v432 = vsel %vm292, %v421, 0
    %v434 = vsel %vm292, %v423, 0
    %436 = vmatpush.xpose.msra.mxu0 0.0
    %437 = vmatpush.xpose.msra.mxu0 0.0
    %438 = vmatpush.xpose.msra.mxu0 0.0
    %439 = vmatpush.xpose.msra.mxu0 0.0
    %440 = vmatpush.xpose.msra.mxu0 0.0
    %441 = vmatpush.xpose.msra.mxu0 0.0
    %442 = vmatpush.xpose.msra.mxu0 0.0
    %443 = vmatpush.xpose.msra.mxu0 0.0
    %444 = vmatpush.xpose.msra.mxu0 0.0
    %445 = vmatpush.xpose.msra.mxu0 0.0
    %446 = vmatpush.xpose.msra.mxu0 0.0
    %447 = vmatpush.xpose.msra.mxu0 0.0
    %448 = vmatpush.xpose.msra.mxu0 0.0
    %449 = vmatpush.xpose.msra.mxu0 %v434
    %450 = vmatpush.xpose.msra.mxu0 %v432
    %451 = vmatpush.xpose.msra.mxu0 %v430
    %452 = vmatmul.f32.gmra.mxu0 %v424
    %v453 = vpop.f32.mrf.mxu0
    %v454 = vadd.f32 0.0, %v453
    %455 = vmatmul.f32.gmra.mxu0 %v426
    %v456 = vpop.f32.mrf.mxu0
    %v457 = vadd.f32 0.0, %v456
    %458 = vmatmul.f32.gmra.mxu0 %v428
    %v459 = vpop.f32.mrf.mxu0
    %v460 = vadd.f32 0.0, %v459
    %461 = vdwg.mxu0
    %v462 = vmul.f32 %v454, 0.35355338
    %v463 = vmul.f32 %v457, 0.35355338
    %v464 = vmul.f32 %v460, 0.35355338
    %v465 = vsel %vm334, %v462, -inf
    %466 = vmax.xlane.f32.xlu0 %v465
    %v467 = vpop.xlane.xlu0 %466
    %v468 = vsel %vm334, %v463, -inf
    %469 = vmax.xlane.f32.xlu0 %v468
    %v470 = vpop.xlane.xlu0 %469
    %v471 = vsel %vm334, %v464, -inf
    %472 = vmax.xlane.f32.xlu0 %v471
    %v473 = vpop.xlane.xlu0 %472
    %v474 = vsub.f32 %v462, %v467
    %v475 = vsub.f32 %v463, %v470
    %v476 = vsub.f32 %v464, %v473
    %v477 = vmul.f32 %v474, 1.442695
    %v478 = vpow.pop %v477
    %v479 = vmul.f32 %v475, 1.442695
    %v480 = vpow.pop %v479
    %v481 = vmul.f32 %v476, 1.442695
    %v482 = vpow.pop %v481
    %v483 = vsel %vm334, %v478, 0.0
    %484 = vadd.xlane.f32.xlu0 %v483
    %v485 = vpop.xlane.xlu0 %484
    %v486 = vsel %vm334, %v480, 0.0
    %487 = vadd.xlane.f32.xlu0 %v486
    %v488 = vpop.xlane.xlu0 %487
    %v489 = vsel %vm334, %v482, 0.0
    %490 = vadd.xlane.f32.xlu0 %v489
    %v491 = vpop.xlane.xlu0 %490
    %v492 = vrcp.pop %v485
    %v493 = vrcp.pop %v488
    %v494 = vrcp.pop %v491
    %v495 = vmul.f32 %v478, %v492
    %v496 = vmul.f32 %v480, %v493
    %v497 = vmul.f32 %v482, %v494
    %498 = vrot.lane.b32.xlu0 %v269, 56
    %v499 = vpop.permute.xlu0 %498
    %500 = vrot.lane.b32.xlu0 %v271, 56
    %v501 = vpop.permute.xlu0 %500
    %502 = vrot.lane.b32.xlu0 %v274, 56
    %v503 = vpop.permute.xlu0 %502
    %v508 = vsel %vm334, %v495, 0
    %v511 = vsel %vm334, %v496, 0
    %v514 = vsel %vm334, %v497, 0
    %516 = vmatpush.msra.mxu0 0.0
    %517 = vmatpush.msra.mxu0 0.0
    %518 = vmatpush.msra.mxu0 0.0
    %519 = vmatpush.msra.mxu0 0.0
    %520 = vmatpush.msra.mxu0 0.0
    %521 = vmatpush.msra.mxu0 0.0
    %522 = vmatpush.msra.mxu0 0.0
    %523 = vmatpush.msra.mxu0 0.0
    %524 = vmatpush.msra.mxu0 0.0
    %525 = vmatpush.msra.mxu0 0.0
    %526 = vmatpush.msra.mxu0 0.0
    %527 = vmatpush.msra.mxu0 0.0
    %528 = vmatpush.msra.mxu0 0.0
    %529 = vmatpush.msra.mxu0 %v503
    %530 = vmatpush.msra.mxu0 %v501
    %531 = vmatpush.msra.mxu0 %v499
    %532 = vmatmul.f32.gmra.mxu0 %v508
    %v533 = vpop.f32.mrf.mxu0
    %v534 = vadd.f32 0.0, %v533
    %535 = vmatmul.f32.gmra.mxu0 %v511
    %v536 = vpop.f32.mrf.mxu0
    %v537 = vadd.f32 0.0, %v536
    %538 = vmatmul.f32.gmra.mxu0 %v514
    %v539 = vpop.f32.mrf.mxu0
    %v540 = vadd.f32 0.0, %v539
    %541 = vdwg.mxu0
    %542 = vrot.lane.b32.xlu0 %v269, 112
    %v543 = vpop.permute.xlu0 %542
    %544 = vrot.lane.b32.xlu0 %v271, 112
    %v545 = vpop.permute.xlu0 %544
    %546 = vrot.lane.b32.xlu0 %v274, 112
    %v547 = vpop.permute.xlu0 %546
    %548 = vrot.lane.b32.xlu0 %v269, 80
    %v549 = vpop.permute.xlu0 %548
    %550 = vrot.lane.b32.xlu0 %v271, 80
    %v551 = vpop.permute.xlu0 %550
    %552 = vrot.lane.b32.xlu0 %v274, 80
    %v553 = vpop.permute.xlu0 %552
    %v554 = vsel %vm292, %v543, 0
    %v556 = vsel %vm292, %v545, 0
    %v558 = vsel %vm292, %v547, 0
    %v560 = vsel %vm292, %v549, 0
    %v562 = vsel %vm292, %v551, 0
    %v564 = vsel %vm292, %v553, 0
    %566 = vmatpush.xpose.msra.mxu0 0.0
    %567 = vmatpush.xpose.msra.mxu0 0.0
    %568 = vmatpush.xpose.msra.mxu0 0.0
    %569 = vmatpush.xpose.msra.mxu0 0.0
    %570 = vmatpush.xpose.msra.mxu0 0.0
    %571 = vmatpush.xpose.msra.mxu0 0.0
    %572 = vmatpush.xpose.msra.mxu0 0.0
    %573 = vmatpush.xpose.msra.mxu0 0.0
    %574 = vmatpush.xpose.msra.mxu0 0.0
    %575 = vmatpush.xpose.msra.mxu0 0.0
    %576 = vmatpush.xpose.msra.mxu0 0.0
    %577 = vmatpush.xpose.msra.mxu0 0.0
    %578 = vmatpush.xpose.msra.mxu0 0.0
    %579 = vmatpush.xpose.msra.mxu0 %v564
    %580 = vmatpush.xpose.msra.mxu0 %v562
    %581 = vmatpush.xpose.msra.mxu0 %v560
    %582 = vmatmul.f32.gmra.mxu0 %v554
    %v583 = vpop.f32.mrf.mxu0
    %v584 = vadd.f32 0.0, %v583
    %585 = vmatmul.f32.gmra.mxu0 %v556
    %v586 = vpop.f32.mrf.mxu0
    %v587 = vadd.f32 0.0, %v586
    %588 = vmatmul.f32.gmra.mxu0 %v558
    %v589 = vpop.f32.mrf.mxu0
    %v590 = vadd.f32 0.0, %v589
    %591 = vdwg.mxu0
    %v592 = vmul.f32 %v584, 0.35355338
    %v593 = vmul.f32 %v587, 0.35355338
    %v594 = vmul.f32 %v590, 0.35355338
    %v595 = vsel %vm334, %v592, -inf
    %596 = vmax.xlane.f32.xlu0 %v595
    %v597 = vpop.xlane.xlu0 %596
    %v598 = vsel %vm334, %v593, -inf
    %599 = vmax.xlane.f32.xlu0 %v598
    %v600 = vpop.xlane.xlu0 %599
    %v601 = vsel %vm334, %v594, -inf
    %602 = vmax.xlane.f32.xlu0 %v601
    %v603 = vpop.xlane.xlu0 %602
    %v604 = vsub.f32 %v592, %v597
    %v605 = vsub.f32 %v593, %v600
    %v606 = vsub.f32 %v594, %v603
    %v607 = vmul.f32 %v604, 1.442695
    %v608 = vpow.pop %v607
    %v609 = vmul.f32 %v605, 1.442695
    %v610 = vpow.pop %v609
    %v611 = vmul.f32 %v606, 1.442695
    %v612 = vpow.pop %v611
    %v613 = vsel %vm334, %v608, 0.0
    %614 = vadd.xlane.f32.xlu0 %v613
    %v615 = vpop.xlane.xlu0 %614
    %v616 = vsel %vm334, %v610, 0.0
    %617 = vadd.xlane.f32.xlu0 %v616
    %v618 = vpop.xlane.xlu0 %617
    %v619 = vsel %vm334, %v612, 0.0
    %620 = vadd.xlane.f32.xlu0 %v619
    %v621 = vpop.xlane.xlu0 %620
    %v622 = vrcp.pop %v615
    %v623 = vrcp.pop %v618
    %v624 = vrcp.pop %v621
    %v625 = vmul.f32 %v608, %v622
    %v626 = vmul.f32 %v610, %v623
    %v627 = vmul.f32 %v612, %v624
    %628 = vrot.lane.b32.xlu0 %v269, 48
    %v629 = vpop.permute.xlu0 %628
    %630 = vrot.lane.b32.xlu0 %v271, 48
    %v631 = vpop.permute.xlu0 %630
    %632 = vrot.lane.b32.xlu0 %v274, 48
    %v633 = vpop.permute.xlu0 %632
    %v638 = vsel %vm334, %v625, 0
    %v641 = vsel %vm334, %v626, 0
    %v644 = vsel %vm334, %v627, 0
    %646 = vmatpush.msra.mxu0 0.0
    %647 = vmatpush.msra.mxu0 0.0
    %648 = vmatpush.msra.mxu0 0.0
    %649 = vmatpush.msra.mxu0 0.0
    %650 = vmatpush.msra.mxu0 0.0
    %651 = vmatpush.msra.mxu0 0.0
    %652 = vmatpush.msra.mxu0 0.0
    %653 = vmatpush.msra.mxu0 0.0
    %654 = vmatpush.msra.mxu0 0.0
    %655 = vmatpush.msra.mxu0 0.0
    %656 = vmatpush.msra.mxu0 0.0
    %657 = vmatpush.msra.mxu0 0.0
    %658 = vmatpush.msra.mxu0 0.0
    %659 = vmatpush.msra.mxu0 %v633
    %660 = vmatpush.msra.mxu0 %v631
    %661 = vmatpush.msra.mxu0 %v629
    %662 = vmatmul.f32.gmra.mxu0 %v638
    %v663 = vpop.f32.mrf.mxu0
    %v664 = vadd.f32 0.0, %v663
    %665 = vmatmul.f32.gmra.mxu0 %v641
    %v666 = vpop.f32.mrf.mxu0
    %v667 = vadd.f32 0.0, %v666
    %668 = vmatmul.f32.gmra.mxu0 %v644
    %v669 = vpop.f32.mrf.mxu0
    %v670 = vadd.f32 0.0, %v669
    %671 = vdwg.mxu0
    %672 = vrot.lane.b32.xlu0 %v269, 104
    %v673 = vpop.permute.xlu0 %672
    %674 = vrot.lane.b32.xlu0 %v271, 104
    %v675 = vpop.permute.xlu0 %674
    %676 = vrot.lane.b32.xlu0 %v274, 104
    %v677 = vpop.permute.xlu0 %676
    %678 = vrot.lane.b32.xlu0 %v269, 72
    %v679 = vpop.permute.xlu0 %678
    %680 = vrot.lane.b32.xlu0 %v271, 72
    %v681 = vpop.permute.xlu0 %680
    %682 = vrot.lane.b32.xlu0 %v274, 72
    %v683 = vpop.permute.xlu0 %682
    %v684 = vsel %vm292, %v673, 0
    %v686 = vsel %vm292, %v675, 0
    %v688 = vsel %vm292, %v677, 0
    %v690 = vsel %vm292, %v679, 0
    %v692 = vsel %vm292, %v681, 0
    %v694 = vsel %vm292, %v683, 0
    %696 = vmatpush.xpose.msra.mxu0 0.0
    %697 = vmatpush.xpose.msra.mxu0 0.0
    %698 = vmatpush.xpose.msra.mxu0 0.0
    %699 = vmatpush.xpose.msra.mxu0 0.0
    %700 = vmatpush.xpose.msra.mxu0 0.0
    %701 = vmatpush.xpose.msra.mxu0 0.0
    %702 = vmatpush.xpose.msra.mxu0 0.0
    %703 = vmatpush.xpose.msra.mxu0 0.0
    %704 = vmatpush.xpose.msra.mxu0 0.0
    %705 = vmatpush.xpose.msra.mxu0 0.0
    %706 = vmatpush.xpose.msra.mxu0 0.0
    %707 = vmatpush.xpose.msra.mxu0 0.0
    %708 = vmatpush.xpose.msra.mxu0 0.0
    %709 = vmatpush.xpose.msra.mxu0 %v694
    %710 = vmatpush.xpose.msra.mxu0 %v692
    %711 = vmatpush.xpose.msra.mxu0 %v690
    %712 = vmatmul.f32.gmra.mxu0 %v684
    %v713 = vpop.f32.mrf.mxu0
    %v714 = vadd.f32 0.0, %v713
    %715 = vmatmul.f32.gmra.mxu0 %v686
    %v716 = vpop.f32.mrf.mxu0
    %v717 = vadd.f32 0.0, %v716
    %718 = vmatmul.f32.gmra.mxu0 %v688
    %v719 = vpop.f32.mrf.mxu0
    %v720 = vadd.f32 0.0, %v719
    %721 = vdwg.mxu0
    %v722 = vmul.f32 %v714, 0.35355338
    %v723 = vmul.f32 %v717, 0.35355338
    %v724 = vmul.f32 %v720, 0.35355338
    %v725 = vsel %vm334, %v722, -inf
    %726 = vmax.xlane.f32.xlu0 %v725
    %v727 = vpop.xlane.xlu0 %726
    %v728 = vsel %vm334, %v723, -inf
    %729 = vmax.xlane.f32.xlu0 %v728
    %v730 = vpop.xlane.xlu0 %729
    %v731 = vsel %vm334, %v724, -inf
    %732 = vmax.xlane.f32.xlu0 %v731
    %v733 = vpop.xlane.xlu0 %732
    %v734 = vsub.f32 %v722, %v727
    %v735 = vsub.f32 %v723, %v730
    %v736 = vsub.f32 %v724, %v733
    %v737 = vmul.f32 %v734, 1.442695
    %v738 = vpow.pop %v737
    %v739 = vmul.f32 %v735, 1.442695
    %v740 = vpow.pop %v739
    %v741 = vmul.f32 %v736, 1.442695
    %v742 = vpow.pop %v741
    %v743 = vsel %vm334, %v738, 0.0
    %744 = vadd.xlane.f32.xlu0 %v743
    %v745 = vpop.xlane.xlu0 %744
    %v746 = vsel %vm334, %v740, 0.0
    %747 = vadd.xlane.f32.xlu0 %v746
    %v748 = vpop.xlane.xlu0 %747
    %v749 = vsel %vm334, %v742, 0.0
    %750 = vadd.xlane.f32.xlu0 %v749
    %v751 = vpop.xlane.xlu0 %750
    %v752 = vrcp.pop %v745
    %v753 = vrcp.pop %v748
    %v754 = vrcp.pop %v751
    %v755 = vmul.f32 %v738, %v752
    %v756 = vmul.f32 %v740, %v753
    %v757 = vmul.f32 %v742, %v754
    %758 = vrot.lane.b32.xlu0 %v269, 40
    %v759 = vpop.permute.xlu0 %758
    %760 = vrot.lane.b32.xlu0 %v271, 40
    %v761 = vpop.permute.xlu0 %760
    %762 = vrot.lane.b32.xlu0 %v274, 40
    %v763 = vpop.permute.xlu0 %762
    %v768 = vsel %vm334, %v755, 0
    %v771 = vsel %vm334, %v756, 0
    %v774 = vsel %vm334, %v757, 0
    %776 = vmatpush.msra.mxu0 0.0
    %777 = vmatpush.msra.mxu0 0.0
    %778 = vmatpush.msra.mxu0 0.0
    %779 = vmatpush.msra.mxu0 0.0
    %780 = vmatpush.msra.mxu0 0.0
    %781 = vmatpush.msra.mxu0 0.0
    %782 = vmatpush.msra.mxu0 0.0
    %783 = vmatpush.msra.mxu0 0.0
    %784 = vmatpush.msra.mxu0 0.0
    %785 = vmatpush.msra.mxu0 0.0
    %786 = vmatpush.msra.mxu0 0.0
    %787 = vmatpush.msra.mxu0 0.0
    %788 = vmatpush.msra.mxu0 0.0
    %789 = vmatpush.msra.mxu0 %v763
    %790 = vmatpush.msra.mxu0 %v761
    %791 = vmatpush.msra.mxu0 %v759
    %792 = vmatmul.f32.gmra.mxu0 %v768
    %v793 = vpop.f32.mrf.mxu0
    %v794 = vadd.f32 0.0, %v793
    %795 = vmatmul.f32.gmra.mxu0 %v771
    %v796 = vpop.f32.mrf.mxu0
    %v797 = vadd.f32 0.0, %v796
    %798 = vmatmul.f32.gmra.mxu0 %v774
    %v799 = vpop.f32.mrf.mxu0
    %v800 = vadd.f32 0.0, %v799
    %801 = vdwg.mxu0
    %805 = vrot.lane.b32.xlu0 %v534, 8
    %v806 = vpop.permute.xlu0 %805
    %807 = vrot.lane.b32.xlu0 %v537, 8
    %v808 = vpop.permute.xlu0 %807
    %809 = vrot.lane.b32.xlu0 %v540, 8
    %v810 = vpop.permute.xlu0 %809
    %817 = vrot.lane.b32.xlu0 %v664, 16
    %v818 = vpop.permute.xlu0 %817
    %819 = vrot.lane.b32.xlu0 %v667, 16
    %v820 = vpop.permute.xlu0 %819
    %821 = vrot.lane.b32.xlu0 %v670, 16
    %v822 = vpop.permute.xlu0 %821
    %829 = vrot.lane.b32.xlu0 %v794, 24
    %v830 = vpop.permute.xlu0 %829
    %831 = vrot.lane.b32.xlu0 %v797, 24
    %v832 = vpop.permute.xlu0 %831
    %833 = vrot.lane.b32.xlu0 %v800, 24
    %v834 = vpop.permute.xlu0 %833
    %v838 = vsel %vm292, %v404, %v806
    %v839 = vsel %vm292, %v407, %v808
    %v840 = vsel %vm292, %v410, %v810
    %vm841 = vcmask 130048
    %v842 = vsel %vm841, %v838, %v818
    %v843 = vsel %vm841, %v839, %v820
    %v844 = vsel %vm841, %v840, %v822
    %v845 = vsel %vm334, %v842, %v830
    %v846 = vsel %vm334, %v843, %v832
    %v847 = vsel %vm334, %v844, %v834
    %851 = vrot.lane.b32.xlu0 %v276, 96
    %v852 = vpop.permute.xlu0 %851
    %853 = vrot.lane.b32.xlu0 %v279, 96
    %v854 = vpop.permute.xlu0 %853
    %855 = vrot.lane.b32.xlu0 %v281, 96
    %v856 = vpop.permute.xlu0 %855
    %v857 = vsel %vm292, %v276, 0
    %v859 = vsel %vm292, %v279, 0
    %v861 = vsel %vm292, %v281, 0
    %v863 = vsel %vm292, %v852, 0
    %v865 = vsel %vm292, %v854, 0
    %v867 = vsel %vm292, %v856, 0
    %869 = vmatpush.xpose.msra.mxu0 0.0
    %870 = vmatpush.xpose.msra.mxu0 0.0
    %871 = vmatpush.xpose.msra.mxu0 0.0
    %872 = vmatpush.xpose.msra.mxu0 0.0
    %873 = vmatpush.xpose.msra.mxu0 0.0
    %874 = vmatpush.xpose.msra.mxu0 0.0
    %875 = vmatpush.xpose.msra.mxu0 0.0
    %876 = vmatpush.xpose.msra.mxu0 0.0
    %877 = vmatpush.xpose.msra.mxu0 0.0
    %878 = vmatpush.xpose.msra.mxu0 0.0
    %879 = vmatpush.xpose.msra.mxu0 0.0
    %880 = vmatpush.xpose.msra.mxu0 0.0
    %881 = vmatpush.xpose.msra.mxu0 0.0
    %882 = vmatpush.xpose.msra.mxu0 %v867
    %883 = vmatpush.xpose.msra.mxu0 %v865
    %884 = vmatpush.xpose.msra.mxu0 %v863
    %885 = vmatmul.f32.gmra.mxu0 %v857
    %v886 = vpop.f32.mrf.mxu0
    %v887 = vadd.f32 0.0, %v886
    %888 = vmatmul.f32.gmra.mxu0 %v859
    %v889 = vpop.f32.mrf.mxu0
    %v890 = vadd.f32 0.0, %v889
    %891 = vmatmul.f32.gmra.mxu0 %v861
    %v892 = vpop.f32.mrf.mxu0
    %v893 = vadd.f32 0.0, %v892
    %894 = vdwg.mxu0
    %v895 = vmul.f32 %v887, 0.35355338
    %v896 = vmul.f32 %v890, 0.35355338
    %v897 = vmul.f32 %v893, 0.35355338
    %v898 = vsel %vm334, %v895, -inf
    %899 = vmax.xlane.f32.xlu0 %v898
    %v900 = vpop.xlane.xlu0 %899
    %v901 = vsel %vm334, %v896, -inf
    %902 = vmax.xlane.f32.xlu0 %v901
    %v903 = vpop.xlane.xlu0 %902
    %v904 = vsel %vm334, %v897, -inf
    %905 = vmax.xlane.f32.xlu0 %v904
    %v906 = vpop.xlane.xlu0 %905
    %v907 = vsub.f32 %v895, %v900
    %v908 = vsub.f32 %v896, %v903
    %v909 = vsub.f32 %v897, %v906
    %v910 = vmul.f32 %v907, 1.442695
    %v911 = vpow.pop %v910
    %v912 = vmul.f32 %v908, 1.442695
    %v913 = vpow.pop %v912
    %v914 = vmul.f32 %v909, 1.442695
    %v915 = vpow.pop %v914
    %v916 = vsel %vm334, %v911, 0.0
    %917 = vadd.xlane.f32.xlu0 %v916
    %v918 = vpop.xlane.xlu0 %917
    %v919 = vsel %vm334, %v913, 0.0
    %920 = vadd.xlane.f32.xlu0 %v919
    %v921 = vpop.xlane.xlu0 %920
    %v922 = vsel %vm334, %v915, 0.0
    %923 = vadd.xlane.f32.xlu0 %v922
    %v924 = vpop.xlane.xlu0 %923
    %v925 = vrcp.pop %v918
    %v926 = vrcp.pop %v921
    %v927 = vrcp.pop %v924
    %v928 = vmul.f32 %v911, %v925
    %v929 = vmul.f32 %v913, %v926
    %v930 = vmul.f32 %v915, %v927
    %931 = vrot.lane.b32.xlu0 %v276, 64
    %v932 = vpop.permute.xlu0 %931
    %933 = vrot.lane.b32.xlu0 %v279, 64
    %v934 = vpop.permute.xlu0 %933
    %935 = vrot.lane.b32.xlu0 %v281, 64
    %v936 = vpop.permute.xlu0 %935
    %v941 = vsel %vm334, %v928, 0
    %v944 = vsel %vm334, %v929, 0
    %v947 = vsel %vm334, %v930, 0
    %949 = vmatpush.msra.mxu0 0.0
    %950 = vmatpush.msra.mxu0 0.0
    %951 = vmatpush.msra.mxu0 0.0
    %952 = vmatpush.msra.mxu0 0.0
    %953 = vmatpush.msra.mxu0 0.0
    %954 = vmatpush.msra.mxu0 0.0
    %955 = vmatpush.msra.mxu0 0.0
    %956 = vmatpush.msra.mxu0 0.0
    %957 = vmatpush.msra.mxu0 0.0
    %958 = vmatpush.msra.mxu0 0.0
    %959 = vmatpush.msra.mxu0 0.0
    %960 = vmatpush.msra.mxu0 0.0
    %961 = vmatpush.msra.mxu0 0.0
    %962 = vmatpush.msra.mxu0 %v936
    %963 = vmatpush.msra.mxu0 %v934
    %964 = vmatpush.msra.mxu0 %v932
    %965 = vmatmul.f32.gmra.mxu0 %v941
    %v966 = vpop.f32.mrf.mxu0
    %v967 = vadd.f32 0.0, %v966
    %968 = vmatmul.f32.gmra.mxu0 %v944
    %v969 = vpop.f32.mrf.mxu0
    %v970 = vadd.f32 0.0, %v969
    %971 = vmatmul.f32.gmra.mxu0 %v947
    %v972 = vpop.f32.mrf.mxu0
    %v973 = vadd.f32 0.0, %v972
    %974 = vdwg.mxu0
    %975 = vrot.lane.b32.xlu0 %v276, 120
    %v976 = vpop.permute.xlu0 %975
    %977 = vrot.lane.b32.xlu0 %v279, 120
    %v978 = vpop.permute.xlu0 %977
    %979 = vrot.lane.b32.xlu0 %v281, 120
    %v980 = vpop.permute.xlu0 %979
    %981 = vrot.lane.b32.xlu0 %v276, 88
    %v982 = vpop.permute.xlu0 %981
    %983 = vrot.lane.b32.xlu0 %v279, 88
    %v984 = vpop.permute.xlu0 %983
    %985 = vrot.lane.b32.xlu0 %v281, 88
    %v986 = vpop.permute.xlu0 %985
    %v987 = vsel %vm292, %v976, 0
    %v989 = vsel %vm292, %v978, 0
    %v991 = vsel %vm292, %v980, 0
    %v993 = vsel %vm292, %v982, 0
    %v995 = vsel %vm292, %v984, 0
    %v997 = vsel %vm292, %v986, 0
    %999 = vmatpush.xpose.msra.mxu0 0.0
    %1000 = vmatpush.xpose.msra.mxu0 0.0
    %1001 = vmatpush.xpose.msra.mxu0 0.0
    %1002 = vmatpush.xpose.msra.mxu0 0.0
    %1003 = vmatpush.xpose.msra.mxu0 0.0
    %1004 = vmatpush.xpose.msra.mxu0 0.0
    %1005 = vmatpush.xpose.msra.mxu0 0.0
    %1006 = vmatpush.xpose.msra.mxu0 0.0
    %1007 = vmatpush.xpose.msra.mxu0 0.0
    %1008 = vmatpush.xpose.msra.mxu0 0.0
    %1009 = vmatpush.xpose.msra.mxu0 0.0
    %1010 = vmatpush.xpose.msra.mxu0 0.0
    %1011 = vmatpush.xpose.msra.mxu0 0.0
    %1012 = vmatpush.xpose.msra.mxu0 %v997
    %1013 = vmatpush.xpose.msra.mxu0 %v995
    %1014 = vmatpush.xpose.msra.mxu0 %v993
    %1015 = vmatmul.f32.gmra.mxu0 %v987
    %v1016 = vpop.f32.mrf.mxu0
    %v1017 = vadd.f32 0.0, %v1016
    %1018 = vmatmul.f32.gmra.mxu0 %v989
    %v1019 = vpop.f32.mrf.mxu0
    %v1020 = vadd.f32 0.0, %v1019
    %1021 = vmatmul.f32.gmra.mxu0 %v991
    %v1022 = vpop.f32.mrf.mxu0
    %v1023 = vadd.f32 0.0, %v1022
    %1024 = vdwg.mxu0
    %v1025 = vmul.f32 %v1017, 0.35355338
    %v1026 = vmul.f32 %v1020, 0.35355338
    %v1027 = vmul.f32 %v1023, 0.35355338
    %v1028 = vsel %vm334, %v1025, -inf
    %1029 = vmax.xlane.f32.xlu0 %v1028
    %v1030 = vpop.xlane.xlu0 %1029
    %v1031 = vsel %vm334, %v1026, -inf
    %1032 = vmax.xlane.f32.xlu0 %v1031
    %v1033 = vpop.xlane.xlu0 %1032
    %v1034 = vsel %vm334, %v1027, -inf
    %1035 = vmax.xlane.f32.xlu0 %v1034
    %v1036 = vpop.xlane.xlu0 %1035
    %v1037 = vsub.f32 %v1025, %v1030
    %v1038 = vsub.f32 %v1026, %v1033
    %v1039 = vsub.f32 %v1027, %v1036
    %v1040 = vmul.f32 %v1037, 1.442695
    %v1041 = vpow.pop %v1040
    %v1042 = vmul.f32 %v1038, 1.442695
    %v1043 = vpow.pop %v1042
    %v1044 = vmul.f32 %v1039, 1.442695
    %v1045 = vpow.pop %v1044
    %v1046 = vsel %vm334, %v1041, 0.0
    %1047 = vadd.xlane.f32.xlu0 %v1046
    %v1048 = vpop.xlane.xlu0 %1047
    %v1049 = vsel %vm334, %v1043, 0.0
    %1050 = vadd.xlane.f32.xlu0 %v1049
    %v1051 = vpop.xlane.xlu0 %1050
    %v1052 = vsel %vm334, %v1045, 0.0
    %1053 = vadd.xlane.f32.xlu0 %v1052
    %v1054 = vpop.xlane.xlu0 %1053
    %v1055 = vrcp.pop %v1048
    %v1056 = vrcp.pop %v1051
    %v1057 = vrcp.pop %v1054
    %v1058 = vmul.f32 %v1041, %v1055
    %v1059 = vmul.f32 %v1043, %v1056
    %v1060 = vmul.f32 %v1045, %v1057
    %1061 = vrot.lane.b32.xlu0 %v276, 56
    %v1062 = vpop.permute.xlu0 %1061
    %1063 = vrot.lane.b32.xlu0 %v279, 56
    %v1064 = vpop.permute.xlu0 %1063
    %1065 = vrot.lane.b32.xlu0 %v281, 56
    %v1066 = vpop.permute.xlu0 %1065
    %v1071 = vsel %vm334, %v1058, 0
    %v1074 = vsel %vm334, %v1059, 0
    %v1077 = vsel %vm334, %v1060, 0
    %1079 = vmatpush.msra.mxu0 0.0
    %1080 = vmatpush.msra.mxu0 0.0
    %1081 = vmatpush.msra.mxu0 0.0
    %1082 = vmatpush.msra.mxu0 0.0
    %1083 = vmatpush.msra.mxu0 0.0
    %1084 = vmatpush.msra.mxu0 0.0
    %1085 = vmatpush.msra.mxu0 0.0
    %1086 = vmatpush.msra.mxu0 0.0
    %1087 = vmatpush.msra.mxu0 0.0
    %1088 = vmatpush.msra.mxu0 0.0
    %1089 = vmatpush.msra.mxu0 0.0
    %1090 = vmatpush.msra.mxu0 0.0
    %1091 = vmatpush.msra.mxu0 0.0
    %1092 = vmatpush.msra.mxu0 %v1066
    %1093 = vmatpush.msra.mxu0 %v1064
    %1094 = vmatpush.msra.mxu0 %v1062
    %1095 = vmatmul.f32.gmra.mxu0 %v1071
    %v1096 = vpop.f32.mrf.mxu0
    %v1097 = vadd.f32 0.0, %v1096
    %1098 = vmatmul.f32.gmra.mxu0 %v1074
    %v1099 = vpop.f32.mrf.mxu0
    %v1100 = vadd.f32 0.0, %v1099
    %1101 = vmatmul.f32.gmra.mxu0 %v1077
    %v1102 = vpop.f32.mrf.mxu0
    %v1103 = vadd.f32 0.0, %v1102
    %1104 = vdwg.mxu0
    %1105 = vrot.lane.b32.xlu0 %v276, 112
    %v1106 = vpop.permute.xlu0 %1105
    %1107 = vrot.lane.b32.xlu0 %v279, 112
    %v1108 = vpop.permute.xlu0 %1107
    %1109 = vrot.lane.b32.xlu0 %v281, 112
    %v1110 = vpop.permute.xlu0 %1109
    %1111 = vrot.lane.b32.xlu0 %v276, 80
    %v1112 = vpop.permute.xlu0 %1111
    %1113 = vrot.lane.b32.xlu0 %v279, 80
    %v1114 = vpop.permute.xlu0 %1113
    %1115 = vrot.lane.b32.xlu0 %v281, 80
    %v1116 = vpop.permute.xlu0 %1115
    %v1117 = vsel %vm292, %v1106, 0
    %v1119 = vsel %vm292, %v1108, 0
    %v1121 = vsel %vm292, %v1110, 0
    %v1123 = vsel %vm292, %v1112, 0
    %v1125 = vsel %vm292, %v1114, 0
    %v1127 = vsel %vm292, %v1116, 0
    %1129 = vmatpush.xpose.msra.mxu0 0.0
    %1130 = vmatpush.xpose.msra.mxu0 0.0
    %1131 = vmatpush.xpose.msra.mxu0 0.0
    %1132 = vmatpush.xpose.msra.mxu0 0.0
    %1133 = vmatpush.xpose.msra.mxu0 0.0
    %1134 = vmatpush.xpose.msra.mxu0 0.0
    %1135 = vmatpush.xpose.msra.mxu0 0.0
    %1136 = vmatpush.xpose.msra.mxu0 0.0
    %1137 = vmatpush.xpose.msra.mxu0 0.0
    %1138 = vmatpush.xpose.msra.mxu0 0.0
    %1139 = vmatpush.xpose.msra.mxu0 0.0
    %1140 = vmatpush.xpose.msra.mxu0 0.0
    %1141 = vmatpush.xpose.msra.mxu0 0.0
    %1142 = vmatpush.xpose.msra.mxu0 %v1127
    %1143 = vmatpush.xpose.msra.mxu0 %v1125
    %1144 = vmatpush.xpose.msra.mxu0 %v1123
    %1145 = vmatmul.f32.gmra.mxu0 %v1117
    %v1146 = vpop.f32.mrf.mxu0
    %v1147 = vadd.f32 0.0, %v1146
    %1148 = vmatmul.f32.gmra.mxu0 %v1119
    %v1149 = vpop.f32.mrf.mxu0
    %v1150 = vadd.f32 0.0, %v1149
    %1151 = vmatmul.f32.gmra.mxu0 %v1121
    %v1152 = vpop.f32.mrf.mxu0
    %v1153 = vadd.f32 0.0, %v1152
    %1154 = vdwg.mxu0
    %v1155 = vmul.f32 %v1147, 0.35355338
    %v1156 = vmul.f32 %v1150, 0.35355338
    %v1157 = vmul.f32 %v1153, 0.35355338
    %v1158 = vsel %vm334, %v1155, -inf
    %1159 = vmax.xlane.f32.xlu0 %v1158
    %v1160 = vpop.xlane.xlu0 %1159
    %v1161 = vsel %vm334, %v1156, -inf
    %1162 = vmax.xlane.f32.xlu0 %v1161
    %v1163 = vpop.xlane.xlu0 %1162
    %v1164 = vsel %vm334, %v1157, -inf
    %1165 = vmax.xlane.f32.xlu0 %v1164
    %v1166 = vpop.xlane.xlu0 %1165
    %v1167 = vsub.f32 %v1155, %v1160
    %v1168 = vsub.f32 %v1156, %v1163
    %v1169 = vsub.f32 %v1157, %v1166
    %v1170 = vmul.f32 %v1167, 1.442695
    %v1171 = vpow.pop %v1170
    %v1172 = vmul.f32 %v1168, 1.442695
    %v1173 = vpow.pop %v1172
    %v1174 = vmul.f32 %v1169, 1.442695
    %v1175 = vpow.pop %v1174
    %v1176 = vsel %vm334, %v1171, 0.0
    %1177 = vadd.xlane.f32.xlu0 %v1176
    %v1178 = vpop.xlane.xlu0 %1177
    %v1179 = vsel %vm334, %v1173, 0.0
    %1180 = vadd.xlane.f32.xlu0 %v1179
    %v1181 = vpop.xlane.xlu0 %1180
    %v1182 = vsel %vm334, %v1175, 0.0
    %1183 = vadd.xlane.f32.xlu0 %v1182
    %v1184 = vpop.xlane.xlu0 %1183
    %v1185 = vrcp.pop %v1178
    %v1186 = vrcp.pop %v1181
    %v1187 = vrcp.pop %v1184
    %v1188 = vmul.f32 %v1171, %v1185
    %v1189 = vmul.f32 %v1173, %v1186
    %v1190 = vmul.f32 %v1175, %v1187
    %1191 = vrot.lane.b32.xlu0 %v276, 48
    %v1192 = vpop.permute.xlu0 %1191
    %1193 = vrot.lane.b32.xlu0 %v279, 48
    %v1194 = vpop.permute.xlu0 %1193
    %1195 = vrot.lane.b32.xlu0 %v281, 48
    %v1196 = vpop.permute.xlu0 %1195
    %v1201 = vsel %vm334, %v1188, 0
    %v1204 = vsel %vm334, %v1189, 0
    %v1207 = vsel %vm334, %v1190, 0
    %1209 = vmatpush.msra.mxu0 0.0
    %1210 = vmatpush.msra.mxu0 0.0
    %1211 = vmatpush.msra.mxu0 0.0
    %1212 = vmatpush.msra.mxu0 0.0
    %1213 = vmatpush.msra.mxu0 0.0
    %1214 = vmatpush.msra.mxu0 0.0
    %1215 = vmatpush.msra.mxu0 0.0
    %1216 = vmatpush.msra.mxu0 0.0
    %1217 = vmatpush.msra.mxu0 0.0
    %1218 = vmatpush.msra.mxu0 0.0
    %1219 = vmatpush.msra.mxu0 0.0
    %1220 = vmatpush.msra.mxu0 0.0
    %1221 = vmatpush.msra.mxu0 0.0
    %1222 = vmatpush.msra.mxu0 %v1196
    %1223 = vmatpush.msra.mxu0 %v1194
    %1224 = vmatpush.msra.mxu0 %v1192
    %1225 = vmatmul.f32.gmra.mxu0 %v1201
    %v1226 = vpop.f32.mrf.mxu0
    %v1227 = vadd.f32 0.0, %v1226
    %1228 = vmatmul.f32.gmra.mxu0 %v1204
    %v1229 = vpop.f32.mrf.mxu0
    %v1230 = vadd.f32 0.0, %v1229
    %1231 = vmatmul.f32.gmra.mxu0 %v1207
    %v1232 = vpop.f32.mrf.mxu0
    %v1233 = vadd.f32 0.0, %v1232
    %1234 = vdwg.mxu0
    %1235 = vrot.lane.b32.xlu0 %v276, 104
    %v1236 = vpop.permute.xlu0 %1235
    %1237 = vrot.lane.b32.xlu0 %v279, 104
    %v1238 = vpop.permute.xlu0 %1237
    %1239 = vrot.lane.b32.xlu0 %v281, 104
    %v1240 = vpop.permute.xlu0 %1239
    %1241 = vrot.lane.b32.xlu0 %v276, 72
    %v1242 = vpop.permute.xlu0 %1241
    %1243 = vrot.lane.b32.xlu0 %v279, 72
    %v1244 = vpop.permute.xlu0 %1243
    %1245 = vrot.lane.b32.xlu0 %v281, 72
    %v1246 = vpop.permute.xlu0 %1245
    %v1247 = vsel %vm292, %v1236, 0
    %v1249 = vsel %vm292, %v1238, 0
    %v1251 = vsel %vm292, %v1240, 0
    %v1253 = vsel %vm292, %v1242, 0
    %v1255 = vsel %vm292, %v1244, 0
    %v1257 = vsel %vm292, %v1246, 0
    %1259 = vmatpush.xpose.msra.mxu0 0.0
    %1260 = vmatpush.xpose.msra.mxu0 0.0
    %1261 = vmatpush.xpose.msra.mxu0 0.0
    %1262 = vmatpush.xpose.msra.mxu0 0.0
    %1263 = vmatpush.xpose.msra.mxu0 0.0
    %1264 = vmatpush.xpose.msra.mxu0 0.0
    %1265 = vmatpush.xpose.msra.mxu0 0.0
    %1266 = vmatpush.xpose.msra.mxu0 0.0
    %1267 = vmatpush.xpose.msra.mxu0 0.0
    %1268 = vmatpush.xpose.msra.mxu0 0.0
    %1269 = vmatpush.xpose.msra.mxu0 0.0
    %1270 = vmatpush.xpose.msra.mxu0 0.0
    %1271 = vmatpush.xpose.msra.mxu0 0.0
    %1272 = vmatpush.xpose.msra.mxu0 %v1257
    %1273 = vmatpush.xpose.msra.mxu0 %v1255
    %1274 = vmatpush.xpose.msra.mxu0 %v1253
    %1275 = vmatmul.f32.gmra.mxu0 %v1247
    %v1276 = vpop.f32.mrf.mxu0
    %v1277 = vadd.f32 0.0, %v1276
    %1278 = vmatmul.f32.gmra.mxu0 %v1249
    %v1279 = vpop.f32.mrf.mxu0
    %v1280 = vadd.f32 0.0, %v1279
    %1281 = vmatmul.f32.gmra.mxu0 %v1251
    %v1282 = vpop.f32.mrf.mxu0
    %v1283 = vadd.f32 0.0, %v1282
    %1284 = vdwg.mxu0
    %v1285 = vmul.f32 %v1277, 0.35355338
    %v1286 = vmul.f32 %v1280, 0.35355338
    %v1287 = vmul.f32 %v1283, 0.35355338
    %v1288 = vsel %vm334, %v1285, -inf
    %1289 = vmax.xlane.f32.xlu0 %v1288
    %v1290 = vpop.xlane.xlu0 %1289
    %v1291 = vsel %vm334, %v1286, -inf
    %1292 = vmax.xlane.f32.xlu0 %v1291
    %v1293 = vpop.xlane.xlu0 %1292
    %v1294 = vsel %vm334, %v1287, -inf
    %1295 = vmax.xlane.f32.xlu0 %v1294
    %v1296 = vpop.xlane.xlu0 %1295
    %v1297 = vsub.f32 %v1285, %v1290
    %v1298 = vsub.f32 %v1286, %v1293
    %v1299 = vsub.f32 %v1287, %v1296
    %v1300 = vmul.f32 %v1297, 1.442695
    %v1301 = vpow.pop %v1300
    %v1302 = vmul.f32 %v1298, 1.442695
    %v1303 = vpow.pop %v1302
    %v1304 = vmul.f32 %v1299, 1.442695
    %v1305 = vpow.pop %v1304
    %v1306 = vsel %vm334, %v1301, 0.0
    %1307 = vadd.xlane.f32.xlu0 %v1306
    %v1308 = vpop.xlane.xlu0 %1307
    %v1309 = vsel %vm334, %v1303, 0.0
    %1310 = vadd.xlane.f32.xlu0 %v1309
    %v1311 = vpop.xlane.xlu0 %1310
    %v1312 = vsel %vm334, %v1305, 0.0
    %1313 = vadd.xlane.f32.xlu0 %v1312
    %v1314 = vpop.xlane.xlu0 %1313
    %v1315 = vrcp.pop %v1308
    %v1316 = vrcp.pop %v1311
    %v1317 = vrcp.pop %v1314
    %v1318 = vmul.f32 %v1301, %v1315
    %v1319 = vmul.f32 %v1303, %v1316
    %v1320 = vmul.f32 %v1305, %v1317
    %1321 = vrot.lane.b32.xlu0 %v276, 40
    %v1322 = vpop.permute.xlu0 %1321
    %1323 = vrot.lane.b32.xlu0 %v279, 40
    %v1324 = vpop.permute.xlu0 %1323
    %1325 = vrot.lane.b32.xlu0 %v281, 40
    %v1326 = vpop.permute.xlu0 %1325
    %v1331 = vsel %vm334, %v1318, 0
    %v1334 = vsel %vm334, %v1319, 0
    %v1337 = vsel %vm334, %v1320, 0
    %1339 = vmatpush.msra.mxu0 0.0
    %1340 = vmatpush.msra.mxu0 0.0
    %1341 = vmatpush.msra.mxu0 0.0
    %1342 = vmatpush.msra.mxu0 0.0
    %1343 = vmatpush.msra.mxu0 0.0
    %1344 = vmatpush.msra.mxu0 0.0
    %1345 = vmatpush.msra.mxu0 0.0
    %1346 = vmatpush.msra.mxu0 0.0
    %1347 = vmatpush.msra.mxu0 0.0
    %1348 = vmatpush.msra.mxu0 0.0
    %1349 = vmatpush.msra.mxu0 0.0
    %1350 = vmatpush.msra.mxu0 0.0
    %1351 = vmatpush.msra.mxu0 0.0
    %1352 = vmatpush.msra.mxu0 %v1326
    %1353 = vmatpush.msra.mxu0 %v1324
    %1354 = vmatpush.msra.mxu0 %v1322
    %1355 = vmatmul.f32.gmra.mxu0 %v1331
    %v1356 = vpop.f32.mrf.mxu0
    %v1357 = vadd.f32 0.0, %v1356
    %1358 = vmatmul.f32.gmra.mxu0 %v1334
    %v1359 = vpop.f32.mrf.mxu0
    %v1360 = vadd.f32 0.0, %v1359
    %1361 = vmatmul.f32.gmra.mxu0 %v1337
    %v1362 = vpop.f32.mrf.mxu0
    %v1363 = vadd.f32 0.0, %v1362
    %1364 = vdwg.mxu0
    %1368 = vrot.lane.b32.xlu0 %v1097, 8
    %v1369 = vpop.permute.xlu0 %1368
    %1370 = vrot.lane.b32.xlu0 %v1100, 8
    %v1371 = vpop.permute.xlu0 %1370
    %1372 = vrot.lane.b32.xlu0 %v1103, 8
    %v1373 = vpop.permute.xlu0 %1372
    %1380 = vrot.lane.b32.xlu0 %v1227, 16
    %v1381 = vpop.permute.xlu0 %1380
    %1382 = vrot.lane.b32.xlu0 %v1230, 16
    %v1383 = vpop.permute.xlu0 %1382
    %1384 = vrot.lane.b32.xlu0 %v1233, 16
    %v1385 = vpop.permute.xlu0 %1384
    %1392 = vrot.lane.b32.xlu0 %v1357, 24
    %v1393 = vpop.permute.xlu0 %1392
    %1394 = vrot.lane.b32.xlu0 %v1360, 24
    %v1395 = vpop.permute.xlu0 %1394
    %1396 = vrot.lane.b32.xlu0 %v1363, 24
    %v1397 = vpop.permute.xlu0 %1396
    %v1401 = vsel %vm292, %v967, %v1369
    %v1402 = vsel %vm292, %v970, %v1371
    %v1403 = vsel %vm292, %v973, %v1373
    %v1404 = vsel %vm841, %v1401, %v1381
    %v1405 = vsel %vm841, %v1402, %v1383
    %v1406 = vsel %vm841, %v1403, %v1385
    %v1407 = vsel %vm334, %v1404, %v1393
    %v1408 = vsel %vm334, %v1405, %v1395
    %v1409 = vsel %vm334, %v1406, %v1397
    %v1410 = vpack.c.bf16 %v846, %v845
    %v1411 = vpack.c.bf16 %v1407, %v847
    %v1412 = vpack.c.bf16 %v1409, %v1408
    %v1417 = vunpack.c.l.b16 %v78
    %v1418 = vunpack.c.l.b16 %v79
    %v1419 = vunpack.c.l.b16 %v80
    %v1420 = vunpack.c.l.b16 %v81
    %v1421 = vpack.c.b16 %v1418, %v1417
    %v1422 = vpack.c.b16 %v1420, %v1419
    %v1426 = vsel %vm47, %v1410, 0
    %v1429 = vsel %vm47, %v1411, 0
    %v1432 = vsel %vm47, %v1412, 0
    %1434 = vmatpush.bf16.msra.mxu0 0
    %1435 = vmatpush.bf16.msra.mxu0 0
    %1436 = vmatpush.bf16.msra.mxu0 0
    %1437 = vmatpush.bf16.msra.mxu0 0
    %1438 = vmatpush.bf16.msra.mxu0 0
    %1439 = vmatpush.bf16.msra.mxu0 0
    %1440 = vmatpush.bf16.msra.mxu0 %v1422
    %1441 = vmatpush.bf16.msra.mxu0 %v1421
    %1442 = vmatmul.bf16.gmra.mxu0 %v1426
    %v1443 = vpop.f32.mrf.mxu0
    %v1444 = vadd.f32 0.0, %v1443
    %v1445 = vpop.f32.mrf.mxu0
    %v1446 = vadd.f32 0.0, %v1445
    %1447 = vmatmul.bf16.gmra.mxu0 %v1429
    %v1448 = vpop.f32.mrf.mxu0
    %v1449 = vadd.f32 0.0, %v1448
    %v1450 = vpop.f32.mrf.mxu0
    %v1451 = vadd.f32 0.0, %v1450
    %1452 = vmatmul.bf16.gmra.mxu0 %v1432
    %v1453 = vpop.f32.mrf.mxu0
    %v1454 = vadd.f32 0.0, %v1453
    %v1455 = vpop.f32.mrf.mxu0
    %v1456 = vadd.f32 0.0, %v1455
    %1457 = vdwg.mxu0
    %v1458 = vadd.f32 %v64, %v1444
    %v1459 = vadd.f32 %v66, %v1446
    %v1460 = vadd.f32 %v73, %v1449
    %v1461 = vadd.f32 %v69, %v1451
    %v1462 = vadd.f32 %v71, %v1454
    %v1463 = vadd.f32 %v73, %v1456
    %v1464 = vld [vmem:[%s1 + $0x4] sm:$0x1]
    %v1465 = vperm.slane %v1464, 0
    %v1466 = vadd.f32 %v1458, %v1465
    %v1467 = vadd.f32 %v1459, %v1465
    %v1468 = vadd.f32 %v1460, %v1465
    %v1469 = vadd.f32 %v1461, %v1465
    %v1470 = vadd.f32 %v1462, %v1465
    %v1471 = vadd.f32 %v1463, %v1465
    %v1472 = vld [vmem:[%s1 + $0x5] sm:$0x1]
    %v1473 = vld [vmem:[%s1 + $0x6] sm:$0x1]
    %v1474 = vsel %vm47, %v1466, 0.0
    %1475 = vadd.xlane.f32.xlu0 %v1474
    %v1476 = vpop.xlane.xlu0 %1475
    %v1477 = vsel %vm47, %v1467, 0.0
    %1478 = vadd.xlane.f32.xlu0 %v1477
    %v1479 = vpop.xlane.xlu0 %1478
    %v1480 = vsel %vm47, %v1468, 0.0
    %1481 = vadd.xlane.f32.xlu0 %v1480
    %v1482 = vpop.xlane.xlu0 %1481
    %v1483 = vsel %vm47, %v1469, 0.0
    %1484 = vadd.xlane.f32.xlu0 %v1483
    %v1485 = vpop.xlane.xlu0 %1484
    %v1486 = vsel %vm47, %v1470, 0.0
    %1487 = vadd.xlane.f32.xlu0 %v1486
    %v1488 = vpop.xlane.xlu0 %1487
    %v1489 = vsel %vm47, %v1471, 0.0
    %1490 = vadd.xlane.f32.xlu0 %v1489
    %v1491 = vpop.xlane.xlu0 %1490
    %v1492 = vmul.f32 %v1476, %v125
    %v1493 = vmul.f32 %v1479, %v125
    %v1494 = vmul.f32 %v1482, %v125
    %v1495 = vmul.f32 %v1485, %v125
    %v1496 = vmul.f32 %v1488, %v125
    %v1497 = vmul.f32 %v1491, %v125
    %v1498 = vsub.f32 %v1466, %v1492
    %v1499 = vsub.f32 %v1467, %v1493
    %v1500 = vsub.f32 %v1468, %v1494
    %v1501 = vsub.f32 %v1469, %v1495
    %v1502 = vsub.f32 %v1470, %v1496
    %v1503 = vsub.f32 %v1471, %v1497
    %v1504 = vmul.f32 %v1498, %v1498
    %v1505 = vmul.f32 %v1499, %v1499
    %v1506 = vmul.f32 %v1500, %v1500
    %v1507 = vmul.f32 %v1501, %v1501
    %v1508 = vmul.f32 %v1502, %v1502
    %v1509 = vmul.f32 %v1503, %v1503
    %v1510 = vsel %vm47, %v1504, 0.0
    %1511 = vadd.xlane.f32.xlu0 %v1510
    %v1512 = vpop.xlane.xlu0 %1511
    %v1513 = vsel %vm47, %v1505, 0.0
    %1514 = vadd.xlane.f32.xlu0 %v1513
    %v1515 = vpop.xlane.xlu0 %1514
    %v1516 = vsel %vm47, %v1506, 0.0
    %1517 = vadd.xlane.f32.xlu0 %v1516
    %v1518 = vpop.xlane.xlu0 %1517
    %v1519 = vsel %vm47, %v1507, 0.0
    %1520 = vadd.xlane.f32.xlu0 %v1519
    %v1521 = vpop.xlane.xlu0 %1520
    %v1522 = vsel %vm47, %v1508, 0.0
    %1523 = vadd.xlane.f32.xlu0 %v1522
    %v1524 = vpop.xlane.xlu0 %1523
    %v1525 = vsel %vm47, %v1509, 0.0
    %1526 = vadd.xlane.f32.xlu0 %v1525
    %v1527 = vpop.xlane.xlu0 %1526
    %v1528 = vmul.f32 %v1512, %v125
    %v1529 = vmul.f32 %v1515, %v125
    %v1530 = vmul.f32 %v1518, %v125
    %v1531 = vmul.f32 %v1521, %v125
    %v1532 = vmul.f32 %v1524, %v125
    %v1533 = vmul.f32 %v1527, %v125
    %v1534 = vadd.f32 %v1528, 1e-06
    %v1535 = vadd.f32 %v1529, 1e-06
    %v1536 = vadd.f32 %v1530, 1e-06
    %v1537 = vadd.f32 %v1531, 1e-06
    %v1538 = vadd.f32 %v1532, 1e-06
    %v1539 = vadd.f32 %v1533, 1e-06
    %v1540 = vrsqrt.pop %v1534
    %v1541 = vmul.f32 %v1540, %v1534
    %v1542 = vmul.f32 %v1541, %v1540
    %v1543 = vmul.f32 0.5, %v1542
    %v1544 = vsub.f32 1.5, %v1543
    %v1545 = vmul.f32 %v1540, %v1544
    %vm1546 = vweird.f32 %v1534
    %vm1547 = vweird.f32 %v1540
    %vm1548 = vmor %vm1546, %vm1547
    %v1549 = vsel %vm1548, %v1540, %v1545
    %v1550 = vrsqrt.pop %v1535
    %v1551 = vmul.f32 %v1550, %v1535
    %v1552 = vmul.f32 %v1551, %v1550
    %v1553 = vmul.f32 0.5, %v1552
    %v1554 = vsub.f32 1.5, %v1553
    %v1555 = vmul.f32 %v1550, %v1554
    %vm1556 = vweird.f32 %v1535
    %vm1557 = vweird.f32 %v1550
    %vm1558 = vmor %vm1556, %vm1557
    %v1559 = vsel %vm1558, %v1550, %v1555
    %v1560 = vrsqrt.pop %v1536
    %v1561 = vmul.f32 %v1560, %v1536
    %v1562 = vmul.f32 %v1561, %v1560
    %v1563 = vmul.f32 0.5, %v1562
    %v1564 = vsub.f32 1.5, %v1563
    %v1565 = vmul.f32 %v1560, %v1564
    %vm1566 = vweird.f32 %v1536
    %vm1567 = vweird.f32 %v1560
    %vm1568 = vmor %vm1566, %vm1567
    %v1569 = vsel %vm1568, %v1560, %v1565
    %v1570 = vrsqrt.pop %v1537
    %v1571 = vmul.f32 %v1570, %v1537
    %v1572 = vmul.f32 %v1571, %v1570
    %v1573 = vmul.f32 0.5, %v1572
    %v1574 = vsub.f32 1.5, %v1573
    %v1575 = vmul.f32 %v1570, %v1574
    %vm1576 = vweird.f32 %v1537
    %vm1577 = vweird.f32 %v1570
    %vm1578 = vmor %vm1576, %vm1577
    %v1579 = vsel %vm1578, %v1570, %v1575
    %v1580 = vrsqrt.pop %v1538
    %v1581 = vmul.f32 %v1580, %v1538
    %v1582 = vmul.f32 %v1581, %v1580
    %v1583 = vmul.f32 0.5, %v1582
    %v1584 = vsub.f32 1.5, %v1583
    %v1585 = vmul.f32 %v1580, %v1584
    %vm1586 = vweird.f32 %v1538
    %vm1587 = vweird.f32 %v1580
    %vm1588 = vmor %vm1586, %vm1587
    %v1589 = vsel %vm1588, %v1580, %v1585
    %v1590 = vrsqrt.pop %v1539
    %v1591 = vmul.f32 %v1590, %v1539
    %v1592 = vmul.f32 %v1591, %v1590
    %v1593 = vmul.f32 0.5, %v1592
    %v1594 = vsub.f32 1.5, %v1593
    %v1595 = vmul.f32 %v1590, %v1594
    %vm1596 = vweird.f32 %v1539
    %vm1597 = vweird.f32 %v1590
    %vm1598 = vmor %vm1596, %vm1597
    %v1599 = vsel %vm1598, %v1590, %v1595
    %v1600 = vmul.f32 %v1498, %v1549
    %v1601 = vmul.f32 %v1499, %v1559
    %v1602 = vmul.f32 %v1500, %v1569
    %v1603 = vmul.f32 %v1501, %v1579
    %v1604 = vmul.f32 %v1502, %v1589
    %v1605 = vmul.f32 %v1503, %v1599
    %v1606 = vperm.slane %v1472, 0
    %v1607 = vmul.f32 %v1600, %v1606
    %v1608 = vmul.f32 %v1601, %v1606
    %v1609 = vmul.f32 %v1602, %v1606
    %v1610 = vmul.f32 %v1603, %v1606
    %v1611 = vmul.f32 %v1604, %v1606
    %v1612 = vmul.f32 %v1605, %v1606
    %v1613 = vperm.slane %v1473, 0
    %v1614 = vadd.f32 %v1607, %v1613
    %v1615 = vadd.f32 %v1608, %v1613
    %v1616 = vadd.f32 %v1609, %v1613
    %v1617 = vadd.f32 %v1610, %v1613
    %v1618 = vadd.f32 %v1611, %v1613
    %v1619 = vadd.f32 %v1612, %v1613
    %v1620 = vpack.c.bf16 %v1615, %v1614
    %v1621 = vpack.c.bf16 %v1617, %v1616
    %v1622 = vpack.c.bf16 %v1619, %v1618
    %v1623 = vld [vmem:[%s1 + $0x7] sm:$0x1]
    %v1624 = vperm.slane %v1623, 0
    %v1629 = vunpack.c.l.b16 %v82
    %v1630 = vunpack.c.l.b16 %v83
    %v1631 = vunpack.c.l.b16 %v84
    %v1632 = vunpack.c.l.b16 %v85
    %v1633 = vpack.c.b16 %v1630, %v1629
    %v1634 = vpack.c.b16 %v1632, %v1631
    %v1638 = vsel %vm47, %v1620, 0
    %v1641 = vsel %vm47, %v1621, 0
    %v1644 = vsel %vm47, %v1622, 0
    %1646 = vmatpush.bf16.msra.mxu0 0
    %1647 = vmatpush.bf16.msra.mxu0 0
    %1648 = vmatpush.bf16.msra.mxu0 0
    %1649 = vmatpush.bf16.msra.mxu0 0
    %1650 = vmatpush.bf16.msra.mxu0 0
    %1651 = vmatpush.bf16.msra.mxu0 0
    %1652 = vmatpush.bf16.msra.mxu0 %v1634
    %1653 = vmatpush.bf16.msra.mxu0 %v1633
    %1654 = vmatmul.bf16.gmra.mxu0 %v1638
    %v1655 = vpop.f32.mrf.mxu0
    %v1656 = vadd.f32 %v1624, %v1655
    %v1657 = vpop.f32.mrf.mxu0
    %v1658 = vadd.f32 %v1624, %v1657
    %1659 = vmatmul.bf16.gmra.mxu0 %v1641
    %v1660 = vpop.f32.mrf.mxu0
    %v1661 = vadd.f32 %v1624, %v1660
    %v1662 = vpop.f32.mrf.mxu0
    %v1663 = vadd.f32 %v1624, %v1662
    %1664 = vmatmul.bf16.gmra.mxu0 %v1644
    %v1665 = vpop.f32.mrf.mxu0
    %v1666 = vadd.f32 %v1624, %v1665
    %v1667 = vpop.f32.mrf.mxu0
    %v1668 = vadd.f32 %v1624, %v1667
    %1669 = vdwg.mxu0
    %v1670 = vmul.f32 %v1656, 0.5
    %v1671 = vmul.f32 %v1658, 0.5
    %v1672 = vmul.f32 %v1661, 0.5
    %v1673 = vmul.f32 %v1663, 0.5
    %v1674 = vmul.f32 %v1666, 0.5
    %v1675 = vmul.f32 %v1668, 0.5
    %v1676 = vmul.f32 %v1656, 0.044715
    %v1677 = vmul.f32 %v1658, 0.044715
    %v1678 = vmul.f32 %v1661, 0.044715
    %v1679 = vmul.f32 %v1663, 0.044715
    %v1680 = vmul.f32 %v1666, 0.044715
    %v1681 = vmul.f32 %v1668, 0.044715
    %v1682 = vmul.f32 %v1676, %v1656
    %v1683 = vmul.f32 %v1677, %v1658
    %v1684 = vmul.f32 %v1678, %v1661
    %v1685 = vmul.f32 %v1679, %v1663
    %v1686 = vmul.f32 %v1680, %v1666
    %v1687 = vmul.f32 %v1681, %v1668
    %v1688 = vmul.f32 %v1682, %v1656
    %v1689 = vmul.f32 %v1683, %v1658
    %v1690 = vmul.f32 %v1684, %v1661
    %v1691 = vmul.f32 %v1685, %v1663
    %v1692 = vmul.f32 %v1686, %v1666
    %v1693 = vmul.f32 %v1687, %v1668
    %v1694 = vadd.f32 %v1656, %v1688
    %v1695 = vadd.f32 %v1658, %v1689
    %v1696 = vadd.f32 %v1661, %v1690
    %v1697 = vadd.f32 %v1663, %v1691
    %v1698 = vadd.f32 %v1666, %v1692
    %v1699 = vadd.f32 %v1668, %v1693
    %v1700 = vmul.f32 %v1694, 0.7978846
    %v1701 = vmul.f32 %v1695, 0.7978846
    %v1702 = vmul.f32 %v1696, 0.7978846
    %v1703 = vmul.f32 %v1697, 0.7978846
    %v1704 = vmul.f32 %v1698, 0.7978846
    %v1705 = vmul.f32 %v1699, 0.7978846
    %v1706 = vtanh.pop %v1700
    %v1707 = vtanh.pop %v1701
    %v1708 = vtanh.pop %v1702
    %v1709 = vtanh.pop %v1703
    %v1710 = vtanh.pop %v1704
    %v1711 = vtanh.pop %v1705
    %v1712 = vadd.f32 %v1706, 1.0
    %v1713 = vadd.f32 %v1707, 1.0
    %v1714 = vadd.f32 %v1708, 1.0
    %v1715 = vadd.f32 %v1709, 1.0
    %v1716 = vadd.f32 %v1710, 1.0
    %v1717 = vadd.f32 %v1711, 1.0
    %v1718 = vmul.f32 %v1670, %v1712
    %v1719 = vmul.f32 %v1671, %v1713
    %v1720 = vmul.f32 %v1672, %v1714
    %v1721 = vmul.f32 %v1673, %v1715
    %v1722 = vmul.f32 %v1674, %v1716
    %v1723 = vmul.f32 %v1675, %v1717
    %v1724 = vpack.c.bf16 %v1719, %v1718
    %v1725 = vpack.c.bf16 %v1721, %v1720
    %v1726 = vpack.c.bf16 %v1723, %v1722
    %v1743 = vunpack.c.l.b16 %v86
    %v1744 = vunpack.c.l.b16 %v87
    %v1745 = vunpack.c.l.b16 %v88
    %v1746 = vunpack.c.l.b16 %v89
    %v1747 = vunpack.c.l.b16 %v90
    %v1748 = vunpack.c.l.b16 %v91
    %v1749 = vunpack.c.l.b16 %v92
    %v1750 = vunpack.c.l.b16 %v93
    %v1751 = vunpack.c.l.b16 %v94
    %v1752 = vunpack.c.l.b16 %v95
    %v1753 = vunpack.c.l.b16 %v96
    %v1754 = vunpack.c.l.b16 %v97
    %v1755 = vunpack.c.l.b16 %v98
    %v1756 = vunpack.c.l.b16 %v99
    %v1757 = vunpack.c.l.b16 %v100
    %v1758 = vunpack.c.l.b16 %v101
    %v1759 = vpack.c.b16 %v1744, %v1743
    %v1760 = vpack.c.b16 %v1746, %v1745
    %v1761 = vpack.c.b16 %v1748, %v1747
    %v1762 = vpack.c.b16 %v1750, %v1749
    %v1763 = vpack.c.b16 %v1752, %v1751
    %v1764 = vpack.c.b16 %v1754, %v1753
    %v1765 = vpack.c.b16 %v1756, %v1755
    %v1766 = vpack.c.b16 %v1758, %v1757
    %1775 = vmatpush.bf16.msra.mxu0 %v1766
    %1776 = vmatpush.bf16.msra.mxu0 %v1765
    %1777 = vmatpush.bf16.msra.mxu0 %v1764
    %1778 = vmatpush.bf16.msra.mxu0 %v1763
    %1779 = vmatpush.bf16.msra.mxu0 %v1762
    %1780 = vmatpush.bf16.msra.mxu0 %v1761
    %1781 = vmatpush.bf16.msra.mxu0 %v1760
    %1782 = vmatpush.bf16.msra.mxu0 %v1759
    %1783 = vmatmul.bf16.gmra.mxu0 %v1724
    %v1784 = vpop.f32.mrf.mxu0
    %v1785 = vadd.f32 0.0, %v1784
    %v1786 = vpop.f32.mrf.mxu0
    %v1787 = vadd.f32 0.0, %v1786
    %1788 = vmatmul.bf16.gmra.mxu0 %v1725
    %v1789 = vpop.f32.mrf.mxu0
    %v1790 = vadd.f32 0.0, %v1789
    %v1791 = vpop.f32.mrf.mxu0
    %v1792 = vadd.f32 0.0, %v1791
    %1793 = vmatmul.bf16.gmra.mxu0 %v1726
    %v1794 = vpop.f32.mrf.mxu0
    %v1795 = vadd.f32 0.0, %v1794
    %v1796 = vpop.f32.mrf.mxu0
    %v1797 = vadd.f32 0.0, %v1796
    %1798 = vdwg.mxu0
    %v1799 = vadd.f32 %v1466, %v1785
    %v1800 = vadd.f32 %v1467, %v1787
    %v1801 = vadd.f32 %v1468, %v1790
    %v1802 = vadd.f32 %v1469, %v1792
    %v1803 = vadd.f32 %v1470, %v1795
    %v1804 = vadd.f32 %v1471, %v1797
    %v1805 = vld [vmem:[%s1 + $0x8] sm:$0x1]
    %v1806 = vperm.slane %v1805, 0
    %v1807 = vadd.f32 %v1799, %v1806
    %v1808 = vadd.f32 %v1800, %v1806
    %v1809 = vadd.f32 %v1801, %v1806
    %v1810 = vadd.f32 %v1802, %v1806
    %v1811 = vadd.f32 %v1803, %v1806
    %v1812 = vadd.f32 %v1804, %v1806
    %v1813 = vld [vmem:[%s2 + $0x80] sm:$0xf]
    %v1814 = vld [vmem:[%s2 + $0x84] sm:$0xf]
    %v1815 = vld [vmem:[%s2 + $0x88] sm:$0xf]
    %v1816 = vld [vmem:[%s2 + $0x8c] sm:$0xf]
    %v1817 = vld [vmem:[%s2 + $0x90] sm:$0xf]
    %v1818 = vld [vmem:[%s2 + $0x94] sm:$0xf]
    %v1819 = vld [vmem:[%s2 + $0x98] sm:$0xf]
    %v1820 = vld [vmem:[%s2 + $0x9c] sm:$0xf]
    %v1821 = vld [vmem:[%s2 + $0xa0] sm:$0xf]
    %v1822 = vld [vmem:[%s2 + $0xa4] sm:$0xf]
    %v1823 = vld [vmem:[%s2 + $0xa8] sm:$0xf]
    %v1824 = vld [vmem:[%s2 + $0xac] sm:$0xf]
    %v1825 = vld [vmem:[%s2 + $0xb0] sm:$0xf]
    %v1826 = vld [vmem:[%s2 + $0xb4] sm:$0xf]
    %v1827 = vld [vmem:[%s2 + $0xb8] sm:$0xf]
    %v1828 = vld [vmem:[%s2 + $0xbc] sm:$0xf]
    %v1829 = vld [vmem:[%s2 + $0xc0] sm:$0xf]
    %v1830 = vld [vmem:[%s2 + $0xc4] sm:$0xf]
    %v1831 = vld [vmem:[%s2 + $0xc8] sm:$0xf]
    %v1832 = vld [vmem:[%s2 + $0xcc] sm:$0xf]
    %v1833 = vld [vmem:[%s2 + $0xd0] sm:$0xf]
    %v1834 = vld [vmem:[%s2 + $0xd4] sm:$0xf]
    %v1835 = vld [vmem:[%s2 + $0xd8] sm:$0xf]
    %v1836 = vld [vmem:[%s2 + $0xdc] sm:$0xf]
    %v1837 = vld [vmem:[%s2 + $0xe0] sm:$0xf]
    %v1838 = vld [vmem:[%s2 + $0xe4] sm:$0xf]
    %v1839 = vld [vmem:[%s2 + $0xe8] sm:$0xf]
    %v1840 = vld [vmem:[%s2 + $0xec] sm:$0xf]
    %v1841 = vld [vmem:[%s1 + $0x9] sm:$0x1]
    %v1842 = vld [vmem:[%s1 + $0xa] sm:$0x1]
    %v1843 = vsel %vm47, %v1807, 0.0
    %1844 = vadd.xlane.f32.xlu0 %v1843
    %v1845 = vpop.xlane.xlu0 %1844
    %v1846 = vsel %vm47, %v1808, 0.0
    %1847 = vadd.xlane.f32.xlu0 %v1846
    %v1848 = vpop.xlane.xlu0 %1847
    %v1849 = vsel %vm47, %v1809, 0.0
    %1850 = vadd.xlane.f32.xlu0 %v1849
    %v1851 = vpop.xlane.xlu0 %1850
    %v1852 = vsel %vm47, %v1810, 0.0
    %1853 = vadd.xlane.f32.xlu0 %v1852
    %v1854 = vpop.xlane.xlu0 %1853
    %v1855 = vsel %vm47, %v1811, 0.0
    %1856 = vadd.xlane.f32.xlu0 %v1855
    %v1857 = vpop.xlane.xlu0 %1856
    %v1858 = vsel %vm47, %v1812, 0.0
    %1859 = vadd.xlane.f32.xlu0 %v1858
    %v1860 = vpop.xlane.xlu0 %1859
    %v1861 = vmul.f32 %v1845, %v125
    %v1862 = vmul.f32 %v1848, %v125
    %v1863 = vmul.f32 %v1851, %v125
    %v1864 = vmul.f32 %v1854, %v125
    %v1865 = vmul.f32 %v1857, %v125
    %v1866 = vmul.f32 %v1860, %v125
    %v1867 = vsub.f32 %v1807, %v1861
    %v1868 = vsub.f32 %v1808, %v1862
    %v1869 = vsub.f32 %v1809, %v1863
    %v1870 = vsub.f32 %v1810, %v1864
    %v1871 = vsub.f32 %v1811, %v1865
    %v1872 = vsub.f32 %v1812, %v1866
    %v1873 = vmul.f32 %v1867, %v1867
    %v1874 = vmul.f32 %v1868, %v1868
    %v1875 = vmul.f32 %v1869, %v1869
    %v1876 = vmul.f32 %v1870, %v1870
    %v1877 = vmul.f32 %v1871, %v1871
    %v1878 = vmul.f32 %v1872, %v1872
    %v1879 = vsel %vm47, %v1873, 0.0
    %1880 = vadd.xlane.f32.xlu0 %v1879
    %v1881 = vpop.xlane.xlu0 %1880
    %v1882 = vsel %vm47, %v1874, 0.0
    %1883 = vadd.xlane.f32.xlu0 %v1882
    %v1884 = vpop.xlane.xlu0 %1883
    %v1885 = vsel %vm47, %v1875, 0.0
    %1886 = vadd.xlane.f32.xlu0 %v1885
    %v1887 = vpop.xlane.xlu0 %1886
    %v1888 = vsel %vm47, %v1876, 0.0
    %1889 = vadd.xlane.f32.xlu0 %v1888
    %v1890 = vpop.xlane.xlu0 %1889
    %v1891 = vsel %vm47, %v1877, 0.0
    %1892 = vadd.xlane.f32.xlu0 %v1891
    %v1893 = vpop.xlane.xlu0 %1892
    %v1894 = vsel %vm47, %v1878, 0.0
    %1895 = vadd.xlane.f32.xlu0 %v1894
    %v1896 = vpop.xlane.xlu0 %1895
    %v1897 = vmul.f32 %v1881, %v125
    %v1898 = vmul.f32 %v1884, %v125
    %v1899 = vmul.f32 %v1887, %v125
    %v1900 = vmul.f32 %v1890, %v125
    %v1901 = vmul.f32 %v1893, %v125
    %v1902 = vmul.f32 %v1896, %v125
    %v1903 = vadd.f32 %v1897, 1e-06
    %v1904 = vadd.f32 %v1898, 1e-06
    %v1905 = vadd.f32 %v1899, 1e-06
    %v1906 = vadd.f32 %v1900, 1e-06
    %v1907 = vadd.f32 %v1901, 1e-06
    %v1908 = vadd.f32 %v1902, 1e-06
    %v1909 = vrsqrt.pop %v1903
    %v1910 = vmul.f32 %v1909, %v1903
    %v1911 = vmul.f32 %v1910, %v1909
    %v1912 = vmul.f32 0.5, %v1911
    %v1913 = vsub.f32 1.5, %v1912
    %v1914 = vmul.f32 %v1909, %v1913
    %vm1915 = vweird.f32 %v1903
    %vm1916 = vweird.f32 %v1909
    %vm1917 = vmor %vm1915, %vm1916
    %v1918 = vsel %vm1917, %v1909, %v1914
    %v1919 = vrsqrt.pop %v1904
    %v1920 = vmul.f32 %v1919, %v1904
    %v1921 = vmul.f32 %v1920, %v1919
    %v1922 = vmul.f32 0.5, %v1921
    %v1923 = vsub.f32 1.5, %v1922
    %v1924 = vmul.f32 %v1919, %v1923
    %vm1925 = vweird.f32 %v1904
    %vm1926 = vweird.f32 %v1919
    %vm1927 = vmor %vm1925, %vm1926
    %v1928 = vsel %vm1927, %v1919, %v1924
    %v1929 = vrsqrt.pop %v1905
    %v1930 = vmul.f32 %v1929, %v1905
    %v1931 = vmul.f32 %v1930, %v1929
    %v1932 = vmul.f32 0.5, %v1931
    %v1933 = vsub.f32 1.5, %v1932
    %v1934 = vmul.f32 %v1929, %v1933
    %vm1935 = vweird.f32 %v1905
    %vm1936 = vweird.f32 %v1929
    %vm1937 = vmor %vm1935, %vm1936
    %v1938 = vsel %vm1937, %v1929, %v1934
    %v1939 = vrsqrt.pop %v1906
    %v1940 = vmul.f32 %v1939, %v1906
    %v1941 = vmul.f32 %v1940, %v1939
    %v1942 = vmul.f32 0.5, %v1941
    %v1943 = vsub.f32 1.5, %v1942
    %v1944 = vmul.f32 %v1939, %v1943
    %vm1945 = vweird.f32 %v1906
    %vm1946 = vweird.f32 %v1939
    %vm1947 = vmor %vm1945, %vm1946
    %v1948 = vsel %vm1947, %v1939, %v1944
    %v1949 = vrsqrt.pop %v1907
    %v1950 = vmul.f32 %v1949, %v1907
    %v1951 = vmul.f32 %v1950, %v1949
    %v1952 = vmul.f32 0.5, %v1951
    %v1953 = vsub.f32 1.5, %v1952
    %v1954 = vmul.f32 %v1949, %v1953
    %vm1955 = vweird.f32 %v1907
    %vm1956 = vweird.f32 %v1949
    %vm1957 = vmor %vm1955, %vm1956
    %v1958 = vsel %vm1957, %v1949, %v1954
    %v1959 = vrsqrt.pop %v1908
    %v1960 = vmul.f32 %v1959, %v1908
    %v1961 = vmul.f32 %v1960, %v1959
    %v1962 = vmul.f32 0.5, %v1961
    %v1963 = vsub.f32 1.5, %v1962
    %v1964 = vmul.f32 %v1959, %v1963
    %vm1965 = vweird.f32 %v1908
    %vm1966 = vweird.f32 %v1959
    %vm1967 = vmor %vm1965, %vm1966
    %v1968 = vsel %vm1967, %v1959, %v1964
    %v1969 = vmul.f32 %v1867, %v1918
    %v1970 = vmul.f32 %v1868, %v1928
    %v1971 = vmul.f32 %v1869, %v1938
    %v1972 = vmul.f32 %v1870, %v1948
    %v1973 = vmul.f32 %v1871, %v1958
    %v1974 = vmul.f32 %v1872, %v1968
    %v1975 = vperm.slane %v1841, 0
    %v1976 = vmul.f32 %v1969, %v1975
    %v1977 = vmul.f32 %v1970, %v1975
    %v1978 = vmul.f32 %v1971, %v1975
    %v1979 = vmul.f32 %v1972, %v1975
    %v1980 = vmul.f32 %v1973, %v1975
    %v1981 = vmul.f32 %v1974, %v1975
    %v1982 = vperm.slane %v1842, 0
    %v1983 = vadd.f32 %v1976, %v1982
    %v1984 = vadd.f32 %v1977, %v1982
    %v1985 = vadd.f32 %v1978, %v1982
    %v1986 = vadd.f32 %v1979, %v1982
    %v1987 = vadd.f32 %v1980, %v1982
    %v1988 = vadd.f32 %v1981, %v1982
    %v1989 = vpack.c.bf16 %v1984, %v1983
    %v1990 = vpack.c.bf16 %v1986, %v1985
    %v1991 = vpack.c.bf16 %v1988, %v1987
    %v1992 = vld [vmem:[%s1 + $0xb] sm:$0x1]
    %v1993 = vperm.slane %v1992, 0
    %v1998 = vunpack.c.l.b16 %v1813
    %v1999 = vunpack.c.l.b16 %v1814
    %v2000 = vunpack.c.l.b16 %v1815
    %v2001 = vunpack.c.l.b16 %v1816
    %v2002 = vpack.c.b16 %v1999, %v1998
    %v2003 = vpack.c.b16 %v2001, %v2000
    %v2007 = vsel %vm47, %v1989, 0
    %v2010 = vsel %vm47, %v1990, 0
    %v2013 = vsel %vm47, %v1991, 0
    %2015 = vmatpush.bf16.msra.mxu0 0
    %2016 = vmatpush.bf16.msra.mxu0 0
    %2017 = vmatpush.bf16.msra.mxu0 0
    %2018 = vmatpush.bf16.msra.mxu0 0
    %2019 = vmatpush.bf16.msra.mxu0 0
    %2020 = vmatpush.bf16.msra.mxu0 0
    %2021 = vmatpush.bf16.msra.mxu0 %v2003
    %2022 = vmatpush.bf16.msra.mxu0 %v2002
    %2023 = vmatmul.bf16.gmra.mxu0 %v2007
    %v2024 = vpop.f32.mrf.mxu0
    %v2025 = vadd.f32 %v1993, %v2024
    %v2026 = vpop.f32.mrf.mxu0
    %v2027 = vadd.f32 %v1993, %v2026
    %2028 = vmatmul.bf16.gmra.mxu0 %v2010
    %v2029 = vpop.f32.mrf.mxu0
    %v2030 = vadd.f32 %v1993, %v2029
    %v2031 = vpop.f32.mrf.mxu0
    %v2032 = vadd.f32 %v1993, %v2031
    %2033 = vmatmul.bf16.gmra.mxu0 %v2013
    %v2034 = vpop.f32.mrf.mxu0
    %v2035 = vadd.f32 %v1993, %v2034
    %v2036 = vpop.f32.mrf.mxu0
    %v2037 = vadd.f32 %v1993, %v2036
    %2038 = vdwg.mxu0
    %2042 = vrot.lane.b32.xlu0 %v2025, 96
    %v2043 = vpop.permute.xlu0 %2042
    %2044 = vrot.lane.b32.xlu0 %v2027, 96
    %v2045 = vpop.permute.xlu0 %2044
    %2046 = vrot.lane.b32.xlu0 %v2030, 96
    %v2047 = vpop.permute.xlu0 %2046
    %v2048 = vsel %vm292, %v2025, 0
    %v2050 = vsel %vm292, %v2027, 0
    %v2052 = vsel %vm292, %v2030, 0
    %v2054 = vsel %vm292, %v2043, 0
    %v2056 = vsel %vm292, %v2045, 0
    %v2058 = vsel %vm292, %v2047, 0
    %2060 = vmatpush.xpose.msra.mxu0 0.0
    %2061 = vmatpush.xpose.msra.mxu0 0.0
    %2062 = vmatpush.xpose.msra.mxu0 0.0
    %2063 = vmatpush.xpose.msra.mxu0 0.0
    %2064 = vmatpush.xpose.msra.mxu0 0.0
    %2065 = vmatpush.xpose.msra.mxu0 0.0
    %2066 = vmatpush.xpose.msra.mxu0 0.0
    %2067 = vmatpush.xpose.msra.mxu0 0.0
    %2068 = vmatpush.xpose.msra.mxu0 0.0
    %2069 = vmatpush.xpose.msra.mxu0 0.0
    %2070 = vmatpush.xpose.msra.mxu0 0.0
    %2071 = vmatpush.xpose.msra.mxu0 0.0
    %2072 = vmatpush.xpose.msra.mxu0 0.0
    %2073 = vmatpush.xpose.msra.mxu0 %v2058
    %2074 = vmatpush.xpose.msra.mxu0 %v2056
    %2075 = vmatpush.xpose.msra.mxu0 %v2054
    %2076 = vmatmul.f32.gmra.mxu0 %v2048
    %v2077 = vpop.f32.mrf.mxu0
    %v2078 = vadd.f32 0.0, %v2077
    %2079 = vmatmul.f32.gmra.mxu0 %v2050
    %v2080 = vpop.f32.mrf.mxu0
    %v2081 = vadd.f32 0.0, %v2080
    %2082 = vmatmul.f32.gmra.mxu0 %v2052
    %v2083 = vpop.f32.mrf.mxu0
    %v2084 = vadd.f32 0.0, %v2083
    %2085 = vdwg.mxu0
    %v2086 = vmul.f32 %v2078, 0.35355338
    %v2087 = vmul.f32 %v2081, 0.35355338
    %v2088 = vmul.f32 %v2084, 0.35355338
    %v2089 = vsel %vm334, %v2086, -inf
    %2090 = vmax.xlane.f32.xlu0 %v2089
    %v2091 = vpop.xlane.xlu0 %2090
    %v2092 = vsel %vm334, %v2087, -inf
    %2093 = vmax.xlane.f32.xlu0 %v2092
    %v2094 = vpop.xlane.xlu0 %2093
    %v2095 = vsel %vm334, %v2088, -inf
    %2096 = vmax.xlane.f32.xlu0 %v2095
    %v2097 = vpop.xlane.xlu0 %2096
    %v2098 = vsub.f32 %v2086, %v2091
    %v2099 = vsub.f32 %v2087, %v2094
    %v2100 = vsub.f32 %v2088, %v2097
    %v2101 = vmul.f32 %v2098, 1.442695
    %v2102 = vpow.pop %v2101
    %v2103 = vmul.f32 %v2099, 1.442695
    %v2104 = vpow.pop %v2103
    %v2105 = vmul.f32 %v2100, 1.442695
    %v2106 = vpow.pop %v2105
    %v2107 = vsel %vm334, %v2102, 0.0
    %2108 = vadd.xlane.f32.xlu0 %v2107
    %v2109 = vpop.xlane.xlu0 %2108
    %v2110 = vsel %vm334, %v2104, 0.0
    %2111 = vadd.xlane.f32.xlu0 %v2110
    %v2112 = vpop.xlane.xlu0 %2111
    %v2113 = vsel %vm334, %v2106, 0.0
    %2114 = vadd.xlane.f32.xlu0 %v2113
    %v2115 = vpop.xlane.xlu0 %2114
    %v2116 = vrcp.pop %v2109
    %v2117 = vrcp.pop %v2112
    %v2118 = vrcp.pop %v2115
    %v2119 = vmul.f32 %v2102, %v2116
    %v2120 = vmul.f32 %v2104, %v2117
    %v2121 = vmul.f32 %v2106, %v2118
    %2122 = vrot.lane.b32.xlu0 %v2025, 64
    %v2123 = vpop.permute.xlu0 %2122
    %2124 = vrot.lane.b32.xlu0 %v2027, 64
    %v2125 = vpop.permute.xlu0 %2124
    %2126 = vrot.lane.b32.xlu0 %v2030, 64
    %v2127 = vpop.permute.xlu0 %2126
    %v2132 = vsel %vm334, %v2119, 0
    %v2135 = vsel %vm334, %v2120, 0
    %v2138 = vsel %vm334, %v2121, 0
    %2140 = vmatpush.msra.mxu0 0.0
    %2141 = vmatpush.msra.mxu0 0.0
    %2142 = vmatpush.msra.mxu0 0.0
    %2143 = vmatpush.msra.mxu0 0.0
    %2144 = vmatpush.msra.mxu0 0.0
    %2145 = vmatpush.msra.mxu0 0.0
    %2146 = vmatpush.msra.mxu0 0.0
    %2147 = vmatpush.msra.mxu0 0.0
    %2148 = vmatpush.msra.mxu0 0.0
    %2149 = vmatpush.msra.mxu0 0.0
    %2150 = vmatpush.msra.mxu0 0.0
    %2151 = vmatpush.msra.mxu0 0.0
    %2152 = vmatpush.msra.mxu0 0.0
    %2153 = vmatpush.msra.mxu0 %v2127
    %2154 = vmatpush.msra.mxu0 %v2125
    %2155 = vmatpush.msra.mxu0 %v2123
    %2156 = vmatmul.f32.gmra.mxu0 %v2132
    %v2157 = vpop.f32.mrf.mxu0
    %v2158 = vadd.f32 0.0, %v2157
    %2159 = vmatmul.f32.gmra.mxu0 %v2135
    %v2160 = vpop.f32.mrf.mxu0
    %v2161 = vadd.f32 0.0, %v2160
    %2162 = vmatmul.f32.gmra.mxu0 %v2138
    %v2163 = vpop.f32.mrf.mxu0
    %v2164 = vadd.f32 0.0, %v2163
    %2165 = vdwg.mxu0
    %2166 = vrot.lane.b32.xlu0 %v2025, 120
    %v2167 = vpop.permute.xlu0 %2166
    %2168 = vrot.lane.b32.xlu0 %v2027, 120
    %v2169 = vpop.permute.xlu0 %2168
    %2170 = vrot.lane.b32.xlu0 %v2030, 120
    %v2171 = vpop.permute.xlu0 %2170
    %2172 = vrot.lane.b32.xlu0 %v2025, 88
    %v2173 = vpop.permute.xlu0 %2172
    %2174 = vrot.lane.b32.xlu0 %v2027, 88
    %v2175 = vpop.permute.xlu0 %2174
    %2176 = vrot.lane.b32.xlu0 %v2030, 88
    %v2177 = vpop.permute.xlu0 %2176
    %v2178 = vsel %vm292, %v2167, 0
    %v2180 = vsel %vm292, %v2169, 0
    %v2182 = vsel %vm292, %v2171, 0
    %v2184 = vsel %vm292, %v2173, 0
    %v2186 = vsel %vm292, %v2175, 0
    %v2188 = vsel %vm292, %v2177, 0
    %2190 = vmatpush.xpose.msra.mxu0 0.0
    %2191 = vmatpush.xpose.msra.mxu0 0.0
    %2192 = vmatpush.xpose.msra.mxu0 0.0
    %2193 = vmatpush.xpose.msra.mxu0 0.0
    %2194 = vmatpush.xpose.msra.mxu0 0.0
    %2195 = vmatpush.xpose.msra.mxu0 0.0
    %2196 = vmatpush.xpose.msra.mxu0 0.0
    %2197 = vmatpush.xpose.msra.mxu0 0.0
    %2198 = vmatpush.xpose.msra.mxu0 0.0
    %2199 = vmatpush.xpose.msra.mxu0 0.0
    %2200 = vmatpush.xpose.msra.mxu0 0.0
    %2201 = vmatpush.xpose.msra.mxu0 0.0
    %2202 = vmatpush.xpose.msra.mxu0 0.0
    %2203 = vmatpush.xpose.msra.mxu0 %v2188
    %2204 = vmatpush.xpose.msra.mxu0 %v2186
    %2205 = vmatpush.xpose.msra.mxu0 %v2184
    %2206 = vmatmul.f32.gmra.mxu0 %v2178
    %v2207 = vpop.f32.mrf.mxu0
    %v2208 = vadd.f32 0.0, %v2207
    %2209 = vmatmul.f32.gmra.mxu0 %v2180
    %v2210 = vpop.f32.mrf.mxu0
    %v2211 = vadd.f32 0.0, %v2210
    %2212 = vmatmul.f32.gmra.mxu0 %v2182
    %v2213 = vpop.f32.mrf.mxu0
    %v2214 = vadd.f32 0.0, %v2213
    %2215 = vdwg.mxu0
    %v2216 = vmul.f32 %v2208, 0.35355338
    %v2217 = vmul.f32 %v2211, 0.35355338
    %v2218 = vmul.f32 %v2214, 0.35355338
    %v2219 = vsel %vm334, %v2216, -inf
    %2220 = vmax.xlane.f32.xlu0 %v2219
    %v2221 = vpop.xlane.xlu0 %2220
    %v2222 = vsel %vm334, %v2217, -inf
    %2223 = vmax.xlane.f32.xlu0 %v2222
    %v2224 = vpop.xlane.xlu0 %2223
    %v2225 = vsel %vm334, %v2218, -inf
    %2226 = vmax.xlane.f32.xlu0 %v2225
    %v2227 = vpop.xlane.xlu0 %2226
    %v2228 = vsub.f32 %v2216, %v2221
    %v2229 = vsub.f32 %v2217, %v2224
    %v2230 = vsub.f32 %v2218, %v2227
    %v2231 = vmul.f32 %v2228, 1.442695
    %v2232 = vpow.pop %v2231
    %v2233 = vmul.f32 %v2229, 1.442695
    %v2234 = vpow.pop %v2233
    %v2235 = vmul.f32 %v2230, 1.442695
    %v2236 = vpow.pop %v2235
    %v2237 = vsel %vm334, %v2232, 0.0
    %2238 = vadd.xlane.f32.xlu0 %v2237
    %v2239 = vpop.xlane.xlu0 %2238
    %v2240 = vsel %vm334, %v2234, 0.0
    %2241 = vadd.xlane.f32.xlu0 %v2240
    %v2242 = vpop.xlane.xlu0 %2241
    %v2243 = vsel %vm334, %v2236, 0.0
    %2244 = vadd.xlane.f32.xlu0 %v2243
    %v2245 = vpop.xlane.xlu0 %2244
    %v2246 = vrcp.pop %v2239
    %v2247 = vrcp.pop %v2242
    %v2248 = vrcp.pop %v2245
    %v2249 = vmul.f32 %v2232, %v2246
    %v2250 = vmul.f32 %v2234, %v2247
    %v2251 = vmul.f32 %v2236, %v2248
    %2252 = vrot.lane.b32.xlu0 %v2025, 56
    %v2253 = vpop.permute.xlu0 %2252
    %2254 = vrot.lane.b32.xlu0 %v2027, 56
    %v2255 = vpop.permute.xlu0 %2254
    %2256 = vrot.lane.b32.xlu0 %v2030, 56
    %v2257 = vpop.permute.xlu0 %2256
    %v2262 = vsel %vm334, %v2249, 0
    %v2265 = vsel %vm334, %v2250, 0
    %v2268 = vsel %vm334, %v2251, 0
    %2270 = vmatpush.msra.mxu0 0.0
    %2271 = vmatpush.msra.mxu0 0.0
    %2272 = vmatpush.msra.mxu0 0.0
    %2273 = vmatpush.msra.mxu0 0.0
    %2274 = vmatpush.msra.mxu0 0.0
    %2275 = vmatpush.msra.mxu0 0.0
    %2276 = vmatpush.msra.mxu0 0.0
    %2277 = vmatpush.msra.mxu0 0.0
    %2278 = vmatpush.msra.mxu0 0.0
    %2279 = vmatpush.msra.mxu0 0.0
    %2280 = vmatpush.msra.mxu0 0.0
    %2281 = vmatpush.msra.mxu0 0.0
    %2282 = vmatpush.msra.mxu0 0.0
    %2283 = vmatpush.msra.mxu0 %v2257
    %2284 = vmatpush.msra.mxu0 %v2255
    %2285 = vmatpush.msra.mxu0 %v2253
    %2286 = vmatmul.f32.gmra.mxu0 %v2262
    %v2287 = vpop.f32.mrf.mxu0
    %v2288 = vadd.f32 0.0, %v2287
    %2289 = vmatmul.f32.gmra.mxu0 %v2265
    %v2290 = vpop.f32.mrf.mxu0
    %v2291 = vadd.f32 0.0, %v2290
    %2292 = vmatmul.f32.gmra.mxu0 %v2268
    %v2293 = vpop.f32.mrf.mxu0
    %v2294 = vadd.f32 0.0, %v2293
    %2295 = vdwg.mxu0
    %2296 = vrot.lane.b32.xlu0 %v2025, 112
    %v2297 = vpop.permute.xlu0 %2296
    %2298 = vrot.lane.b32.xlu0 %v2027, 112
    %v2299 = vpop.permute.xlu0 %2298
    %2300 = vrot.lane.b32.xlu0 %v2030, 112
    %v2301 = vpop.permute.xlu0 %2300
    %2302 = vrot.lane.b32.xlu0 %v2025, 80
    %v2303 = vpop.permute.xlu0 %2302
    %2304 = vrot.lane.b32.xlu0 %v2027, 80
    %v2305 = vpop.permute.xlu0 %2304
    %2306 = vrot.lane.b32.xlu0 %v2030, 80
    %v2307 = vpop.permute.xlu0 %2306
    %v2308 = vsel %vm292, %v2297, 0
    %v2310 = vsel %vm292, %v2299, 0
    %v2312 = vsel %vm292, %v2301, 0
    %v2314 = vsel %vm292, %v2303, 0
    %v2316 = vsel %vm292, %v2305, 0
    %v2318 = vsel %vm292, %v2307, 0
    %2320 = vmatpush.xpose.msra.mxu0 0.0
    %2321 = vmatpush.xpose.msra.mxu0 0.0
    %2322 = vmatpush.xpose.msra.mxu0 0.0
    %2323 = vmatpush.xpose.msra.mxu0 0.0
    %2324 = vmatpush.xpose.msra.mxu0 0.0
    %2325 = vmatpush.xpose.msra.mxu0 0.0
    %2326 = vmatpush.xpose.msra.mxu0 0.0
    %2327 = vmatpush.xpose.msra.mxu0 0.0
    %2328 = vmatpush.xpose.msra.mxu0 0.0
    %2329 = vmatpush.xpose.msra.mxu0 0.0
    %2330 = vmatpush.xpose.msra.mxu0 0.0
    %2331 = vmatpush.xpose.msra.mxu0 0.0
    %2332 = vmatpush.xpose.msra.mxu0 0.0
    %2333 = vmatpush.xpose.msra.mxu0 %v2318
    %2334 = vmatpush.xpose.msra.mxu0 %v2316
    %2335 = vmatpush.xpose.msra.mxu0 %v2314
    %2336 = vmatmul.f32.gmra.mxu0 %v2308
    %v2337 = vpop.f32.mrf.mxu0
    %v2338 = vadd.f32 0.0, %v2337
    %2339 = vmatmul.f32.gmra.mxu0 %v2310
    %v2340 = vpop.f32.mrf.mxu0
    %v2341 = vadd.f32 0.0, %v2340
    %2342 = vmatmul.f32.gmra.mxu0 %v2312
    %v2343 = vpop.f32.mrf.mxu0
    %v2344 = vadd.f32 0.0, %v2343
    %2345 = vdwg.mxu0
    %v2346 = vmul.f32 %v2338, 0.35355338
    %v2347 = vmul.f32 %v2341, 0.35355338
    %v2348 = vmul.f32 %v2344, 0.35355338
    %v2349 = vsel %vm334, %v2346, -inf
    %2350 = vmax.xlane.f32.xlu0 %v2349
    %v2351 = vpop.xlane.xlu0 %2350
    %v2352 = vsel %vm334, %v2347, -inf
    %2353 = vmax.xlane.f32.xlu0 %v2352
    %v2354 = vpop.xlane.xlu0 %2353
    %v2355 = vsel %vm334, %v2348, -inf
    %2356 = vmax.xlane.f32.xlu0 %v2355
    %v2357 = vpop.xlane.xlu0 %2356
    %v2358 = vsub.f32 %v2346, %v2351
    %v2359 = vsub.f32 %v2347, %v2354
    %v2360 = vsub.f32 %v2348, %v2357
    %v2361 = vmul.f32 %v2358, 1.442695
    %v2362 = vpow.pop %v2361
    %v2363 = vmul.f32 %v2359, 1.442695
    %v2364 = vpow.pop %v2363
    %v2365 = vmul.f32 %v2360, 1.442695
    %v2366 = vpow.pop %v2365
    %v2367 = vsel %vm334, %v2362, 0.0
    %2368 = vadd.xlane.f32.xlu0 %v2367
    %v2369 = vpop.xlane.xlu0 %2368
    %v2370 = vsel %vm334, %v2364, 0.0
    %2371 = vadd.xlane.f32.xlu0 %v2370
    %v2372 = vpop.xlane.xlu0 %2371
    %v2373 = vsel %vm334, %v2366, 0.0
    %2374 = vadd.xlane.f32.xlu0 %v2373
    %v2375 = vpop.xlane.xlu0 %2374
    %v2376 = vrcp.pop %v2369
    %v2377 = vrcp.pop %v2372
    %v2378 = vrcp.pop %v2375
    %v2379 = vmul.f32 %v2362, %v2376
    %v2380 = vmul.f32 %v2364, %v2377
    %v2381 = vmul.f32 %v2366, %v2378
    %2382 = vrot.lane.b32.xlu0 %v2025, 48
    %v2383 = vpop.permute.xlu0 %2382
    %2384 = vrot.lane.b32.xlu0 %v2027, 48
    %v2385 = vpop.permute.xlu0 %2384
    %2386 = vrot.lane.b32.xlu0 %v2030, 48
    %v2387 = vpop.permute.xlu0 %2386
    %v2392 = vsel %vm334, %v2379, 0
    %v2395 = vsel %vm334, %v2380, 0
    %v2398 = vsel %vm334, %v2381, 0
    %2400 = vmatpush.msra.mxu0 0.0
    %2401 = vmatpush.msra.mxu0 0.0
    %2402 = vmatpush.msra.mxu0 0.0
    %2403 = vmatpush.msra.mxu0 0.0
    %2404 = vmatpush.msra.mxu0 0.0
    %2405 = vmatpush.msra.mxu0 0.0
    %2406 = vmatpush.msra.mxu0 0.0
    %2407 = vmatpush.msra.mxu0 0.0
    %2408 = vmatpush.msra.mxu0 0.0
    %2409 = vmatpush.msra.mxu0 0.0
    %2410 = vmatpush.msra.mxu0 0.0
    %2411 = vmatpush.msra.mxu0 0.0
    %2412 = vmatpush.msra.mxu0 0.0
    %2413 = vmatpush.msra.mxu0 %v2387
    %2414 = vmatpush.msra.mxu0 %v2385
    %2415 = vmatpush.msra.mxu0 %v2383
    %2416 = vmatmul.f32.gmra.mxu0 %v2392
    %v2417 = vpop.f32.mrf.mxu0
    %v2418 = vadd.f32 0.0, %v2417
    %2419 = vmatmul.f32.gmra.mxu0 %v2395
    %v2420 = vpop.f32.mrf.mxu0
    %v2421 = vadd.f32 0.0, %v2420
    %2422 = vmatmul.f32.gmra.mxu0 %v2398
    %v2423 = vpop.f32.mrf.mxu0
    %v2424 = vadd.f32 0.0, %v2423
    %2425 = vdwg.mxu0
    %2426 = vrot.lane.b32.xlu0 %v2025, 104
    %v2427 = vpop.permute.xlu0 %2426
    %2428 = vrot.lane.b32.xlu0 %v2027, 104
    %v2429 = vpop.permute.xlu0 %2428
    %2430 = vrot.lane.b32.xlu0 %v2030, 104
    %v2431 = vpop.permute.xlu0 %2430
    %2432 = vrot.lane.b32.xlu0 %v2025, 72
    %v2433 = vpop.permute.xlu0 %2432
    %2434 = vrot.lane.b32.xlu0 %v2027, 72
    %v2435 = vpop.permute.xlu0 %2434
    %2436 = vrot.lane.b32.xlu0 %v2030, 72
    %v2437 = vpop.permute.xlu0 %2436
    %v2438 = vsel %vm292, %v2427, 0
    %v2440 = vsel %vm292, %v2429, 0
    %v2442 = vsel %vm292, %v2431, 0
    %v2444 = vsel %vm292, %v2433, 0
    %v2446 = vsel %vm292, %v2435, 0
    %v2448 = vsel %vm292, %v2437, 0
    %2450 = vmatpush.xpose.msra.mxu0 0.0
    %2451 = vmatpush.xpose.msra.mxu0 0.0
    %2452 = vmatpush.xpose.msra.mxu0 0.0
    %2453 = vmatpush.xpose.msra.mxu0 0.0
    %2454 = vmatpush.xpose.msra.mxu0 0.0
    %2455 = vmatpush.xpose.msra.mxu0 0.0
    %2456 = vmatpush.xpose.msra.mxu0 0.0
    %2457 = vmatpush.xpose.msra.mxu0 0.0
    %2458 = vmatpush.xpose.msra.mxu0 0.0
    %2459 = vmatpush.xpose.msra.mxu0 0.0
    %2460 = vmatpush.xpose.msra.mxu0 0.0
    %2461 = vmatpush.xpose.msra.mxu0 0.0
    %2462 = vmatpush.xpose.msra.mxu0 0.0
    %2463 = vmatpush.xpose.msra.mxu0 %v2448
    %2464 = vmatpush.xpose.msra.mxu0 %v2446
    %2465 = vmatpush.xpose.msra.mxu0 %v2444
    %2466 = vmatmul.f32.gmra.mxu0 %v2438
    %v2467 = vpop.f32.mrf.mxu0
    %v2468 = vadd.f32 0.0, %v2467
    %2469 = vmatmul.f32.gmra.mxu0 %v2440
    %v2470 = vpop.f32.mrf.mxu0
    %v2471 = vadd.f32 0.0, %v2470
    %2472 = vmatmul.f32.gmra.mxu0 %v2442
    %v2473 = vpop.f32.mrf.mxu0
    %v2474 = vadd.f32 0.0, %v2473
    %2475 = vdwg.mxu0
    %v2476 = vmul.f32 %v2468, 0.35355338
    %v2477 = vmul.f32 %v2471, 0.35355338
    %v2478 = vmul.f32 %v2474, 0.35355338
    %v2479 = vsel %vm334, %v2476, -inf
    %2480 = vmax.xlane.f32.xlu0 %v2479
    %v2481 = vpop.xlane.xlu0 %2480
    %v2482 = vsel %vm334, %v2477, -inf
    %2483 = vmax.xlane.f32.xlu0 %v2482
    %v2484 = vpop.xlane.xlu0 %2483
    %v2485 = vsel %vm334, %v2478, -inf
    %2486 = vmax.xlane.f32.xlu0 %v2485
    %v2487 = vpop.xlane.xlu0 %2486
    %v2488 = vsub.f32 %v2476, %v2481
    %v2489 = vsub.f32 %v2477, %v2484
    %v2490 = vsub.f32 %v2478, %v2487
    %v2491 = vmul.f32 %v2488, 1.442695
    %v2492 = vpow.pop %v2491
    %v2493 = vmul.f32 %v2489, 1.442695
    %v2494 = vpow.pop %v2493
    %v2495 = vmul.f32 %v2490, 1.442695
    %v2496 = vpow.pop %v2495
    %v2497 = vsel %vm334, %v2492, 0.0
    %2498 = vadd.xlane.f32.xlu0 %v2497
    %v2499 = vpop.xlane.xlu0 %2498
    %v2500 = vsel %vm334, %v2494, 0.0
    %2501 = vadd.xlane.f32.xlu0 %v2500
    %v2502 = vpop.xlane.xlu0 %2501
    %v2503 = vsel %vm334, %v2496, 0.0
    %2504 = vadd.xlane.f32.xlu0 %v2503
    %v2505 = vpop.xlane.xlu0 %2504
    %v2506 = vrcp.pop %v2499
    %v2507 = vrcp.pop %v2502
    %v2508 = vrcp.pop %v2505
    %v2509 = vmul.f32 %v2492, %v2506
    %v2510 = vmul.f32 %v2494, %v2507
    %v2511 = vmul.f32 %v2496, %v2508
    %2512 = vrot.lane.b32.xlu0 %v2025, 40
    %v2513 = vpop.permute.xlu0 %2512
    %2514 = vrot.lane.b32.xlu0 %v2027, 40
    %v2515 = vpop.permute.xlu0 %2514
    %2516 = vrot.lane.b32.xlu0 %v2030, 40
    %v2517 = vpop.permute.xlu0 %2516
    %v2522 = vsel %vm334, %v2509, 0
    %v2525 = vsel %vm334, %v2510, 0
    %v2528 = vsel %vm334, %v2511, 0
    %2530 = vmatpush.msra.mxu0 0.0
    %2531 = vmatpush.msra.mxu0 0.0
    %2532 = vmatpush.msra.mxu0 0.0
    %2533 = vmatpush.msra.mxu0 0.0
    %2534 = vmatpush.msra.mxu0 0.0
    %2535 = vmatpush.msra.mxu0 0.0
    %2536 = vmatpush.msra.mxu0 0.0
    %2537 = vmatpush.msra.mxu0 0.0
    %2538 = vmatpush.msra.mxu0 0.0
    %2539 = vmatpush.msra.mxu0 0.0
    %2540 = vmatpush.msra.mxu0 0.0
    %2541 = vmatpush.msra.mxu0 0.0
    %2542 = vmatpush.msra.mxu0 0.0
    %2543 = vmatpush.msra.mxu0 %v2517
    %2544 = vmatpush.msra.mxu0 %v2515
    %2545 = vmatpush.msra.mxu0 %v2513
    %2546 = vmatmul.f32.gmra.mxu0 %v2522
    %v2547 = vpop.f32.mrf.mxu0
    %v2548 = vadd.f32 0.0, %v2547
    %2549 = vmatmul.f32.gmra.mxu0 %v2525
    %v2550 = vpop.f32.mrf.mxu0
    %v2551 = vadd.f32 0.0, %v2550
    %2552 = vmatmul.f32.gmra.mxu0 %v2528
    %v2553 = vpop.f32.mrf.mxu0
    %v2554 = vadd.f32 0.0, %v2553
    %2555 = vdwg.mxu0
    %2559 = vrot.lane.b32.xlu0 %v2288, 8
    %v2560 = vpop.permute.xlu0 %2559
    %2561 = vrot.lane.b32.xlu0 %v2291, 8
    %v2562 = vpop.permute.xlu0 %2561
    %2563 = vrot.lane.b32.xlu0 %v2294, 8
    %v2564 = vpop.permute.xlu0 %2563
    %2571 = vrot.lane.b32.xlu0 %v2418, 16
    %v2572 = vpop.permute.xlu0 %2571
    %2573 = vrot.lane.b32.xlu0 %v2421, 16
    %v2574 = vpop.permute.xlu0 %2573
    %2575 = vrot.lane.b32.xlu0 %v2424, 16
    %v2576 = vpop.permute.xlu0 %2575
    %2583 = vrot.lane.b32.xlu0 %v2548, 24
    %v2584 = vpop.permute.xlu0 %2583
    %2585 = vrot.lane.b32.xlu0 %v2551, 24
    %v2586 = vpop.permute.xlu0 %2585
    %2587 = vrot.lane.b32.xlu0 %v2554, 24
    %v2588 = vpop.permute.xlu0 %2587
    %v2592 = vsel %vm292, %v2158, %v2560
    %v2593 = vsel %vm292, %v2161, %v2562
    %v2594 = vsel %vm292, %v2164, %v2564
    %v2595 = vsel %vm841, %v2592, %v2572
    %v2596 = vsel %vm841, %v2593, %v2574
    %v2597 = vsel %vm841, %v2594, %v2576
    %v2598 = vsel %vm334, %v2595, %v2584
    %v2599 = vsel %vm334, %v2596, %v2586
    %v2600 = vsel %vm334, %v2597, %v2588
    %2604 = vrot.lane.b32.xlu0 %v2032, 96
    %v2605 = vpop.permute.xlu0 %2604
    %2606 = vrot.lane.b32.xlu0 %v2035, 96
    %v2607 = vpop.permute.xlu0 %2606
    %2608 = vrot.lane.b32.xlu0 %v2037, 96
    %v2609 = vpop.permute.xlu0 %2608
    %v2610 = vsel %vm292, %v2032, 0
    %v2612 = vsel %vm292, %v2035, 0
    %v2614 = vsel %vm292, %v2037, 0
    %v2616 = vsel %vm292, %v2605, 0
    %v2618 = vsel %vm292, %v2607, 0
    %v2620 = vsel %vm292, %v2609, 0
    %2622 = vmatpush.xpose.msra.mxu0 0.0
    %2623 = vmatpush.xpose.msra.mxu0 0.0
    %2624 = vmatpush.xpose.msra.mxu0 0.0
    %2625 = vmatpush.xpose.msra.mxu0 0.0
    %2626 = vmatpush.xpose.msra.mxu0 0.0
    %2627 = vmatpush.xpose.msra.mxu0 0.0
    %2628 = vmatpush.xpose.msra.mxu0 0.0
    %2629 = vmatpush.xpose.msra.mxu0 0.0
    %2630 = vmatpush.xpose.msra.mxu0 0.0
    %2631 = vmatpush.xpose.msra.mxu0 0.0
    %2632 = vmatpush.xpose.msra.mxu0 0.0
    %2633 = vmatpush.xpose.msra.mxu0 0.0
    %2634 = vmatpush.xpose.msra.mxu0 0.0
    %2635 = vmatpush.xpose.msra.mxu0 %v2620
    %2636 = vmatpush.xpose.msra.mxu0 %v2618
    %2637 = vmatpush.xpose.msra.mxu0 %v2616
    %2638 = vmatmul.f32.gmra.mxu0 %v2610
    %v2639 = vpop.f32.mrf.mxu0
    %v2640 = vadd.f32 0.0, %v2639
    %2641 = vmatmul.f32.gmra.mxu0 %v2612
    %v2642 = vpop.f32.mrf.mxu0
    %v2643 = vadd.f32 0.0, %v2642
    %2644 = vmatmul.f32.gmra.mxu0 %v2614
    %v2645 = vpop.f32.mrf.mxu0
    %v2646 = vadd.f32 0.0, %v2645
    %2647 = vdwg.mxu0
    %v2648 = vmul.f32 %v2640, 0.35355338
    %v2649 = vmul.f32 %v2643, 0.35355338
    %v2650 = vmul.f32 %v2646, 0.35355338
    %v2651 = vsel %vm334, %v2648, -inf
    %2652 = vmax.xlane.f32.xlu0 %v2651
    %v2653 = vpop.xlane.xlu0 %2652
    %v2654 = vsel %vm334, %v2649, -inf
    %2655 = vmax.xlane.f32.xlu0 %v2654
    %v2656 = vpop.xlane.xlu0 %2655
    %v2657 = vsel %vm334, %v2650, -inf
    %2658 = vmax.xlane.f32.xlu0 %v2657
    %v2659 = vpop.xlane.xlu0 %2658
    %v2660 = vsub.f32 %v2648, %v2653
    %v2661 = vsub.f32 %v2649, %v2656
    %v2662 = vsub.f32 %v2650, %v2659
    %v2663 = vmul.f32 %v2660, 1.442695
    %v2664 = vpow.pop %v2663
    %v2665 = vmul.f32 %v2661, 1.442695
    %v2666 = vpow.pop %v2665
    %v2667 = vmul.f32 %v2662, 1.442695
    %v2668 = vpow.pop %v2667
    %v2669 = vsel %vm334, %v2664, 0.0
    %2670 = vadd.xlane.f32.xlu0 %v2669
    %v2671 = vpop.xlane.xlu0 %2670
    %v2672 = vsel %vm334, %v2666, 0.0
    %2673 = vadd.xlane.f32.xlu0 %v2672
    %v2674 = vpop.xlane.xlu0 %2673
    %v2675 = vsel %vm334, %v2668, 0.0
    %2676 = vadd.xlane.f32.xlu0 %v2675
    %v2677 = vpop.xlane.xlu0 %2676
    %v2678 = vrcp.pop %v2671
    %v2679 = vrcp.pop %v2674
    %v2680 = vrcp.pop %v2677
    %v2681 = vmul.f32 %v2664, %v2678
    %v2682 = vmul.f32 %v2666, %v2679
    %v2683 = vmul.f32 %v2668, %v2680
    %2684 = vrot.lane.b32.xlu0 %v2032, 64
    %v2685 = vpop.permute.xlu0 %2684
    %2686 = vrot.lane.b32.xlu0 %v2035, 64
    %v2687 = vpop.permute.xlu0 %2686
    %2688 = vrot.lane.b32.xlu0 %v2037, 64
    %v2689 = vpop.permute.xlu0 %2688
    %v2694 = vsel %vm334, %v2681, 0
    %v2697 = vsel %vm334, %v2682, 0
    %v2700 = vsel %vm334, %v2683, 0
    %2702 = vmatpush.msra.mxu0 0.0
    %2703 = vmatpush.msra.mxu0 0.0
    %2704 = vmatpush.msra.mxu0 0.0
    %2705 = vmatpush.msra.mxu0 0.0
    %2706 = vmatpush.msra.mxu0 0.0
    %2707 = vmatpush.msra.mxu0 0.0
    %2708 = vmatpush.msra.mxu0 0.0
    %2709 = vmatpush.msra.mxu0 0.0
    %2710 = vmatpush.msra.mxu0 0.0
    %2711 = vmatpush.msra.mxu0 0.0
    %2712 = vmatpush.msra.mxu0 0.0
    %2713 = vmatpush.msra.mxu0 0.0
    %2714 = vmatpush.msra.mxu0 0.0
    %2715 = vmatpush.msra.mxu0 %v2689
    %2716 = vmatpush.msra.mxu0 %v2687
    %2717 = vmatpush.msra.mxu0 %v2685
    %2718 = vmatmul.f32.gmra.mxu0 %v2694
    %v2719 = vpop.f32.mrf.mxu0
    %v2720 = vadd.f32 0.0, %v2719
    %2721 = vmatmul.f32.gmra.mxu0 %v2697
    %v2722 = vpop.f32.mrf.mxu0
    %v2723 = vadd.f32 0.0, %v2722
    %2724 = vmatmul.f32.gmra.mxu0 %v2700
    %v2725 = vpop.f32.mrf.mxu0
    %v2726 = vadd.f32 0.0, %v2725
    %2727 = vdwg.mxu0
    %2728 = vrot.lane.b32.xlu0 %v2032, 120
    %v2729 = vpop.permute.xlu0 %2728
    %2730 = vrot.lane.b32.xlu0 %v2035, 120
    %v2731 = vpop.permute.xlu0 %2730
    %2732 = vrot.lane.b32.xlu0 %v2037, 120
    %v2733 = vpop.permute.xlu0 %2732
    %2734 = vrot.lane.b32.xlu0 %v2032, 88
    %v2735 = vpop.permute.xlu0 %2734
    %2736 = vrot.lane.b32.xlu0 %v2035, 88
    %v2737 = vpop.permute.xlu0 %2736
    %2738 = vrot.lane.b32.xlu0 %v2037, 88
    %v2739 = vpop.permute.xlu0 %2738
    %v2740 = vsel %vm292, %v2729, 0
    %v2742 = vsel %vm292, %v2731, 0
    %v2744 = vsel %vm292, %v2733, 0
    %v2746 = vsel %vm292, %v2735, 0
    %v2748 = vsel %vm292, %v2737, 0
    %v2750 = vsel %vm292, %v2739, 0
    %2752 = vmatpush.xpose.msra.mxu0 0.0
    %2753 = vmatpush.xpose.msra.mxu0 0.0
    %2754 = vmatpush.xpose.msra.mxu0 0.0
    %2755 = vmatpush.xpose.msra.mxu0 0.0
    %2756 = vmatpush.xpose.msra.mxu0 0.0
    %2757 = vmatpush.xpose.msra.mxu0 0.0
    %2758 = vmatpush.xpose.msra.mxu0 0.0
    %2759 = vmatpush.xpose.msra.mxu0 0.0
    %2760 = vmatpush.xpose.msra.mxu0 0.0
    %2761 = vmatpush.xpose.msra.mxu0 0.0
    %2762 = vmatpush.xpose.msra.mxu0 0.0
    %2763 = vmatpush.xpose.msra.mxu0 0.0
    %2764 = vmatpush.xpose.msra.mxu0 0.0
    %2765 = vmatpush.xpose.msra.mxu0 %v2750
    %2766 = vmatpush.xpose.msra.mxu0 %v2748
    %2767 = vmatpush.xpose.msra.mxu0 %v2746
    %2768 = vmatmul.f32.gmra.mxu0 %v2740
    %v2769 = vpop.f32.mrf.mxu0
    %v2770 = vadd.f32 0.0, %v2769
    %2771 = vmatmul.f32.gmra.mxu0 %v2742
    %v2772 = vpop.f32.mrf.mxu0
    %v2773 = vadd.f32 0.0, %v2772
    %2774 = vmatmul.f32.gmra.mxu0 %v2744
    %v2775 = vpop.f32.mrf.mxu0
    %v2776 = vadd.f32 0.0, %v2775
    %2777 = vdwg.mxu0
    %v2778 = vmul.f32 %v2770, 0.35355338
    %v2779 = vmul.f32 %v2773, 0.35355338
    %v2780 = vmul.f32 %v2776, 0.35355338
    %v2781 = vsel %vm334, %v2778, -inf
    %2782 = vmax.xlane.f32.xlu0 %v2781
    %v2783 = vpop.xlane.xlu0 %2782
    %v2784 = vsel %vm334, %v2779, -inf
    %2785 = vmax.xlane.f32.xlu0 %v2784
    %v2786 = vpop.xlane.xlu0 %2785
    %v2787 = vsel %vm334, %v2780, -inf
    %2788 = vmax.xlane.f32.xlu0 %v2787
    %v2789 = vpop.xlane.xlu0 %2788
    %v2790 = vsub.f32 %v2778, %v2783
    %v2791 = vsub.f32 %v2779, %v2786
    %v2792 = vsub.f32 %v2780, %v2789
    %v2793 = vmul.f32 %v2790, 1.442695
    %v2794 = vpow.pop %v2793
    %v2795 = vmul.f32 %v2791, 1.442695
    %v2796 = vpow.pop %v2795
    %v2797 = vmul.f32 %v2792, 1.442695
    %v2798 = vpow.pop %v2797
    %v2799 = vsel %vm334, %v2794, 0.0
    %2800 = vadd.xlane.f32.xlu0 %v2799
    %v2801 = vpop.xlane.xlu0 %2800
    %v2802 = vsel %vm334, %v2796, 0.0
    %2803 = vadd.xlane.f32.xlu0 %v2802
    %v2804 = vpop.xlane.xlu0 %2803
    %v2805 = vsel %vm334, %v2798, 0.0
    %2806 = vadd.xlane.f32.xlu0 %v2805
    %v2807 = vpop.xlane.xlu0 %2806
    %v2808 = vrcp.pop %v2801
    %v2809 = vrcp.pop %v2804
    %v2810 = vrcp.pop %v2807
    %v2811 = vmul.f32 %v2794, %v2808
    %v2812 = vmul.f32 %v2796, %v2809
    %v2813 = vmul.f32 %v2798, %v2810
    %2814 = vrot.lane.b32.xlu0 %v2032, 56
    %v2815 = vpop.permute.xlu0 %2814
    %2816 = vrot.lane.b32.xlu0 %v2035, 56
    %v2817 = vpop.permute.xlu0 %2816
    %2818 = vrot.lane.b32.xlu0 %v2037, 56
    %v2819 = vpop.permute.xlu0 %2818
    %v2824 = vsel %vm334, %v2811, 0
    %v2827 = vsel %vm334, %v2812, 0
    %v2830 = vsel %vm334, %v2813, 0
    %2832 = vmatpush.msra.mxu0 0.0
    %2833 = vmatpush.msra.mxu0 0.0
    %2834 = vmatpush.msra.mxu0 0.0
    %2835 = vmatpush.msra.mxu0 0.0
    %2836 = vmatpush.msra.mxu0 0.0
    %2837 = vmatpush.msra.mxu0 0.0
    %2838 = vmatpush.msra.mxu0 0.0
    %2839 = vmatpush.msra.mxu0 0.0
    %2840 = vmatpush.msra.mxu0 0.0
    %2841 = vmatpush.msra.mxu0 0.0
    %2842 = vmatpush.msra.mxu0 0.0
    %2843 = vmatpush.msra.mxu0 0.0
    %2844 = vmatpush.msra.mxu0 0.0
    %2845 = vmatpush.msra.mxu0 %v2819
    %2846 = vmatpush.msra.mxu0 %v2817
    %2847 = vmatpush.msra.mxu0 %v2815
    %2848 = vmatmul.f32.gmra.mxu0 %v2824
    %v2849 = vpop.f32.mrf.mxu0
    %v2850 = vadd.f32 0.0, %v2849
    %2851 = vmatmul.f32.gmra.mxu0 %v2827
    %v2852 = vpop.f32.mrf.mxu0
    %v2853 = vadd.f32 0.0, %v2852
    %2854 = vmatmul.f32.gmra.mxu0 %v2830
    %v2855 = vpop.f32.mrf.mxu0
    %v2856 = vadd.f32 0.0, %v2855
    %2857 = vdwg.mxu0
    %2858 = vrot.lane.b32.xlu0 %v2032, 112
    %v2859 = vpop.permute.xlu0 %2858
    %2860 = vrot.lane.b32.xlu0 %v2035, 112
    %v2861 = vpop.permute.xlu0 %2860
    %2862 = vrot.lane.b32.xlu0 %v2037, 112
    %v2863 = vpop.permute.xlu0 %2862
    %2864 = vrot.lane.b32.xlu0 %v2032, 80
    %v2865 = vpop.permute.xlu0 %2864
    %2866 = vrot.lane.b32.xlu0 %v2035, 80
    %v2867 = vpop.permute.xlu0 %2866
    %2868 = vrot.lane.b32.xlu0 %v2037, 80
    %v2869 = vpop.permute.xlu0 %2868
    %v2870 = vsel %vm292, %v2859, 0
    %v2872 = vsel %vm292, %v2861, 0
    %v2874 = vsel %vm292, %v2863, 0
    %v2876 = vsel %vm292, %v2865, 0
    %v2878 = vsel %vm292, %v2867, 0
    %v2880 = vsel %vm292, %v2869, 0
    %2882 = vmatpush.xpose.msra.mxu0 0.0
    %2883 = vmatpush.xpose.msra.mxu0 0.0
    %2884 = vmatpush.xpose.msra.mxu0 0.0
    %2885 = vmatpush.xpose.msra.mxu0 0.0
    %2886 = vmatpush.xpose.msra.mxu0 0.0
    %2887 = vmatpush.xpose.msra.mxu0 0.0
    %2888 = vmatpush.xpose.msra.mxu0 0.0
    %2889 = vmatpush.xpose.msra.mxu0 0.0
    %2890 = vmatpush.xpose.msra.mxu0 0.0
    %2891 = vmatpush.xpose.msra.mxu0 0.0
    %2892 = vmatpush.xpose.msra.mxu0 0.0
    %2893 = vmatpush.xpose.msra.mxu0 0.0
    %2894 = vmatpush.xpose.msra.mxu0 0.0
    %2895 = vmatpush.xpose.msra.mxu0 %v2880
    %2896 = vmatpush.xpose.msra.mxu0 %v2878
    %2897 = vmatpush.xpose.msra.mxu0 %v2876
    %2898 = vmatmul.f32.gmra.mxu0 %v2870
    %v2899 = vpop.f32.mrf.mxu0
    %v2900 = vadd.f32 0.0, %v2899
    %2901 = vmatmul.f32.gmra.mxu0 %v2872
    %v2902 = vpop.f32.mrf.mxu0
    %v2903 = vadd.f32 0.0, %v2902
    %2904 = vmatmul.f32.gmra.mxu0 %v2874
    %v2905 = vpop.f32.mrf.mxu0
    %v2906 = vadd.f32 0.0, %v2905
    %2907 = vdwg.mxu0
    %v2908 = vmul.f32 %v2900, 0.35355338
    %v2909 = vmul.f32 %v2903, 0.35355338
    %v2910 = vmul.f32 %v2906, 0.35355338
    %v2911 = vsel %vm334, %v2908, -inf
    %2912 = vmax.xlane.f32.xlu0 %v2911
    %v2913 = vpop.xlane.xlu0 %2912
    %v2914 = vsel %vm334, %v2909, -inf
    %2915 = vmax.xlane.f32.xlu0 %v2914
    %v2916 = vpop.xlane.xlu0 %2915
    %v2917 = vsel %vm334, %v2910, -inf
    %2918 = vmax.xlane.f32.xlu0 %v2917
    %v2919 = vpop.xlane.xlu0 %2918
    %v2920 = vsub.f32 %v2908, %v2913
    %v2921 = vsub.f32 %v2909, %v2916
    %v2922 = vsub.f32 %v2910, %v2919
    %v2923 = vmul.f32 %v2920, 1.442695
    %v2924 = vpow.pop %v2923
    %v2925 = vmul.f32 %v2921, 1.442695
    %v2926 = vpow.pop %v2925
    %v2927 = vmul.f32 %v2922, 1.442695
    %v2928 = vpow.pop %v2927
    %v2929 = vsel %vm334, %v2924, 0.0
    %2930 = vadd.xlane.f32.xlu0 %v2929
    %v2931 = vpop.xlane.xlu0 %2930
    %v2932 = vsel %vm334, %v2926, 0.0
    %2933 = vadd.xlane.f32.xlu0 %v2932
    %v2934 = vpop.xlane.xlu0 %2933
    %v2935 = vsel %vm334, %v2928, 0.0
    %2936 = vadd.xlane.f32.xlu0 %v2935
    %v2937 = vpop.xlane.xlu0 %2936
    %v2938 = vrcp.pop %v2931
    %v2939 = vrcp.pop %v2934
    %v2940 = vrcp.pop %v2937
    %v2941 = vmul.f32 %v2924, %v2938
    %v2942 = vmul.f32 %v2926, %v2939
    %v2943 = vmul.f32 %v2928, %v2940
    %2944 = vrot.lane.b32.xlu0 %v2032, 48
    %v2945 = vpop.permute.xlu0 %2944
    %2946 = vrot.lane.b32.xlu0 %v2035, 48
    %v2947 = vpop.permute.xlu0 %2946
    %2948 = vrot.lane.b32.xlu0 %v2037, 48
    %v2949 = vpop.permute.xlu0 %2948
    %v2954 = vsel %vm334, %v2941, 0
    %v2957 = vsel %vm334, %v2942, 0
    %v2960 = vsel %vm334, %v2943, 0
    %2962 = vmatpush.msra.mxu0 0.0
    %2963 = vmatpush.msra.mxu0 0.0
    %2964 = vmatpush.msra.mxu0 0.0
    %2965 = vmatpush.msra.mxu0 0.0
    %2966 = vmatpush.msra.mxu0 0.0
    %2967 = vmatpush.msra.mxu0 0.0
    %2968 = vmatpush.msra.mxu0 0.0
    %2969 = vmatpush.msra.mxu0 0.0
    %2970 = vmatpush.msra.mxu0 0.0
    %2971 = vmatpush.msra.mxu0 0.0
    %2972 = vmatpush.msra.mxu0 0.0
    %2973 = vmatpush.msra.mxu0 0.0
    %2974 = vmatpush.msra.mxu0 0.0
    %2975 = vmatpush.msra.mxu0 %v2949
    %2976 = vmatpush.msra.mxu0 %v2947
    %2977 = vmatpush.msra.mxu0 %v2945
    %2978 = vmatmul.f32.gmra.mxu0 %v2954
    %v2979 = vpop.f32.mrf.mxu0
    %v2980 = vadd.f32 0.0, %v2979
    %2981 = vmatmul.f32.gmra.mxu0 %v2957
    %v2982 = vpop.f32.mrf.mxu0
    %v2983 = vadd.f32 0.0, %v2982
    %2984 = vmatmul.f32.gmra.mxu0 %v2960
    %v2985 = vpop.f32.mrf.mxu0
    %v2986 = vadd.f32 0.0, %v2985
    %2987 = vdwg.mxu0
    %2988 = vrot.lane.b32.xlu0 %v2032, 104
    %v2989 = vpop.permute.xlu0 %2988
    %2990 = vrot.lane.b32.xlu0 %v2035, 104
    %v2991 = vpop.permute.xlu0 %2990
    %2992 = vrot.lane.b32.xlu0 %v2037, 104
    %v2993 = vpop.permute.xlu0 %2992
    %2994 = vrot.lane.b32.xlu0 %v2032, 72
    %v2995 = vpop.permute.xlu0 %2994
    %2996 = vrot.lane.b32.xlu0 %v2035, 72
    %v2997 = vpop.permute.xlu0 %2996
    %2998 = vrot.lane.b32.xlu0 %v2037, 72
    %v2999 = vpop.permute.xlu0 %2998
    %v3000 = vsel %vm292, %v2989, 0
    %v3002 = vsel %vm292, %v2991, 0
    %v3004 = vsel %vm292, %v2993, 0
    %v3006 = vsel %vm292, %v2995, 0
    %v3008 = vsel %vm292, %v2997, 0
    %v3010 = vsel %vm292, %v2999, 0
    %3012 = vmatpush.xpose.msra.mxu0 0.0
    %3013 = vmatpush.xpose.msra.mxu0 0.0
    %3014 = vmatpush.xpose.msra.mxu0 0.0
    %3015 = vmatpush.xpose.msra.mxu0 0.0
    %3016 = vmatpush.xpose.msra.mxu0 0.0
    %3017 = vmatpush.xpose.msra.mxu0 0.0
    %3018 = vmatpush.xpose.msra.mxu0 0.0
    %3019 = vmatpush.xpose.msra.mxu0 0.0
    %3020 = vmatpush.xpose.msra.mxu0 0.0
    %3021 = vmatpush.xpose.msra.mxu0 0.0
    %3022 = vmatpush.xpose.msra.mxu0 0.0
    %3023 = vmatpush.xpose.msra.mxu0 0.0
    %3024 = vmatpush.xpose.msra.mxu0 0.0
    %3025 = vmatpush.xpose.msra.mxu0 %v3010
    %3026 = vmatpush.xpose.msra.mxu0 %v3008
    %3027 = vmatpush.xpose.msra.mxu0 %v3006
    %3028 = vmatmul.f32.gmra.mxu0 %v3000
    %v3029 = vpop.f32.mrf.mxu0
    %v3030 = vadd.f32 0.0, %v3029
    %3031 = vmatmul.f32.gmra.mxu0 %v3002
    %v3032 = vpop.f32.mrf.mxu0
    %v3033 = vadd.f32 0.0, %v3032
    %3034 = vmatmul.f32.gmra.mxu0 %v3004
    %v3035 = vpop.f32.mrf.mxu0
    %v3036 = vadd.f32 0.0, %v3035
    %3037 = vdwg.mxu0
    %v3038 = vmul.f32 %v3030, 0.35355338
    %v3039 = vmul.f32 %v3033, 0.35355338
    %v3040 = vmul.f32 %v3036, 0.35355338
    %v3041 = vsel %vm334, %v3038, -inf
    %3042 = vmax.xlane.f32.xlu0 %v3041
    %v3043 = vpop.xlane.xlu0 %3042
    %v3044 = vsel %vm334, %v3039, -inf
    %3045 = vmax.xlane.f32.xlu0 %v3044
    %v3046 = vpop.xlane.xlu0 %3045
    %v3047 = vsel %vm334, %v3040, -inf
    %3048 = vmax.xlane.f32.xlu0 %v3047
    %v3049 = vpop.xlane.xlu0 %3048
    %v3050 = vsub.f32 %v3038, %v3043
    %v3051 = vsub.f32 %v3039, %v3046
    %v3052 = vsub.f32 %v3040, %v3049
    %v3053 = vmul.f32 %v3050, 1.442695
    %v3054 = vpow.pop %v3053
    %v3055 = vmul.f32 %v3051, 1.442695
    %v3056 = vpow.pop %v3055
    %v3057 = vmul.f32 %v3052, 1.442695
    %v3058 = vpow.pop %v3057
    %v3059 = vsel %vm334, %v3054, 0.0
    %3060 = vadd.xlane.f32.xlu0 %v3059
    %v3061 = vpop.xlane.xlu0 %3060
    %v3062 = vsel %vm334, %v3056, 0.0
    %3063 = vadd.xlane.f32.xlu0 %v3062
    %v3064 = vpop.xlane.xlu0 %3063
    %v3065 = vsel %vm334, %v3058, 0.0
    %3066 = vadd.xlane.f32.xlu0 %v3065
    %v3067 = vpop.xlane.xlu0 %3066
    %v3068 = vrcp.pop %v3061
    %v3069 = vrcp.pop %v3064
    %v3070 = vrcp.pop %v3067
    %v3071 = vmul.f32 %v3054, %v3068
    %v3072 = vmul.f32 %v3056, %v3069
    %v3073 = vmul.f32 %v3058, %v3070
    %3074 = vrot.lane.b32.xlu0 %v2032, 40
    %v3075 = vpop.permute.xlu0 %3074
    %3076 = vrot.lane.b32.xlu0 %v2035, 40
    %v3077 = vpop.permute.xlu0 %3076
    %3078 = vrot.lane.b32.xlu0 %v2037, 40
    %v3079 = vpop.permute.xlu0 %3078
    %v3084 = vsel %vm334, %v3071, 0
    %v3087 = vsel %vm334, %v3072, 0
    %v3090 = vsel %vm334, %v3073, 0
    %3092 = vmatpush.msra.mxu0 0.0
    %3093 = vmatpush.msra.mxu0 0.0
    %3094 = vmatpush.msra.mxu0 0.0
    %3095 = vmatpush.msra.mxu0 0.0
    %3096 = vmatpush.msra.mxu0 0.0
    %3097 = vmatpush.msra.mxu0 0.0
    %3098 = vmatpush.msra.mxu0 0.0
    %3099 = vmatpush.msra.mxu0 0.0
    %3100 = vmatpush.msra.mxu0 0.0
    %3101 = vmatpush.msra.mxu0 0.0
    %3102 = vmatpush.msra.mxu0 0.0
    %3103 = vmatpush.msra.mxu0 0.0
    %3104 = vmatpush.msra.mxu0 0.0
    %3105 = vmatpush.msra.mxu0 %v3079
    %3106 = vmatpush.msra.mxu0 %v3077
    %3107 = vmatpush.msra.mxu0 %v3075
    %3108 = vmatmul.f32.gmra.mxu0 %v3084
    %v3109 = vpop.f32.mrf.mxu0
    %v3110 = vadd.f32 0.0, %v3109
    %3111 = vmatmul.f32.gmra.mxu0 %v3087
    %v3112 = vpop.f32.mrf.mxu0
    %v3113 = vadd.f32 0.0, %v3112
    %3114 = vmatmul.f32.gmra.mxu0 %v3090
    %v3115 = vpop.f32.mrf.mxu0
    %v3116 = vadd.f32 0.0, %v3115
    %3117 = vdwg.mxu0
    %3121 = vrot.lane.b32.xlu0 %v2850, 8
    %v3122 = vpop.permute.xlu0 %3121
    %3123 = vrot.lane.b32.xlu0 %v2853, 8
    %v3124 = vpop.permute.xlu0 %3123
    %3125 = vrot.lane.b32.xlu0 %v2856, 8
    %v3126 = vpop.permute.xlu0 %3125
    %3133 = vrot.lane.b32.xlu0 %v2980, 16
    %v3134 = vpop.permute.xlu0 %3133
    %3135 = vrot.lane.b32.xlu0 %v2983, 16
    %v3136 = vpop.permute.xlu0 %3135
    %3137 = vrot.lane.b32.xlu0 %v2986, 16
    %v3138 = vpop.permute.xlu0 %3137
    %3145 = vrot.lane.b32.xlu0 %v3110, 24
    %v3146 = vpop.permute.xlu0 %3145
    %3147 = vrot.lane.b32.xlu0 %v3113, 24
    %v3148 = vpop.permute.xlu0 %3147
    %3149 = vrot.lane.b32.xlu0 %v3116, 24
    %v3150 = vpop.permute.xlu0 %3149
    %v3154 = vsel %vm292, %v2720, %v3122
    %v3155 = vsel %vm292, %v2723, %v3124
    %v3156 = vsel %vm292, %v2726, %v3126
    %v3157 = vsel %vm841, %v3154, %v3134
    %v3158 = vsel %vm841, %v3155, %v3136
    %v3159 = vsel %vm841, %v3156, %v3138
    %v3160 = vsel %vm334, %v3157, %v3146
    %v3161 = vsel %vm334, %v3158, %v3148
    %v3162 = vsel %vm334, %v3159, %v3150
    %v3163 = vpack.c.bf16 %v2599, %v2598
    %v3164 = vpack.c.bf16 %v3160, %v2600
    %v3165 = vpack.c.bf16 %v3162, %v3161
    %v3170 = vunpack.c.l.b16 %v1817
    %v3171 = vunpack.c.l.b16 %v1818
    %v3172 = vunpack.c.l.b16 %v1819
    %v3173 = vunpack.c.l.b16 %v1820
    %v3174 = vpack.c.b16 %v3171, %v3170
    %v3175 = vpack.c.b16 %v3173, %v3172
    %v3179 = vsel %vm47, %v3163, 0
    %v3182 = vsel %vm47, %v3164, 0
    %v3185 = vsel %vm47, %v3165, 0
    %3187 = vmatpush.bf16.msra.mxu0 0
    %3188 = vmatpush.bf16.msra.mxu0 0
    %3189 = vmatpush.bf16.msra.mxu0 0
    %3190 = vmatpush.bf16.msra.mxu0 0
    %3191 = vmatpush.bf16.msra.mxu0 0
    %3192 = vmatpush.bf16.msra.mxu0 0
    %3193 = vmatpush.bf16.msra.mxu0 %v3175
    %3194 = vmatpush.bf16.msra.mxu0 %v3174
    %3195 = vmatmul.bf16.gmra.mxu0 %v3179
    %v3196 = vpop.f32.mrf.mxu0
    %v3197 = vadd.f32 0.0, %v3196
    %v3198 = vpop.f32.mrf.mxu0
    %v3199 = vadd.f32 0.0, %v3198
    %3200 = vmatmul.bf16.gmra.mxu0 %v3182
    %v3201 = vpop.f32.mrf.mxu0
    %v3202 = vadd.f32 0.0, %v3201
    %v3203 = vpop.f32.mrf.mxu0
    %v3204 = vadd.f32 0.0, %v3203
    %3205 = vmatmul.bf16.gmra.mxu0 %v3185
    %v3206 = vpop.f32.mrf.mxu0
    %v3207 = vadd.f32 0.0, %v3206
    %v3208 = vpop.f32.mrf.mxu0
    %v3209 = vadd.f32 0.0, %v3208
    %3210 = vdwg.mxu0
    %v3211 = vadd.f32 %v1807, %v3197
    %v3212 = vadd.f32 %v1808, %v3199
    %v3213 = vadd.f32 %v1809, %v3202
    %v3214 = vadd.f32 %v1810, %v3204
    %v3215 = vadd.f32 %v1811, %v3207
    %v3216 = vadd.f32 %v1812, %v3209
    %v3217 = vld [vmem:[%s1 + $0xc] sm:$0x1]
    %v3218 = vperm.slane %v3217, 0
    %v3219 = vadd.f32 %v3211, %v3218
    %v3220 = vadd.f32 %v3212, %v3218
    %v3221 = vadd.f32 %v3213, %v3218
    %v3222 = vadd.f32 %v3214, %v3218
    %v3223 = vadd.f32 %v3215, %v3218
    %v3224 = vadd.f32 %v3216, %v3218
    %v3225 = vld [vmem:[%s1 + $0xd] sm:$0x1]
    %v3226 = vld [vmem:[%s1 + $0xe] sm:$0x1]
    %v3227 = vsel %vm47, %v3219, 0.0
    %3228 = vadd.xlane.f32.xlu0 %v3227
    %v3229 = vpop.xlane.xlu0 %3228
    %v3230 = vsel %vm47, %v3220, 0.0
    %3231 = vadd.xlane.f32.xlu0 %v3230
    %v3232 = vpop.xlane.xlu0 %3231
    %v3233 = vsel %vm47, %v3221, 0.0
    %3234 = vadd.xlane.f32.xlu0 %v3233
    %v3235 = vpop.xlane.xlu0 %3234
    %v3236 = vsel %vm47, %v3222, 0.0
    %3237 = vadd.xlane.f32.xlu0 %v3236
    %v3238 = vpop.xlane.xlu0 %3237
    %v3239 = vsel %vm47, %v3223, 0.0
    %3240 = vadd.xlane.f32.xlu0 %v3239
    %v3241 = vpop.xlane.xlu0 %3240
    %v3242 = vsel %vm47, %v3224, 0.0
    %3243 = vadd.xlane.f32.xlu0 %v3242
    %v3244 = vpop.xlane.xlu0 %3243
    %v3245 = vmul.f32 %v3229, %v125
    %v3246 = vmul.f32 %v3232, %v125
    %v3247 = vmul.f32 %v3235, %v125
    %v3248 = vmul.f32 %v3238, %v125
    %v3249 = vmul.f32 %v3241, %v125
    %v3250 = vmul.f32 %v3244, %v125
    %v3251 = vsub.f32 %v3219, %v3245
    %v3252 = vsub.f32 %v3220, %v3246
    %v3253 = vsub.f32 %v3221, %v3247
    %v3254 = vsub.f32 %v3222, %v3248
    %v3255 = vsub.f32 %v3223, %v3249
    %v3256 = vsub.f32 %v3224, %v3250
    %v3257 = vmul.f32 %v3251, %v3251
    %v3258 = vmul.f32 %v3252, %v3252
    %v3259 = vmul.f32 %v3253, %v3253
    %v3260 = vmul.f32 %v3254, %v3254
    %v3261 = vmul.f32 %v3255, %v3255
    %v3262 = vmul.f32 %v3256, %v3256
    %v3263 = vsel %vm47, %v3257, 0.0
    %3264 = vadd.xlane.f32.xlu0 %v3263
    %v3265 = vpop.xlane.xlu0 %3264
    %v3266 = vsel %vm47, %v3258, 0.0
    %3267 = vadd.xlane.f32.xlu0 %v3266
    %v3268 = vpop.xlane.xlu0 %3267
    %v3269 = vsel %vm47, %v3259, 0.0
    %3270 = vadd.xlane.f32.xlu0 %v3269
    %v3271 = vpop.xlane.xlu0 %3270
    %v3272 = vsel %vm47, %v3260, 0.0
    %3273 = vadd.xlane.f32.xlu0 %v3272
    %v3274 = vpop.xlane.xlu0 %3273
    %v3275 = vsel %vm47, %v3261, 0.0
    %3276 = vadd.xlane.f32.xlu0 %v3275
    %v3277 = vpop.xlane.xlu0 %3276
    %v3278 = vsel %vm47, %v3262, 0.0
    %3279 = vadd.xlane.f32.xlu0 %v3278
    %v3280 = vpop.xlane.xlu0 %3279
    %v3281 = vmul.f32 %v3265, %v125
    %v3282 = vmul.f32 %v3268, %v125
    %v3283 = vmul.f32 %v3271, %v125
    %v3284 = vmul.f32 %v3274, %v125
    %v3285 = vmul.f32 %v3277, %v125
    %v3286 = vmul.f32 %v3280, %v125
    %v3287 = vadd.f32 %v3281, 1e-06
    %v3288 = vadd.f32 %v3282, 1e-06
    %v3289 = vadd.f32 %v3283, 1e-06
    %v3290 = vadd.f32 %v3284, 1e-06
    %v3291 = vadd.f32 %v3285, 1e-06
    %v3292 = vadd.f32 %v3286, 1e-06
    %v3293 = vrsqrt.pop %v3287
    %v3294 = vmul.f32 %v3293, %v3287
    %v3295 = vmul.f32 %v3294, %v3293
    %v3296 = vmul.f32 0.5, %v3295
    %v3297 = vsub.f32 1.5, %v3296
    %v3298 = vmul.f32 %v3293, %v3297
    %vm3299 = vweird.f32 %v3287
    %vm3300 = vweird.f32 %v3293
    %vm3301 = vmor %vm3299, %vm3300
    %v3302 = vsel %vm3301, %v3293, %v3298
    %v3303 = vrsqrt.pop %v3288
    %v3304 = vmul.f32 %v3303, %v3288
    %v3305 = vmul.f32 %v3304, %v3303
    %v3306 = vmul.f32 0.5, %v3305
    %v3307 = vsub.f32 1.5, %v3306
    %v3308 = vmul.f32 %v3303, %v3307
    %vm3309 = vweird.f32 %v3288
    %vm3310 = vweird.f32 %v3303
    %vm3311 = vmor %vm3309, %vm3310
    %v3312 = vsel %vm3311, %v3303, %v3308
    %v3313 = vrsqrt.pop %v3289
    %v3314 = vmul.f32 %v3313, %v3289
    %v3315 = vmul.f32 %v3314, %v3313
    %v3316 = vmul.f32 0.5, %v3315
    %v3317 = vsub.f32 1.5, %v3316
    %v3318 = vmul.f32 %v3313, %v3317
    %vm3319 = vweird.f32 %v3289
    %vm3320 = vweird.f32 %v3313
    %vm3321 = vmor %vm3319, %vm3320
    %v3322 = vsel %vm3321, %v3313, %v3318
    %v3323 = vrsqrt.pop %v3290
    %v3324 = vmul.f32 %v3323, %v3290
    %v3325 = vmul.f32 %v3324, %v3323
    %v3326 = vmul.f32 0.5, %v3325
    %v3327 = vsub.f32 1.5, %v3326
    %v3328 = vmul.f32 %v3323, %v3327
    %vm3329 = vweird.f32 %v3290
    %vm3330 = vweird.f32 %v3323
    %vm3331 = vmor %vm3329, %vm3330
    %v3332 = vsel %vm3331, %v3323, %v3328
    %v3333 = vrsqrt.pop %v3291
    %v3334 = vmul.f32 %v3333, %v3291
    %v3335 = vmul.f32 %v3334, %v3333
    %v3336 = vmul.f32 0.5, %v3335
    %v3337 = vsub.f32 1.5, %v3336
    %v3338 = vmul.f32 %v3333, %v3337
    %vm3339 = vweird.f32 %v3291
    %vm3340 = vweird.f32 %v3333
    %vm3341 = vmor %vm3339, %vm3340
    %v3342 = vsel %vm3341, %v3333, %v3338
    %v3343 = vrsqrt.pop %v3292
    %v3344 = vmul.f32 %v3343, %v3292
    %v3345 = vmul.f32 %v3344, %v3343
    %v3346 = vmul.f32 0.5, %v3345
    %v3347 = vsub.f32 1.5, %v3346
    %v3348 = vmul.f32 %v3343, %v3347
    %vm3349 = vweird.f32 %v3292
    %vm3350 = vweird.f32 %v3343
    %vm3351 = vmor %vm3349, %vm3350
    %v3352 = vsel %vm3351, %v3343, %v3348
    %v3353 = vmul.f32 %v3251, %v3302
    %v3354 = vmul.f32 %v3252, %v3312
    %v3355 = vmul.f32 %v3253, %v3322
    %v3356 = vmul.f32 %v3254, %v3332
    %v3357 = vmul.f32 %v3255, %v3342
    %v3358 = vmul.f32 %v3256, %v3352
    %v3359 = vperm.slane %v3225, 0
    %v3360 = vmul.f32 %v3353, %v3359
    %v3361 = vmul.f32 %v3354, %v3359
    %v3362 = vmul.f32 %v3355, %v3359
    %v3363 = vmul.f32 %v3356, %v3359
    %v3364 = vmul.f32 %v3357, %v3359
    %v3365 = vmul.f32 %v3358, %v3359
    %v3366 = vperm.slane %v3226, 0
    %v3367 = vadd.f32 %v3360, %v3366
    %v3368 = vadd.f32 %v3361, %v3366
    %v3369 = vadd.f32 %v3362, %v3366
    %v3370 = vadd.f32 %v3363, %v3366
    %v3371 = vadd.f32 %v3364, %v3366
    %v3372 = vadd.f32 %v3365, %v3366
    %v3373 = vpack.c.bf16 %v3368, %v3367
    %v3374 = vpack.c.bf16 %v3370, %v3369
    %v3375 = vpack.c.bf16 %v3372, %v3371
    %v3376 = vld [vmem:[%s1 + $0xf] sm:$0x1]
    %v3377 = vperm.slane %v3376, 0
    %v3382 = vunpack.c.l.b16 %v1821
    %v3383 = vunpack.c.l.b16 %v1822
    %v3384 = vunpack.c.l.b16 %v1823
    %v3385 = vunpack.c.l.b16 %v1824
    %v3386 = vpack.c.b16 %v3383, %v3382
    %v3387 = vpack.c.b16 %v3385, %v3384
    %v3391 = vsel %vm47, %v3373, 0
    %v3394 = vsel %vm47, %v3374, 0
    %v3397 = vsel %vm47, %v3375, 0
    %3399 = vmatpush.bf16.msra.mxu0 0
    %3400 = vmatpush.bf16.msra.mxu0 0
    %3401 = vmatpush.bf16.msra.mxu0 0
    %3402 = vmatpush.bf16.msra.mxu0 0
    %3403 = vmatpush.bf16.msra.mxu0 0
    %3404 = vmatpush.bf16.msra.mxu0 0
    %3405 = vmatpush.bf16.msra.mxu0 %v3387
    %3406 = vmatpush.bf16.msra.mxu0 %v3386
    %3407 = vmatmul.bf16.gmra.mxu0 %v3391
    %v3408 = vpop.f32.mrf.mxu0
    %v3409 = vadd.f32 %v3377, %v3408
    %v3410 = vpop.f32.mrf.mxu0
    %v3411 = vadd.f32 %v3377, %v3410
    %3412 = vmatmul.bf16.gmra.mxu0 %v3394
    %v3413 = vpop.f32.mrf.mxu0
    %v3414 = vadd.f32 %v3377, %v3413
    %v3415 = vpop.f32.mrf.mxu0
    %v3416 = vadd.f32 %v3377, %v3415
    %3417 = vmatmul.bf16.gmra.mxu0 %v3397
    %v3418 = vpop.f32.mrf.mxu0
    %v3419 = vadd.f32 %v3377, %v3418
    %v3420 = vpop.f32.mrf.mxu0
    %v3421 = vadd.f32 %v3377, %v3420
    %3422 = vdwg.mxu0
    %v3423 = vmul.f32 %v3409, 0.5
    %v3424 = vmul.f32 %v3411, 0.5
    %v3425 = vmul.f32 %v3414, 0.5
    %v3426 = vmul.f32 %v3416, 0.5
    %v3427 = vmul.f32 %v3419, 0.5
    %v3428 = vmul.f32 %v3421, 0.5
    %v3429 = vmul.f32 %v3409, 0.044715
    %v3430 = vmul.f32 %v3411, 0.044715
    %v3431 = vmul.f32 %v3414, 0.044715
    %v3432 = vmul.f32 %v3416, 0.044715
    %v3433 = vmul.f32 %v3419, 0.044715
    %v3434 = vmul.f32 %v3421, 0.044715
    %v3435 = vmul.f32 %v3429, %v3409
    %v3436 = vmul.f32 %v3430, %v3411
    %v3437 = vmul.f32 %v3431, %v3414
    %v3438 = vmul.f32 %v3432, %v3416
    %v3439 = vmul.f32 %v3433, %v3419
    %v3440 = vmul.f32 %v3434, %v3421
    %v3441 = vmul.f32 %v3435, %v3409
    %v3442 = vmul.f32 %v3436, %v3411
    %v3443 = vmul.f32 %v3437, %v3414
    %v3444 = vmul.f32 %v3438, %v3416
    %v3445 = vmul.f32 %v3439, %v3419
    %v3446 = vmul.f32 %v3440, %v3421
    %v3447 = vadd.f32 %v3409, %v3441
    %v3448 = vadd.f32 %v3411, %v3442
    %v3449 = vadd.f32 %v3414, %v3443
    %v3450 = vadd.f32 %v3416, %v3444
    %v3451 = vadd.f32 %v3419, %v3445
    %v3452 = vadd.f32 %v3421, %v3446
    %v3453 = vmul.f32 %v3447, 0.7978846
    %v3454 = vmul.f32 %v3448, 0.7978846
    %v3455 = vmul.f32 %v3449, 0.7978846
    %v3456 = vmul.f32 %v3450, 0.7978846
    %v3457 = vmul.f32 %v3451, 0.7978846
    %v3458 = vmul.f32 %v3452, 0.7978846
    %v3459 = vtanh.pop %v3453
    %v3460 = vtanh.pop %v3454
    %v3461 = vtanh.pop %v3455
    %v3462 = vtanh.pop %v3456
    %v3463 = vtanh.pop %v3457
    %v3464 = vtanh.pop %v3458
    %v3465 = vadd.f32 %v3459, 1.0
    %v3466 = vadd.f32 %v3460, 1.0
    %v3467 = vadd.f32 %v3461, 1.0
    %v3468 = vadd.f32 %v3462, 1.0
    %v3469 = vadd.f32 %v3463, 1.0
    %v3470 = vadd.f32 %v3464, 1.0
    %v3471 = vmul.f32 %v3423, %v3465
    %v3472 = vmul.f32 %v3424, %v3466
    %v3473 = vmul.f32 %v3425, %v3467
    %v3474 = vmul.f32 %v3426, %v3468
    %v3475 = vmul.f32 %v3427, %v3469
    %v3476 = vmul.f32 %v3428, %v3470
    %v3477 = vpack.c.bf16 %v3472, %v3471
    %v3478 = vpack.c.bf16 %v3474, %v3473
    %v3479 = vpack.c.bf16 %v3476, %v3475
    %v3496 = vunpack.c.l.b16 %v1825
    %v3497 = vunpack.c.l.b16 %v1826
    %v3498 = vunpack.c.l.b16 %v1827
    %v3499 = vunpack.c.l.b16 %v1828
    %v3500 = vunpack.c.l.b16 %v1829
    %v3501 = vunpack.c.l.b16 %v1830
    %v3502 = vunpack.c.l.b16 %v1831
    %v3503 = vunpack.c.l.b16 %v1832
    %v3504 = vunpack.c.l.b16 %v1833
    %v3505 = vunpack.c.l.b16 %v1834
    %v3506 = vunpack.c.l.b16 %v1835
    %v3507 = vunpack.c.l.b16 %v1836
    %v3508 = vunpack.c.l.b16 %v1837
    %v3509 = vunpack.c.l.b16 %v1838
    %v3510 = vunpack.c.l.b16 %v1839
    %v3511 = vunpack.c.l.b16 %v1840
    %v3512 = vpack.c.b16 %v3497, %v3496
    %v3513 = vpack.c.b16 %v3499, %v3498
    %v3514 = vpack.c.b16 %v3501, %v3500
    %v3515 = vpack.c.b16 %v3503, %v3502
    %v3516 = vpack.c.b16 %v3505, %v3504
    %v3517 = vpack.c.b16 %v3507, %v3506
    %v3518 = vpack.c.b16 %v3509, %v3508
    %v3519 = vpack.c.b16 %v3511, %v3510
    %3528 = vmatpush.bf16.msra.mxu0 %v3519
    %3529 = vmatpush.bf16.msra.mxu0 %v3518
    %3530 = vmatpush.bf16.msra.mxu0 %v3517
    %3531 = vmatpush.bf16.msra.mxu0 %v3516
    %3532 = vmatpush.bf16.msra.mxu0 %v3515
    %3533 = vmatpush.bf16.msra.mxu0 %v3514
    %3534 = vmatpush.bf16.msra.mxu0 %v3513
    %3535 = vmatpush.bf16.msra.mxu0 %v3512
    %3536 = vmatmul.bf16.gmra.mxu0 %v3477
    %v3537 = vpop.f32.mrf.mxu0
    %v3538 = vadd.f32 0.0, %v3537
    %v3539 = vpop.f32.mrf.mxu0
    %v3540 = vadd.f32 0.0, %v3539
    %3541 = vmatmul.bf16.gmra.mxu0 %v3478
    %v3542 = vpop.f32.mrf.mxu0
    %v3543 = vadd.f32 0.0, %v3542
    %v3544 = vpop.f32.mrf.mxu0
    %v3545 = vadd.f32 0.0, %v3544
    %3546 = vmatmul.bf16.gmra.mxu0 %v3479
    %v3547 = vpop.f32.mrf.mxu0
    %v3548 = vadd.f32 0.0, %v3547
    %v3549 = vpop.f32.mrf.mxu0
    %v3550 = vadd.f32 0.0, %v3549
    %3551 = vdwg.mxu0
    %v3552 = vadd.f32 %v3219, %v3538
    %v3553 = vadd.f32 %v3220, %v3540
    %v3554 = vadd.f32 %v3221, %v3543
    %v3555 = vadd.f32 %v3222, %v3545
    %v3556 = vadd.f32 %v3223, %v3548
    %v3557 = vadd.f32 %v3224, %v3550
    %v3558 = vld [vmem:[%s1 + $0x10] sm:$0x1]
    %v3559 = vperm.slane %v3558, 0
    %v3560 = vadd.f32 %v3552, %v3559
    %v3561 = vadd.f32 %v3553, %v3559
    %v3562 = vadd.f32 %v3554, %v3559
    %v3563 = vadd.f32 %v3555, %v3559
    %v3564 = vadd.f32 %v3556, %v3559
    %v3565 = vadd.f32 %v3557, %v3559
    %v3566 = vld [vmem:[%s1 + $0x11] sm:$0x1]
    %v3567 = vld [vmem:[%s1 + $0x12] sm:$0x1]
    %v3568 = vsel %vm47, %v3560, 0.0
    %3569 = vadd.xlane.f32.xlu0 %v3568
    %v3570 = vpop.xlane.xlu0 %3569
    %v3571 = vsel %vm47, %v3561, 0.0
    %3572 = vadd.xlane.f32.xlu0 %v3571
    %v3573 = vpop.xlane.xlu0 %3572
    %v3574 = vsel %vm47, %v3562, 0.0
    %3575 = vadd.xlane.f32.xlu0 %v3574
    %v3576 = vpop.xlane.xlu0 %3575
    %v3577 = vsel %vm47, %v3563, 0.0
    %3578 = vadd.xlane.f32.xlu0 %v3577
    %v3579 = vpop.xlane.xlu0 %3578
    %v3580 = vsel %vm47, %v3564, 0.0
    %3581 = vadd.xlane.f32.xlu0 %v3580
    %v3582 = vpop.xlane.xlu0 %3581
    %v3583 = vsel %vm47, %v3565, 0.0
    %3584 = vadd.xlane.f32.xlu0 %v3583
    %v3585 = vpop.xlane.xlu0 %3584
    %v3586 = vmul.f32 %v3570, %v125
    %v3587 = vmul.f32 %v3573, %v125
    %v3588 = vmul.f32 %v3576, %v125
    %v3589 = vmul.f32 %v3579, %v125
    %v3590 = vmul.f32 %v3582, %v125
    %v3591 = vmul.f32 %v3585, %v125
    %v3592 = vsub.f32 %v3560, %v3586
    %v3593 = vsub.f32 %v3561, %v3587
    %v3594 = vsub.f32 %v3562, %v3588
    %v3595 = vsub.f32 %v3563, %v3589
    %v3596 = vsub.f32 %v3564, %v3590
    %v3597 = vsub.f32 %v3565, %v3591
    %v3598 = vmul.f32 %v3592, %v3592
    %v3599 = vmul.f32 %v3593, %v3593
    %v3600 = vmul.f32 %v3594, %v3594
    %v3601 = vmul.f32 %v3595, %v3595
    %v3602 = vmul.f32 %v3596, %v3596
    %v3603 = vmul.f32 %v3597, %v3597
    %v3604 = vsel %vm47, %v3598, 0.0
    %3605 = vadd.xlane.f32.xlu0 %v3604
    %v3606 = vpop.xlane.xlu0 %3605
    %v3607 = vsel %vm47, %v3599, 0.0
    %3608 = vadd.xlane.f32.xlu0 %v3607
    %v3609 = vpop.xlane.xlu0 %3608
    %v3610 = vsel %vm47, %v3600, 0.0
    %3611 = vadd.xlane.f32.xlu0 %v3610
    %v3612 = vpop.xlane.xlu0 %3611
    %v3613 = vsel %vm47, %v3601, 0.0
    %3614 = vadd.xlane.f32.xlu0 %v3613
    %v3615 = vpop.xlane.xlu0 %3614
    %v3616 = vsel %vm47, %v3602, 0.0
    %3617 = vadd.xlane.f32.xlu0 %v3616
    %v3618 = vpop.xlane.xlu0 %3617
    %v3619 = vsel %vm47, %v3603, 0.0
    %3620 = vadd.xlane.f32.xlu0 %v3619
    %v3621 = vpop.xlane.xlu0 %3620
    %v3622 = vmul.f32 %v3606, %v125
    %v3623 = vmul.f32 %v3609, %v125
    %v3624 = vmul.f32 %v3612, %v125
    %v3625 = vmul.f32 %v3615, %v125
    %v3626 = vmul.f32 %v3618, %v125
    %v3627 = vmul.f32 %v3621, %v125
    %v3628 = vadd.f32 %v3622, 1e-06
    %v3629 = vadd.f32 %v3623, 1e-06
    %v3630 = vadd.f32 %v3624, 1e-06
    %v3631 = vadd.f32 %v3625, 1e-06
    %v3632 = vadd.f32 %v3626, 1e-06
    %v3633 = vadd.f32 %v3627, 1e-06
    %v3634 = vrsqrt.pop %v3628
    %v3635 = vmul.f32 %v3634, %v3628
    %v3636 = vmul.f32 %v3635, %v3634
    %v3637 = vmul.f32 0.5, %v3636
    %v3638 = vsub.f32 1.5, %v3637
    %v3639 = vmul.f32 %v3634, %v3638
    %vm3640 = vweird.f32 %v3628
    %vm3641 = vweird.f32 %v3634
    %vm3642 = vmor %vm3640, %vm3641
    %v3643 = vsel %vm3642, %v3634, %v3639
    %v3644 = vrsqrt.pop %v3629
    %v3645 = vmul.f32 %v3644, %v3629
    %v3646 = vmul.f32 %v3645, %v3644
    %v3647 = vmul.f32 0.5, %v3646
    %v3648 = vsub.f32 1.5, %v3647
    %v3649 = vmul.f32 %v3644, %v3648
    %vm3650 = vweird.f32 %v3629
    %vm3651 = vweird.f32 %v3644
    %vm3652 = vmor %vm3650, %vm3651
    %v3653 = vsel %vm3652, %v3644, %v3649
    %v3654 = vrsqrt.pop %v3630
    %v3655 = vmul.f32 %v3654, %v3630
    %v3656 = vmul.f32 %v3655, %v3654
    %v3657 = vmul.f32 0.5, %v3656
    %v3658 = vsub.f32 1.5, %v3657
    %v3659 = vmul.f32 %v3654, %v3658
    %vm3660 = vweird.f32 %v3630
    %vm3661 = vweird.f32 %v3654
    %vm3662 = vmor %vm3660, %vm3661
    %v3663 = vsel %vm3662, %v3654, %v3659
    %v3664 = vrsqrt.pop %v3631
    %v3665 = vmul.f32 %v3664, %v3631
    %v3666 = vmul.f32 %v3665, %v3664
    %v3667 = vmul.f32 0.5, %v3666
    %v3668 = vsub.f32 1.5, %v3667
    %v3669 = vmul.f32 %v3664, %v3668
    %vm3670 = vweird.f32 %v3631
    %vm3671 = vweird.f32 %v3664
    %vm3672 = vmor %vm3670, %vm3671
    %v3673 = vsel %vm3672, %v3664, %v3669
    %v3674 = vrsqrt.pop %v3632
    %v3675 = vmul.f32 %v3674, %v3632
    %v3676 = vmul.f32 %v3675, %v3674
    %v3677 = vmul.f32 0.5, %v3676
    %v3678 = vsub.f32 1.5, %v3677
    %v3679 = vmul.f32 %v3674, %v3678
    %vm3680 = vweird.f32 %v3632
    %vm3681 = vweird.f32 %v3674
    %vm3682 = vmor %vm3680, %vm3681
    %v3683 = vsel %vm3682, %v3674, %v3679
    %v3684 = vrsqrt.pop %v3633
    %v3685 = vmul.f32 %v3684, %v3633
    %v3686 = vmul.f32 %v3685, %v3684
    %v3687 = vmul.f32 0.5, %v3686
    %v3688 = vsub.f32 1.5, %v3687
    %v3689 = vmul.f32 %v3684, %v3688
    %vm3690 = vweird.f32 %v3633
    %vm3691 = vweird.f32 %v3684
    %vm3692 = vmor %vm3690, %vm3691
    %v3693 = vsel %vm3692, %v3684, %v3689
    %v3694 = vmul.f32 %v3592, %v3643
    %v3695 = vmul.f32 %v3593, %v3653
    %v3696 = vmul.f32 %v3594, %v3663
    %v3697 = vmul.f32 %v3595, %v3673
    %v3698 = vmul.f32 %v3596, %v3683
    %v3699 = vmul.f32 %v3597, %v3693
    %v3700 = vperm.slane %v3566, 0
    %v3701 = vmul.f32 %v3694, %v3700
    %v3702 = vmul.f32 %v3695, %v3700
    %v3703 = vmul.f32 %v3696, %v3700
    %v3704 = vmul.f32 %v3697, %v3700
    %v3705 = vmul.f32 %v3698, %v3700
    %v3706 = vmul.f32 %v3699, %v3700
    %v3707 = vperm.slane %v3567, 0
    %v3708 = vadd.f32 %v3701, %v3707
    %v3709 = vadd.f32 %v3702, %v3707
    %v3710 = vadd.f32 %v3703, %v3707
    %v3711 = vadd.f32 %v3704, %v3707
    %v3712 = vadd.f32 %v3705, %v3707
    %v3713 = vadd.f32 %v3706, %v3707
    %v3714 = vpack.c.bf16 %v3709, %v3708
    %v3715 = vpack.c.bf16 %v3712, %v3711
    %v3716 = vld [vmem:[%s2 + $0xf0] sm:$0xf]
    %v3717 = vld [vmem:[%s2 + $0xf4] sm:$0xf]
    %v3718 = vld [vmem:[%s2 + $0xf8] sm:$0xf]
    %v3719 = vld [vmem:[%s2 + $0xfc] sm:$0xf]
    %v3724 = vunpack.c.l.b16 %v3716
    %v3725 = vunpack.c.l.b16 %v3717
    %v3726 = vunpack.c.l.b16 %v3718
    %v3727 = vunpack.c.l.b16 %v3719
    %v3728 = vpack.c.b16 %v3725, %v3724
    %v3729 = vpack.c.b16 %v3727, %v3726
    %v3733 = vsel %vm47, %v3714, 0
    %v3736 = vsel %vm47, %v3715, 0
    %3738 = vmatpush.bf16.msra.mxu0 0
    %3739 = vmatpush.bf16.msra.mxu0 0
    %3740 = vmatpush.bf16.msra.mxu0 0
    %3741 = vmatpush.bf16.msra.mxu0 0
    %3742 = vmatpush.bf16.msra.mxu0 0
    %3743 = vmatpush.bf16.msra.mxu0 0
    %3744 = vmatpush.bf16.msra.mxu0 %v3729
    %3745 = vmatpush.bf16.msra.mxu0 %v3728
    %3746 = vmatmul.bf16.gmra.mxu0 %v3733
    %v3747 = vpop.f32.mrf.mxu0
    %v3748 = vadd.f32 0.0, %v3747
    %v3749 = vpop.f32.mrf.mxu0
    %v3750 = vadd.f32 0.0, %v3749
    %3751 = vmatmul.bf16.gmra.mxu0 %v3736
    %v3752 = vpop.f32.mrf.mxu0
    %v3753 = vadd.f32 0.0, %v3752
    %v3754 = vpop.f32.mrf.mxu0
    %v3755 = vadd.f32 0.0, %v3754
    %3756 = vdwg.mxu0
    %v3757 = vmul.f32 %v3748, %v3748
    %v3758 = vmul.f32 %v3750, %v3750
    %v3759 = vmul.f32 %v3753, %v3753
    %v3760 = vmul.f32 %v3755, %v3755
    %v3761 = vsel %vm47, %v3757, 0.0
    %3762 = vadd.xlane.f32.xlu0 %v3761
    %v3763 = vpop.xlane.xlu0 %3762
    %v3764 = vsel %vm47, %v3758, 0.0
    %3765 = vadd.xlane.f32.xlu0 %v3764
    %v3766 = vpop.xlane.xlu0 %3765
    %v3767 = vsel %vm47, %v3759, 0.0
    %3768 = vadd.xlane.f32.xlu0 %v3767
    %v3769 = vpop.xlane.xlu0 %3768
    %v3770 = vsel %vm47, %v3760, 0.0
    %3771 = vadd.xlane.f32.xlu0 %v3770
    %v3772 = vpop.xlane.xlu0 %3771
    %v3773 = vmax.f32 %v3763, 1e-24
    %v3774 = vmax.f32 %v3766, 1e-24
    %v3775 = vmax.f32 %v3769, 1e-24
    %v3776 = vmax.f32 %v3772, 1e-24
    %v3777 = vrsqrt.pop %v3773
    %v3778 = vmul.f32 %v3777, %v3773
    %v3779 = vmul.f32 %v3778, %v3777
    %v3780 = vmul.f32 0.5, %v3779
    %v3781 = vsub.f32 1.5, %v3780
    %v3782 = vmul.f32 %v3777, %v3781
    %vm3783 = vweird.f32 %v3773
    %vm3784 = vweird.f32 %v3777
    %vm3785 = vmor %vm3783, %vm3784
    %v3786 = vsel %vm3785, %v3777, %v3782
    %v3787 = vrsqrt.pop %v3774
    %v3788 = vmul.f32 %v3787, %v3774
    %v3789 = vmul.f32 %v3788, %v3787
    %v3790 = vmul.f32 0.5, %v3789
    %v3791 = vsub.f32 1.5, %v3790
    %v3792 = vmul.f32 %v3787, %v3791
    %vm3793 = vweird.f32 %v3774
    %vm3794 = vweird.f32 %v3787
    %vm3795 = vmor %vm3793, %vm3794
    %v3796 = vsel %vm3795, %v3787, %v3792
    %v3797 = vrsqrt.pop %v3775
    %v3798 = vmul.f32 %v3797, %v3775
    %v3799 = vmul.f32 %v3798, %v3797
    %v3800 = vmul.f32 0.5, %v3799
    %v3801 = vsub.f32 1.5, %v3800
    %v3802 = vmul.f32 %v3797, %v3801
    %vm3803 = vweird.f32 %v3775
    %vm3804 = vweird.f32 %v3797
    %vm3805 = vmor %vm3803, %vm3804
    %v3806 = vsel %vm3805, %v3797, %v3802
    %v3807 = vrsqrt.pop %v3776
    %v3808 = vmul.f32 %v3807, %v3776
    %v3809 = vmul.f32 %v3808, %v3807
    %v3810 = vmul.f32 0.5, %v3809
    %v3811 = vsub.f32 1.5, %v3810
    %v3812 = vmul.f32 %v3807, %v3811
    %vm3813 = vweird.f32 %v3776
    %vm3814 = vweird.f32 %v3807
    %vm3815 = vmor %vm3813, %vm3814
    %v3816 = vsel %vm3815, %v3807, %v3812
    %v3817 = vmul.f32 %v3748, %v3786
    %v3818 = vmul.f32 %v3750, %v3796
    %v3819 = vmul.f32 %v3753, %v3806
    %v3820 = vmul.f32 %v3755, %v3816
    %v3821 = vpack.c.bf16 %v3713, %v3710
    %v3822 = vld [vmem:[%s2 + $0x100] sm:$0xf]
    %v3823 = vld [vmem:[%s2 + $0x104] sm:$0xf]
    %v3824 = vld [vmem:[%s2 + $0x108] sm:$0xf]
    %v3825 = vld [vmem:[%s2 + $0x10c] sm:$0xf]
    %v3830 = vunpack.c.l.b16 %v3822
    %v3831 = vunpack.c.l.b16 %v3823
    %v3832 = vunpack.c.l.b16 %v3824
    %v3833 = vunpack.c.l.b16 %v3825
    %v3834 = vpack.c.b16 %v3831, %v3830
    %v3835 = vpack.c.b16 %v3833, %v3832
    %v3839 = vsel %vm47, %v3821, 0
    %3841 = vmatpush.bf16.msra.mxu0 0
    %3842 = vmatpush.bf16.msra.mxu0 0
    %3843 = vmatpush.bf16.msra.mxu0 0
    %3844 = vmatpush.bf16.msra.mxu0 0
    %3845 = vmatpush.bf16.msra.mxu0 0
    %3846 = vmatpush.bf16.msra.mxu0 0
    %3847 = vmatpush.bf16.msra.mxu0 %v3835
    %3848 = vmatpush.bf16.msra.mxu0 %v3834
    %3849 = vmatmul.bf16.gmra.mxu0 %v3839
    %v3850 = vpop.f32.mrf.mxu0
    %v3851 = vadd.f32 0.0, %v3850
    %v3852 = vpop.f32.mrf.mxu0
    %v3853 = vadd.f32 0.0, %v3852
    %3854 = vdwg.mxu0
    %v3855 = vmul.f32 %v3851, %v3851
    %v3856 = vmul.f32 %v3853, %v3853
    %v3857 = vsel %vm47, %v3855, 0.0
    %3858 = vadd.xlane.f32.xlu0 %v3857
    %v3859 = vpop.xlane.xlu0 %3858
    %v3860 = vsel %vm47, %v3856, 0.0
    %3861 = vadd.xlane.f32.xlu0 %v3860
    %v3862 = vpop.xlane.xlu0 %3861
    %v3863 = vmax.f32 %v3859, 1e-24
    %v3864 = vmax.f32 %v3862, 1e-24
    %v3865 = vrsqrt.pop %v3863
    %v3866 = vmul.f32 %v3865, %v3863
    %v3867 = vmul.f32 %v3866, %v3865
    %v3868 = vmul.f32 0.5, %v3867
    %v3869 = vsub.f32 1.5, %v3868
    %v3870 = vmul.f32 %v3865, %v3869
    %vm3871 = vweird.f32 %v3863
    %vm3872 = vweird.f32 %v3865
    %vm3873 = vmor %vm3871, %vm3872
    %v3874 = vsel %vm3873, %v3865, %v3870
    %v3875 = vrsqrt.pop %v3864
    %v3876 = vmul.f32 %v3875, %v3864
    %v3877 = vmul.f32 %v3876, %v3875
    %v3878 = vmul.f32 0.5, %v3877
    %v3879 = vsub.f32 1.5, %v3878
    %v3880 = vmul.f32 %v3875, %v3879
    %vm3881 = vweird.f32 %v3864
    %vm3882 = vweird.f32 %v3875
    %vm3883 = vmor %vm3881, %vm3882
    %v3884 = vsel %vm3883, %v3875, %v3880
    %v3885 = vmul.f32 %v3851, %v3874
    %v3886 = vmul.f32 %v3853, %v3884
    %v3887 = vld [vmem:[%s1 + $0x13] sm:$0xff]
    %v3889 = vsel %vm47, %v3885, 0
    %v3892 = vsel %vm47, %v3817, 0
    %v3895 = vsel %vm47, %v3818, 0
    %3897 = vmatpush.xpose.msra.mxu0 0.0
    %3898 = vmatpush.xpose.msra.mxu0 0.0
    %3899 = vmatpush.xpose.msra.mxu0 0.0
    %3900 = vmatpush.xpose.msra.mxu0 0.0
    %3901 = vmatpush.xpose.msra.mxu0 0.0
    %3902 = vmatpush.xpose.msra.mxu0 0.0
    %3903 = vmatpush.xpose.msra.mxu0 0.0
    %3904 = vmatpush.xpose.msra.mxu0 0.0
    %3905 = vmatpush.xpose.msra.mxu0 0.0
    %3906 = vmatpush.xpose.msra.mxu0 0.0
    %3907 = vmatpush.xpose.msra.mxu0 0.0
    %3908 = vmatpush.xpose.msra.mxu0 0.0
    %3909 = vmatpush.xpose.msra.mxu0 0.0
    %3910 = vmatpush.xpose.msra.mxu0 0.0
    %3911 = vmatpush.xpose.msra.mxu0 %v3895
    %3912 = vmatpush.xpose.msra.mxu0 %v3892
    %3913 = vmatmul.f32.gmra.mxu0 %v3889
    %v3914 = vpop.f32.mrf.mxu0
    %v3915 = vadd.f32 0.0, %v3914
    %3916 = vdwg.mxu0
    %v3917 = vsel %vm841, %v3915, 0.0
    %v3918 = vrot.slane %v3917, 4
    %v3919 = vadd.f32 %v3917, %v3918
    %v3920 = vrot.slane %v3919, 2
    %v3921 = vadd.f32 %v3919, %v3920
    %v3922 = vrot.slane %v3921, 1
    %v3923 = vadd.f32 %v3921, %v3922
    %v3924 = vrcp.pop 8.0
    %v3925 = vmul.f32 8.0, %v3924
    %v3926 = vsub.f32 1.0, %v3925
    %v3927 = vmul.f32 %v3924, %v3926
    %v3928 = vadd.f32 %v3924, %v3927
    %vm3929 = vweird.f32 %v3924
    %v3930 = vsel %vm3929, %v3924, %v3928
    %v3931 = vmul.f32 %v3923, %v3930
    %v3932 = vsub.f32 %v3915, %v3931
    %v3933 = vmul.f32 %v3932, %v3932
    %v3934 = vsel %vm841, %v3933, 0.0
    %v3935 = vrot.slane %v3934, 4
    %v3936 = vadd.f32 %v3934, %v3935
    %v3937 = vrot.slane %v3936, 2
    %v3938 = vadd.f32 %v3936, %v3937
    %v3939 = vrot.slane %v3938, 1
    %v3940 = vadd.f32 %v3938, %v3939
    %v3941 = vmul.f32 %v3940, %v3930
    %v3942 = vadd.f32 %v3941, 1e-06
    %v3943 = vrsqrt.pop %v3942
    %v3944 = vmul.f32 %v3943, %v3942
    %v3945 = vmul.f32 %v3944, %v3943
    %v3946 = vmul.f32 0.5, %v3945
    %v3947 = vsub.f32 1.5, %v3946
    %v3948 = vmul.f32 %v3943, %v3947
    %vm3949 = vweird.f32 %v3942
    %vm3950 = vweird.f32 %v3943
    %vm3951 = vmor %vm3949, %vm3950
    %v3952 = vsel %vm3951, %v3943, %v3948
    %v3953 = vmul.f32 %v3932, %v3952
    %3955 = vset.pattern.permute.xlu0 0
    %3956 = vperm.xlu0 %3955, %v3887
    %v3957 = vpop.permute.xlu0 %3956
    %v3959 = vmul.f32 %v3953, %v3957
    %3960 = vset.pattern.permute.xlu0 1
    %3961 = vperm.xlu0 %3960, %v3887
    %v3962 = vpop.permute.xlu0 %3961
    %v3964 = vadd.f32 %v3959, %v3962
    %3966 = vrot.lane.b32.xlu0 %v3964, 124
    %v3967 = vpop.permute.xlu0 %3966
    %3968 = vrot.lane.b32.xlu0 %v3964, 120
    %v3969 = vpop.permute.xlu0 %3968
    %3970 = vrot.lane.b32.xlu0 %v3964, 116
    %v3971 = vpop.permute.xlu0 %3970
    %v3972 = vld [vmem:[%s3] sm:$0xf]
    %vm3973 = vcmask 31744
    %v3974 = vsel %vm3973, %v3964, 0
    %v3976 = vsel %vm3973, %v3967, 0
    %v3978 = vsel %vm3973, %v3969, 0
    %v3980 = vsel %vm3973, %v3971, 0
    %vm3982 = vcmask 1043456
    %v3984 = vsel %vm3982, %v3972, 0
    %3986 = vmatpush.msra.mxu0 0.0
    %3987 = vmatpush.msra.mxu0 0.0
    %3988 = vmatpush.msra.mxu0 0.0
    %3989 = vmatpush.msra.mxu0 0.0
    %3990 = vmatpush.msra.mxu0 0.0
    %3991 = vmatpush.msra.mxu0 0.0
    %3992 = vmatpush.msra.mxu0 0.0
    %3993 = vmatpush.msra.mxu0 0.0
    %3994 = vmatpush.msra.mxu0 0.0
    %3995 = vmatpush.msra.mxu0 0.0
    %3996 = vmatpush.msra.mxu0 0.0
    %3997 = vmatpush.msra.mxu0 0.0
    %3998 = vmatpush.msra.mxu0 0.0
    %3999 = vmatpush.msra.mxu0 0.0
    %4000 = vmatpush.msra.mxu0 0.0
    %4001 = vmatpush.msra.mxu0 %v3984
    %4002 = vmatmul.f32.gmra.mxu0 %v3974
    %v4003 = vpop.f32.mrf.mxu0
    %v4004 = vadd.f32 0.0, %v4003
    %4005 = vmatmul.f32.gmra.mxu0 %v3976
    %v4006 = vpop.f32.mrf.mxu0
    %v4007 = vadd.f32 0.0, %v4006
    %4008 = vmatmul.f32.gmra.mxu0 %v3978
    %v4009 = vpop.f32.mrf.mxu0
    %v4010 = vadd.f32 0.0, %v4009
    %4011 = vmatmul.f32.gmra.mxu0 %v3980
    %v4012 = vpop.f32.mrf.mxu0
    %v4013 = vadd.f32 0.0, %v4012
    %4014 = vdwg.mxu0
    %v4015 = vld [vmem:[%s4] sm:$0xff]
    %v4016 = vld [vmem:[%s4 + $0x8] sm:$0xff]
    %v4017 = vld [vmem:[%s4 + $0x10] sm:$0xff]
    %v4018 = vld [vmem:[%s4 + $0x18] sm:$0xff]
    %v4019 = vld [vmem:[%s4 + $0x20] sm:$0xff]
    %v4020 = vld [vmem:[%s4 + $0x28] sm:$0xff]
    %v4021 = vld [vmem:[%s4 + $0x30] sm:$0xff]
    %v4022 = vld [vmem:[%s4 + $0x38] sm:$0xff]
    %v4023 = vld [vmem:[%s4 + $0x40] sm:$0xff]
    %v4024 = vld [vmem:[%s4 + $0x48] sm:$0xff]
    %v4025 = vld [vmem:[%s4 + $0x50] sm:$0xff]
    %v4026 = vld [vmem:[%s4 + $0x58] sm:$0xff]
    %v4027 = vld [vmem:[%s4 + $0x60] sm:$0xff]
    %v4028 = vld [vmem:[%s4 + $0x68] sm:$0xff]
    %v4029 = vld [vmem:[%s4 + $0x70] sm:$0xff]
    %v4030 = vld [vmem:[%s4 + $0x78] sm:$0xff]
    %v4031 = vld [vmem:[%s4 + $0x80] sm:$0xff]
    %v4032 = vld [vmem:[%s4 + $0x88] sm:$0xff]
    %v4033 = vld [vmem:[%s4 + $0x90] sm:$0xff]
    %v4034 = vld [vmem:[%s4 + $0x98] sm:$0xff]
    %v4035 = vld [vmem:[%s4 + $0xa0] sm:$0xff]
    %v4036 = vld [vmem:[%s4 + $0xa8] sm:$0xff]
    %v4037 = vld [vmem:[%s4 + $0xb0] sm:$0xff]
    %v4038 = vld [vmem:[%s4 + $0xb8] sm:$0xff]
    %v4039 = vld [vmem:[%s4 + $0xc0] sm:$0xff]
    %v4040 = vld [vmem:[%s4 + $0xc8] sm:$0xff]
    %v4041 = vld [vmem:[%s4 + $0xd0] sm:$0xff]
    %v4042 = vld [vmem:[%s4 + $0xd8] sm:$0xff]
    %v4043 = vld [vmem:[%s4 + $0xe0] sm:$0xff]
    %v4044 = vld [vmem:[%s4 + $0xe8] sm:$0xff]
    %v4045 = vld [vmem:[%s4 + $0xf0] sm:$0xff]
    %v4046 = vld [vmem:[%s4 + $0xf8] sm:$0xff]
    %v4047 = vld [vmem:[%s4 + $0x100] sm:$0xff]
    %v4048 = vld [vmem:[%s4 + $0x108] sm:$0xff]
    %v4049 = vld [vmem:[%s4 + $0x110] sm:$0xff]
    %v4050 = vld [vmem:[%s4 + $0x118] sm:$0xff]
    %v4051 = vld [vmem:[%s4 + $0x120] sm:$0xff]
    %v4052 = vld [vmem:[%s4 + $0x128] sm:$0xff]
    %v4053 = vld [vmem:[%s4 + $0x130] sm:$0xff]
    %v4054 = vld [vmem:[%s4 + $0x138] sm:$0xff]
    %v4055 = vld [vmem:[%s4 + $0x140] sm:$0xff]
    %v4056 = vld [vmem:[%s4 + $0x148] sm:$0xff]
    %v4057 = vld [vmem:[%s4 + $0x150] sm:$0xff]
    %v4058 = vld [vmem:[%s4 + $0x158] sm:$0xff]
    %v4059 = vld [vmem:[%s4 + $0x160] sm:$0xff]
    %v4060 = vld [vmem:[%s4 + $0x168] sm:$0xff]
    %v4061 = vld [vmem:[%s4 + $0x170] sm:$0xff]
    %v4062 = vld [vmem:[%s4 + $0x178] sm:$0xff]
    %v4063 = vld [vmem:[%s4 + $0x180] sm:$0xff]
    %v4064 = vld [vmem:[%s4 + $0x188] sm:$0xff]
    %v4065 = vld [vmem:[%s4 + $0x190] sm:$0xff]
    %v4066 = vld [vmem:[%s4 + $0x198] sm:$0xff]
    %v4067 = vld [vmem:[%s4 + $0x1a0] sm:$0xff]
    %v4068 = vld [vmem:[%s4 + $0x1a8] sm:$0xff]
    %v4069 = vld [vmem:[%s4 + $0x1b0] sm:$0xff]
    %v4070 = vld [vmem:[%s4 + $0x1b8] sm:$0xff]
    %v4071 = vld [vmem:[%s4 + $0x1c0] sm:$0xff]
    %v4072 = vld [vmem:[%s4 + $0x1c8] sm:$0xff]
    %v4073 = vld [vmem:[%s4 + $0x1d0] sm:$0xff]
    %v4074 = vld [vmem:[%s4 + $0x1d8] sm:$0xff]
    %v4075 = vld [vmem:[%s4 + $0x1e0] sm:$0xff]
    %v4076 = vld [vmem:[%s4 + $0x1e8] sm:$0xff]
    %v4077 = vld [vmem:[%s4 + $0x1f0] sm:$0xff]
    %v4078 = vld [vmem:[%s4 + $0x1f8] sm:$0xff]
    %v4080 = vsel %vm47, %v4015, 0
    %v4083 = vsel %vm47, %v4016, 0
    %v4086 = vsel %vm47, %v4017, 0
    %v4089 = vsel %vm47, %v4018, 0
    %v4092 = vsel %vm47, %v4019, 0
    %v4095 = vsel %vm47, %v4020, 0
    %v4098 = vsel %vm47, %v4021, 0
    %v4101 = vsel %vm47, %v4022, 0
    %v4104 = vsel %vm47, %v4023, 0
    %v4107 = vsel %vm47, %v4024, 0
    %v4110 = vsel %vm47, %v4025, 0
    %v4113 = vsel %vm47, %v4026, 0
    %v4116 = vsel %vm47, %v4027, 0
    %v4119 = vsel %vm47, %v4028, 0
    %v4122 = vsel %vm47, %v4029, 0
    %v4125 = vsel %vm47, %v4030, 0
    %v4128 = vsel %vm47, %v4031, 0
    %v4131 = vsel %vm47, %v4032, 0
    %v4134 = vsel %vm47, %v4033, 0
    %v4137 = vsel %vm47, %v4034, 0
    %v4140 = vsel %vm47, %v4035, 0
    %v4143 = vsel %vm47, %v4036, 0
    %v4146 = vsel %vm47, %v4037, 0
    %v4149 = vsel %vm47, %v4038, 0
    %v4152 = vsel %vm47, %v4039, 0
    %v4155 = vsel %vm47, %v4040, 0
    %v4158 = vsel %vm47, %v4041, 0
    %v4161 = vsel %vm47, %v4042, 0
    %v4164 = vsel %vm47, %v4043, 0
    %v4167 = vsel %vm47, %v4044, 0
    %v4170 = vsel %vm47, %v4045, 0
    %v4173 = vsel %vm47, %v4046, 0
    %v4176 = vsel %vm47, %v4047, 0
    %v4179 = vsel %vm47, %v4048, 0
    %v4182 = vsel %vm47, %v4049, 0
    %v4185 = vsel %vm47, %v4050, 0
    %v4188 = vsel %vm47, %v4051, 0
    %v4191 = vsel %vm47, %v4052, 0
    %v4194 = vsel %vm47, %v4053, 0
    %v4197 = vsel %vm47, %v4054, 0
    %v4200 = vsel %vm47, %v4055, 0
    %v4203 = vsel %vm47, %v4056, 0
    %v4206 = vsel %vm47, %v4057, 0
    %v4209 = vsel %vm47, %v4058, 0
    %v4212 = vsel %vm47, %v4059, 0
    %v4215 = vsel %vm47, %v4060, 0
    %v4218 = vsel %vm47, %v4061, 0
    %v4221 = vsel %vm47, %v4062, 0
    %v4224 = vsel %vm47, %v4063, 0
    %v4227 = vsel %vm47, %v4064, 0
    %v4230 = vsel %vm47, %v4065, 0
    %v4233 = vsel %vm47, %v4066, 0
    %v4236 = vsel %vm47, %v4067, 0
    %v4239 = vsel %vm47, %v4068, 0
    %v4242 = vsel %vm47, %v4069, 0
    %v4245 = vsel %vm47, %v4070, 0
    %v4248 = vsel %vm47, %v4071, 0
    %v4251 = vsel %vm47, %v4072, 0
    %v4254 = vsel %vm47, %v4073, 0
    %v4257 = vsel %vm47, %v4074, 0
    %v4260 = vsel %vm47, %v4075, 0
    %v4263 = vsel %vm47, %v4076, 0
    %v4266 = vsel %vm47, %v4077, 0
    %v4269 = vsel %vm47, %v4078, 0
    %4271 = vmatpush.msra.mxu0 0.0
    %4272 = vmatpush.msra.mxu0 0.0
    %4273 = vmatpush.msra.mxu0 0.0
    %4274 = vmatpush.msra.mxu0 0.0
    %4275 = vmatpush.msra.mxu0 0.0
    %4276 = vmatpush.msra.mxu0 0.0
    %4277 = vmatpush.msra.mxu0 0.0
    %4278 = vmatpush.msra.mxu0 0.0
    %4279 = vmatpush.msra.mxu0 0.0
    %4280 = vmatpush.msra.mxu0 0.0
    %4281 = vmatpush.msra.mxu0 0.0
    %4282 = vmatpush.msra.mxu0 0.0
    %4283 = vmatpush.msra.mxu0 %v4013
    %4284 = vmatpush.msra.mxu0 %v4010
    %4285 = vmatpush.msra.mxu0 %v4007
    %4286 = vmatpush.msra.mxu0 %v4004
    %4287 = vmatmul.f32.gmra.mxu0 %v4080
    %v4288 = vpop.f32.mrf.mxu0
    %v4289 = vadd.f32 0.0, %v4288
    %4290 = vmatmul.f32.gmra.mxu0 %v4083
    %v4291 = vpop.f32.mrf.mxu0
    %v4292 = vadd.f32 0.0, %v4291
    %4293 = vmatmul.f32.gmra.mxu0 %v4086
    %v4294 = vpop.f32.mrf.mxu0
    %v4295 = vadd.f32 0.0, %v4294
    %4296 = vmatmul.f32.gmra.mxu0 %v4089
    %v4297 = vpop.f32.mrf.mxu0
    %v4298 = vadd.f32 0.0, %v4297
    %4299 = vmatmul.f32.gmra.mxu0 %v4092
    %v4300 = vpop.f32.mrf.mxu0
    %v4301 = vadd.f32 0.0, %v4300
    %4302 = vmatmul.f32.gmra.mxu0 %v4095
    %v4303 = vpop.f32.mrf.mxu0
    %v4304 = vadd.f32 0.0, %v4303
    %4305 = vmatmul.f32.gmra.mxu0 %v4098
    %v4306 = vpop.f32.mrf.mxu0
    %v4307 = vadd.f32 0.0, %v4306
    %4308 = vmatmul.f32.gmra.mxu0 %v4101
    %v4309 = vpop.f32.mrf.mxu0
    %v4310 = vadd.f32 0.0, %v4309
    %4311 = vmatmul.f32.gmra.mxu0 %v4104
    %v4312 = vpop.f32.mrf.mxu0
    %v4313 = vadd.f32 0.0, %v4312
    %4314 = vmatmul.f32.gmra.mxu0 %v4107
    %v4315 = vpop.f32.mrf.mxu0
    %v4316 = vadd.f32 0.0, %v4315
    %4317 = vmatmul.f32.gmra.mxu0 %v4110
    %v4318 = vpop.f32.mrf.mxu0
    %v4319 = vadd.f32 0.0, %v4318
    %4320 = vmatmul.f32.gmra.mxu0 %v4113
    %v4321 = vpop.f32.mrf.mxu0
    %v4322 = vadd.f32 0.0, %v4321
    %4323 = vmatmul.f32.gmra.mxu0 %v4116
    %v4324 = vpop.f32.mrf.mxu0
    %v4325 = vadd.f32 0.0, %v4324
    %4326 = vmatmul.f32.gmra.mxu0 %v4119
    %v4327 = vpop.f32.mrf.mxu0
    %v4328 = vadd.f32 0.0, %v4327
    %4329 = vmatmul.f32.gmra.mxu0 %v4122
    %v4330 = vpop.f32.mrf.mxu0
    %v4331 = vadd.f32 0.0, %v4330
    %4332 = vmatmul.f32.gmra.mxu0 %v4125
    %v4333 = vpop.f32.mrf.mxu0
    %v4334 = vadd.f32 0.0, %v4333
    %4335 = vmatmul.f32.gmra.mxu0 %v4128
    %v4336 = vpop.f32.mrf.mxu0
    %v4337 = vadd.f32 0.0, %v4336
    %4338 = vmatmul.f32.gmra.mxu0 %v4131
    %v4339 = vpop.f32.mrf.mxu0
    %v4340 = vadd.f32 0.0, %v4339
    %4341 = vmatmul.f32.gmra.mxu0 %v4134
    %v4342 = vpop.f32.mrf.mxu0
    %v4343 = vadd.f32 0.0, %v4342
    %4344 = vmatmul.f32.gmra.mxu0 %v4137
    %v4345 = vpop.f32.mrf.mxu0
    %v4346 = vadd.f32 0.0, %v4345
    %4347 = vmatmul.f32.gmra.mxu0 %v4140
    %v4348 = vpop.f32.mrf.mxu0
    %v4349 = vadd.f32 0.0, %v4348
    %4350 = vmatmul.f32.gmra.mxu0 %v4143
    %v4351 = vpop.f32.mrf.mxu0
    %v4352 = vadd.f32 0.0, %v4351
    %4353 = vmatmul.f32.gmra.mxu0 %v4146
    %v4354 = vpop.f32.mrf.mxu0
    %v4355 = vadd.f32 0.0, %v4354
    %4356 = vmatmul.f32.gmra.mxu0 %v4149
    %v4357 = vpop.f32.mrf.mxu0
    %v4358 = vadd.f32 0.0, %v4357
    %4359 = vmatmul.f32.gmra.mxu0 %v4152
    %v4360 = vpop.f32.mrf.mxu0
    %v4361 = vadd.f32 0.0, %v4360
    %4362 = vmatmul.f32.gmra.mxu0 %v4155
    %v4363 = vpop.f32.mrf.mxu0
    %v4364 = vadd.f32 0.0, %v4363
    %4365 = vmatmul.f32.gmra.mxu0 %v4158
    %v4366 = vpop.f32.mrf.mxu0
    %v4367 = vadd.f32 0.0, %v4366
    %4368 = vmatmul.f32.gmra.mxu0 %v4161
    %v4369 = vpop.f32.mrf.mxu0
    %v4370 = vadd.f32 0.0, %v4369
    %4371 = vmatmul.f32.gmra.mxu0 %v4164
    %v4372 = vpop.f32.mrf.mxu0
    %v4373 = vadd.f32 0.0, %v4372
    %4374 = vmatmul.f32.gmra.mxu0 %v4167
    %v4375 = vpop.f32.mrf.mxu0
    %v4376 = vadd.f32 0.0, %v4375
    %4377 = vmatmul.f32.gmra.mxu0 %v4170
    %v4378 = vpop.f32.mrf.mxu0
    %v4379 = vadd.f32 0.0, %v4378
    %4380 = vmatmul.f32.gmra.mxu0 %v4173
    %v4381 = vpop.f32.mrf.mxu0
    %v4382 = vadd.f32 0.0, %v4381
    %4383 = vmatmul.f32.gmra.mxu0 %v4176
    %v4384 = vpop.f32.mrf.mxu0
    %v4385 = vadd.f32 0.0, %v4384
    %4386 = vmatmul.f32.gmra.mxu0 %v4179
    %v4387 = vpop.f32.mrf.mxu0
    %v4388 = vadd.f32 0.0, %v4387
    %4389 = vmatmul.f32.gmra.mxu0 %v4182
    %v4390 = vpop.f32.mrf.mxu0
    %v4391 = vadd.f32 0.0, %v4390
    %4392 = vmatmul.f32.gmra.mxu0 %v4185
    %v4393 = vpop.f32.mrf.mxu0
    %v4394 = vadd.f32 0.0, %v4393
    %4395 = vmatmul.f32.gmra.mxu0 %v4188
    %v4396 = vpop.f32.mrf.mxu0
    %v4397 = vadd.f32 0.0, %v4396
    %4398 = vmatmul.f32.gmra.mxu0 %v4191
    %v4399 = vpop.f32.mrf.mxu0
    %v4400 = vadd.f32 0.0, %v4399
    %4401 = vmatmul.f32.gmra.mxu0 %v4194
    %v4402 = vpop.f32.mrf.mxu0
    %v4403 = vadd.f32 0.0, %v4402
    %4404 = vmatmul.f32.gmra.mxu0 %v4197
    %v4405 = vpop.f32.mrf.mxu0
    %v4406 = vadd.f32 0.0, %v4405
    %4407 = vmatmul.f32.gmra.mxu0 %v4200
    %v4408 = vpop.f32.mrf.mxu0
    %v4409 = vadd.f32 0.0, %v4408
    %4410 = vmatmul.f32.gmra.mxu0 %v4203
    %v4411 = vpop.f32.mrf.mxu0
    %v4412 = vadd.f32 0.0, %v4411
    %4413 = vmatmul.f32.gmra.mxu0 %v4206
    %v4414 = vpop.f32.mrf.mxu0
    %v4415 = vadd.f32 0.0, %v4414
    %4416 = vmatmul.f32.gmra.mxu0 %v4209
    %v4417 = vpop.f32.mrf.mxu0
    %v4418 = vadd.f32 0.0, %v4417
    %4419 = vmatmul.f32.gmra.mxu0 %v4212
    %v4420 = vpop.f32.mrf.mxu0
    %v4421 = vadd.f32 0.0, %v4420
    %4422 = vmatmul.f32.gmra.mxu0 %v4215
    %v4423 = vpop.f32.mrf.mxu0
    %v4424 = vadd.f32 0.0, %v4423
    %4425 = vmatmul.f32.gmra.mxu0 %v4218
    %v4426 = vpop.f32.mrf.mxu0
    %v4427 = vadd.f32 0.0, %v4426
    %4428 = vmatmul.f32.gmra.mxu0 %v4221
    %v4429 = vpop.f32.mrf.mxu0
    %v4430 = vadd.f32 0.0, %v4429
    %4431 = vmatmul.f32.gmra.mxu0 %v4224
    %v4432 = vpop.f32.mrf.mxu0
    %v4433 = vadd.f32 0.0, %v4432
    %4434 = vmatmul.f32.gmra.mxu0 %v4227
    %v4435 = vpop.f32.mrf.mxu0
    %v4436 = vadd.f32 0.0, %v4435
    %4437 = vmatmul.f32.gmra.mxu0 %v4230
    %v4438 = vpop.f32.mrf.mxu0
    %v4439 = vadd.f32 0.0, %v4438
    %4440 = vmatmul.f32.gmra.mxu0 %v4233
    %v4441 = vpop.f32.mrf.mxu0
    %v4442 = vadd.f32 0.0, %v4441
    %4443 = vmatmul.f32.gmra.mxu0 %v4236
    %v4444 = vpop.f32.mrf.mxu0
    %v4445 = vadd.f32 0.0, %v4444
    %4446 = vmatmul.f32.gmra.mxu0 %v4239
    %v4447 = vpop.f32.mrf.mxu0
    %v4448 = vadd.f32 0.0, %v4447
    %4449 = vmatmul.f32.gmra.mxu0 %v4242
    %v4450 = vpop.f32.mrf.mxu0
    %v4451 = vadd.f32 0.0, %v4450
    %4452 = vmatmul.f32.gmra.mxu0 %v4245
    %v4453 = vpop.f32.mrf.mxu0
    %v4454 = vadd.f32 0.0, %v4453
    %4455 = vmatmul.f32.gmra.mxu0 %v4248
    %v4456 = vpop.f32.mrf.mxu0
    %v4457 = vadd.f32 0.0, %v4456
    %4458 = vmatmul.f32.gmra.mxu0 %v4251
    %v4459 = vpop.f32.mrf.mxu0
    %v4460 = vadd.f32 0.0, %v4459
    %4461 = vmatmul.f32.gmra.mxu0 %v4254
    %v4462 = vpop.f32.mrf.mxu0
    %v4463 = vadd.f32 0.0, %v4462
    %4464 = vmatmul.f32.gmra.mxu0 %v4257
    %v4465 = vpop.f32.mrf.mxu0
    %v4466 = vadd.f32 0.0, %v4465
    %4467 = vmatmul.f32.gmra.mxu0 %v4260
    %v4468 = vpop.f32.mrf.mxu0
    %v4469 = vadd.f32 0.0, %v4468
    %4470 = vmatmul.f32.gmra.mxu0 %v4263
    %v4471 = vpop.f32.mrf.mxu0
    %v4472 = vadd.f32 0.0, %v4471
    %4473 = vmatmul.f32.gmra.mxu0 %v4266
    %v4474 = vpop.f32.mrf.mxu0
    %v4475 = vadd.f32 0.0, %v4474
    %4476 = vmatmul.f32.gmra.mxu0 %v4269
    %v4477 = vpop.f32.mrf.mxu0
    %v4478 = vadd.f32 0.0, %v4477
    %4479 = vdwg.mxu0
    %4512 = vrot.lane.b32.xlu0 %v4385, 64
    %v4513 = vpop.permute.xlu0 %4512
    %4514 = vrot.lane.b32.xlu0 %v4388, 64
    %v4515 = vpop.permute.xlu0 %4514
    %4516 = vrot.lane.b32.xlu0 %v4391, 64
    %v4517 = vpop.permute.xlu0 %4516
    %4518 = vrot.lane.b32.xlu0 %v4394, 64
    %v4519 = vpop.permute.xlu0 %4518
    %4520 = vrot.lane.b32.xlu0 %v4397, 64
    %v4521 = vpop.permute.xlu0 %4520
    %4522 = vrot.lane.b32.xlu0 %v4400, 64
    %v4523 = vpop.permute.xlu0 %4522
    %4524 = vrot.lane.b32.xlu0 %v4403, 64
    %v4525 = vpop.permute.xlu0 %4524
    %4526 = vrot.lane.b32.xlu0 %v4406, 64
    %v4527 = vpop.permute.xlu0 %4526
    %4528 = vrot.lane.b32.xlu0 %v4409, 64
    %v4529 = vpop.permute.xlu0 %4528
    %4530 = vrot.lane.b32.xlu0 %v4412, 64
    %v4531 = vpop.permute.xlu0 %4530
    %4532 = vrot.lane.b32.xlu0 %v4415, 64
    %v4533 = vpop.permute.xlu0 %4532
    %4534 = vrot.lane.b32.xlu0 %v4418, 64
    %v4535 = vpop.permute.xlu0 %4534
    %4536 = vrot.lane.b32.xlu0 %v4421, 64
    %v4537 = vpop.permute.xlu0 %4536
    %4538 = vrot.lane.b32.xlu0 %v4424, 64
    %v4539 = vpop.permute.xlu0 %4538
    %4540 = vrot.lane.b32.xlu0 %v4427, 64
    %v4541 = vpop.permute.xlu0 %4540
    %4542 = vrot.lane.b32.xlu0 %v4430, 64
    %v4543 = vpop.permute.xlu0 %4542
    %4544 = vrot.lane.b32.xlu0 %v4433, 64
    %v4545 = vpop.permute.xlu0 %4544
    %4546 = vrot.lane.b32.xlu0 %v4436, 64
    %v4547 = vpop.permute.xlu0 %4546
    %4548 = vrot.lane.b32.xlu0 %v4439, 64
    %v4549 = vpop.permute.xlu0 %4548
    %4550 = vrot.lane.b32.xlu0 %v4442, 64
    %v4551 = vpop.permute.xlu0 %4550
    %4552 = vrot.lane.b32.xlu0 %v4445, 64
    %v4553 = vpop.permute.xlu0 %4552
    %4554 = vrot.lane.b32.xlu0 %v4448, 64
    %v4555 = vpop.permute.xlu0 %4554
    %4556 = vrot.lane.b32.xlu0 %v4451, 64
    %v4557 = vpop.permute.xlu0 %4556
    %4558 = vrot.lane.b32.xlu0 %v4454, 64
    %v4559 = vpop.permute.xlu0 %4558
    %4560 = vrot.lane.b32.xlu0 %v4457, 64
    %v4561 = vpop.permute.xlu0 %4560
    %4562 = vrot.lane.b32.xlu0 %v4460, 64
    %v4563 = vpop.permute.xlu0 %4562
    %4564 = vrot.lane.b32.xlu0 %v4463, 64
    %v4565 = vpop.permute.xlu0 %4564
    %4566 = vrot.lane.b32.xlu0 %v4466, 64
    %v4567 = vpop.permute.xlu0 %4566
    %4568 = vrot.lane.b32.xlu0 %v4469, 64
    %v4569 = vpop.permute.xlu0 %4568
    %4570 = vrot.lane.b32.xlu0 %v4472, 64
    %v4571 = vpop.permute.xlu0 %4570
    %4572 = vrot.lane.b32.xlu0 %v4475, 64
    %v4573 = vpop.permute.xlu0 %4572
    %4574 = vrot.lane.b32.xlu0 %v4478, 64
    %v4575 = vpop.permute.xlu0 %4574
    %vm4608 = vcmask 523264
    %v4609 = vsel %vm4608, %v4289, %v4513
    %v4610 = vsel %vm4608, %v4292, %v4515
    %v4611 = vsel %vm4608, %v4295, %v4517
    %v4612 = vsel %vm4608, %v4298, %v4519
    %v4613 = vsel %vm4608, %v4301, %v4521
    %v4614 = vsel %vm4608, %v4304, %v4523
    %v4615 = vsel %vm4608, %v4307, %v4525
    %v4616 = vsel %vm4608, %v4310, %v4527
    %v4617 = vsel %vm4608, %v4313, %v4529
    %v4618 = vsel %vm4608, %v4316, %v4531
    %v4619 = vsel %vm4608, %v4319, %v4533
    %v4620 = vsel %vm4608, %v4322, %v4535
    %v4621 = vsel %vm4608, %v4325, %v4537
    %v4622 = vsel %vm4608, %v4328, %v4539
    %v4623 = vsel %vm4608, %v4331, %v4541
    %v4624 = vsel %vm4608, %v4334, %v4543
    %v4625 = vsel %vm4608, %v4337, %v4545
    %v4626 = vsel %vm4608, %v4340, %v4547
    %v4627 = vsel %vm4608, %v4343, %v4549
    %v4628 = vsel %vm4608, %v4346, %v4551
    %v4629 = vsel %vm4608, %v4349, %v4553
    %v4630 = vsel %vm4608, %v4352, %v4555
    %v4631 = vsel %vm4608, %v4355, %v4557
    %v4632 = vsel %vm4608, %v4358, %v4559
    %v4633 = vsel %vm4608, %v4361, %v4561
    %v4634 = vsel %vm4608, %v4364, %v4563
    %v4635 = vsel %vm4608, %v4367, %v4565
    %v4636 = vsel %vm4608, %v4370, %v4567
    %v4637 = vsel %vm4608, %v4373, %v4569
    %v4638 = vsel %vm4608, %v4376, %v4571
    %v4639 = vsel %vm4608, %v4379, %v4573
    %v4640 = vsel %vm4608, %v4382, %v4575
    %4641 = vst [vmem:[#allocation2] sm:$0xff] %v4609
    %4642 = vst [vmem:[#allocation2 + $0x8] sm:$0xff] %v4610
    %4643 = vst [vmem:[#allocation2 + $0x10] sm:$0xff] %v4611
    %4644 = vst [vmem:[#allocation2 + $0x18] sm:$0xff] %v4612
    %4645 = vst [vmem:[#allocation2 + $0x20] sm:$0xff] %v4613
    %4646 = vst [vmem:[#allocation2 + $0x28] sm:$0xff] %v4614
    %4647 = vst [vmem:[#allocation2 + $0x30] sm:$0xff] %v4615
    %4648 = vst [vmem:[#allocation2 + $0x38] sm:$0xff] %v4616
    %4649 = vst [vmem:[#allocation2 + $0x40] sm:$0xff] %v4617
    %4650 = vst [vmem:[#allocation2 + $0x48] sm:$0xff] %v4618
    %4651 = vst [vmem:[#allocation2 + $0x50] sm:$0xff] %v4619
    %4652 = vst [vmem:[#allocation2 + $0x58] sm:$0xff] %v4620
    %4653 = vst [vmem:[#allocation2 + $0x60] sm:$0xff] %v4621
    %4654 = vst [vmem:[#allocation2 + $0x68] sm:$0xff] %v4622
    %4655 = vst [vmem:[#allocation2 + $0x70] sm:$0xff] %v4623
    %4656 = vst [vmem:[#allocation2 + $0x78] sm:$0xff] %v4624
    %4657 = vst [vmem:[#allocation2 + $0x80] sm:$0xff] %v4625
    %4658 = vst [vmem:[#allocation2 + $0x88] sm:$0xff] %v4626
    %4659 = vst [vmem:[#allocation2 + $0x90] sm:$0xff] %v4627
    %4660 = vst [vmem:[#allocation2 + $0x98] sm:$0xff] %v4628
    %4661 = vst [vmem:[#allocation2 + $0xa0] sm:$0xff] %v4629
    %4662 = vst [vmem:[#allocation2 + $0xa8] sm:$0xff] %v4630
    %4663 = vst [vmem:[#allocation2 + $0xb0] sm:$0xff] %v4631
    %4664 = vst [vmem:[#allocation2 + $0xb8] sm:$0xff] %v4632
    %4665 = vst [vmem:[#allocation2 + $0xc0] sm:$0xff] %v4633
    %4666 = vst [vmem:[#allocation2 + $0xc8] sm:$0xff] %v4634
    %4667 = vst [vmem:[#allocation2 + $0xd0] sm:$0xff] %v4635
    %4668 = vst [vmem:[#allocation2 + $0xd8] sm:$0xff] %v4636
    %4669 = vst [vmem:[#allocation2 + $0xe0] sm:$0xff] %v4637
    %4670 = vst [vmem:[#allocation2 + $0xe8] sm:$0xff] %v4638
    %4671 = vst [vmem:[#allocation2 + $0xf0] sm:$0xff] %v4639
    %4672 = vst [vmem:[#allocation2 + $0xf8] sm:$0xff] %v4640
    %v4674 = vsel %vm47, %v3886, 0
    %v4677 = vsel %vm47, %v3819, 0
    %v4680 = vsel %vm47, %v3820, 0
    %4682 = vmatpush.xpose.msra.mxu0 0.0
    %4683 = vmatpush.xpose.msra.mxu0 0.0
    %4684 = vmatpush.xpose.msra.mxu0 0.0
    %4685 = vmatpush.xpose.msra.mxu0 0.0
    %4686 = vmatpush.xpose.msra.mxu0 0.0
    %4687 = vmatpush.xpose.msra.mxu0 0.0
    %4688 = vmatpush.xpose.msra.mxu0 0.0
    %4689 = vmatpush.xpose.msra.mxu0 0.0
    %4690 = vmatpush.xpose.msra.mxu0 0.0
    %4691 = vmatpush.xpose.msra.mxu0 0.0
    %4692 = vmatpush.xpose.msra.mxu0 0.0
    %4693 = vmatpush.xpose.msra.mxu0 0.0
    %4694 = vmatpush.xpose.msra.mxu0 0.0
    %4695 = vmatpush.xpose.msra.mxu0 0.0
    %4696 = vmatpush.xpose.msra.mxu0 %v4680
    %4697 = vmatpush.xpose.msra.mxu0 %v4677
    %4698 = vmatmul.f32.gmra.mxu0 %v4674
    %v4699 = vpop.f32.mrf.mxu0
    %v4700 = vadd.f32 0.0, %v4699
    %4701 = vdwg.mxu0
    %v4702 = vsel %vm841, %v4700, 0.0
    %v4703 = vrot.slane %v4702, 4
    %v4704 = vadd.f32 %v4702, %v4703
    %v4705 = vrot.slane %v4704, 2
    %v4706 = vadd.f32 %v4704, %v4705
    %v4707 = vrot.slane %v4706, 1
    %v4708 = vadd.f32 %v4706, %v4707
    %v4709 = vmul.f32 %v4708, %v3930
    %v4710 = vsub.f32 %v4700, %v4709
    %v4711 = vmul.f32 %v4710, %v4710
    %v4712 = vsel %vm841, %v4711, 0.0
    %v4713 = vrot.slane %v4712, 4
    %v4714 = vadd.f32 %v4712, %v4713
    %v4715 = vrot.slane %v4714, 2
    %v4716 = vadd.f32 %v4714, %v4715
    %v4717 = vrot.slane %v4716, 1
    %v4718 = vadd.f32 %v4716, %v4717
    %v4719 = vmul.f32 %v4718, %v3930
    %v4720 = vadd.f32 %v4719, 1e-06
    %v4721 = vrsqrt.pop %v4720
    %v4722 = vmul.f32 %v4721, %v4720
    %v4723 = vmul.f32 %v4722, %v4721
    %v4724 = vmul.f32 0.5, %v4723
    %v4725 = vsub.f32 1.5, %v4724
    %v4726 = vmul.f32 %v4721, %v4725
    %vm4727 = vweird.f32 %v4720
    %vm4728 = vweird.f32 %v4721
    %vm4729 = vmor %vm4727, %vm4728
    %v4730 = vsel %vm4729, %v4721, %v4726
    %v4731 = vmul.f32 %v4710, %v4730
    %v4732 = vmul.f32 %v4731, %v3957
    %v4733 = vadd.f32 %v4732, %v3962
    %4735 = vrot.lane.b32.xlu0 %v4733, 124
    %v4736 = vpop.permute.xlu0 %4735
    %4737 = vrot.lane.b32.xlu0 %v4733, 120
    %v4738 = vpop.permute.xlu0 %4737
    %4739 = vrot.lane.b32.xlu0 %v4733, 116
    %v4740 = vpop.permute.xlu0 %4739
    %v4741 = vld [vmem:[%s3] sm:$0xf]
    %v4742 = vsel %vm3973, %v4733, 0
    %v4744 = vsel %vm3973, %v4736, 0
    %v4746 = vsel %vm3973, %v4738, 0
    %v4748 = vsel %vm3973, %v4740, 0
    %v4751 = vsel %vm3982, %v4741, 0
    %4753 = vmatpush.msra.mxu0 0.0
    %4754 = vmatpush.msra.mxu0 0.0
    %4755 = vmatpush.msra.mxu0 0.0
    %4756 = vmatpush.msra.mxu0 0.0
    %4757 = vmatpush.msra.mxu0 0.0
    %4758 = vmatpush.msra.mxu0 0.0
    %4759 = vmatpush.msra.mxu0 0.0
    %4760 = vmatpush.msra.mxu0 0.0
    %4761 = vmatpush.msra.mxu0 0.0
    %4762 = vmatpush.msra.mxu0 0.0
    %4763 = vmatpush.msra.mxu0 0.0
    %4764 = vmatpush.msra.mxu0 0.0
    %4765 = vmatpush.msra.mxu0 0.0
    %4766 = vmatpush.msra.mxu0 0.0
    %4767 = vmatpush.msra.mxu0 0.0
    %4768 = vmatpush.msra.mxu0 %v4751
    %4769 = vmatmul.f32.gmra.mxu0 %v4742
    %v4770 = vpop.f32.mrf.mxu0
    %v4771 = vadd.f32 0.0, %v4770
    %4772 = vmatmul.f32.gmra.mxu0 %v4744
    %v4773 = vpop.f32.mrf.mxu0
    %v4774 = vadd.f32 0.0, %v4773
    %4775 = vmatmul.f32.gmra.mxu0 %v4746
    %v4776 = vpop.f32.mrf.mxu0
    %v4777 = vadd.f32 0.0, %v4776
    %4778 = vmatmul.f32.gmra.mxu0 %v4748
    %v4779 = vpop.f32.mrf.mxu0
    %v4780 = vadd.f32 0.0, %v4779
    %4781 = vdwg.mxu0
    %v4782 = vld [vmem:[%s4] sm:$0xff]
    %v4783 = vld [vmem:[%s4 + $0x8] sm:$0xff]
    %v4784 = vld [vmem:[%s4 + $0x10] sm:$0xff]
    %v4785 = vld [vmem:[%s4 + $0x18] sm:$0xff]
    %v4786 = vld [vmem:[%s4 + $0x20] sm:$0xff]
    %v4787 = vld [vmem:[%s4 + $0x28] sm:$0xff]
    %v4788 = vld [vmem:[%s4 + $0x30] sm:$0xff]
    %v4789 = vld [vmem:[%s4 + $0x38] sm:$0xff]
    %v4790 = vld [vmem:[%s4 + $0x40] sm:$0xff]
    %v4791 = vld [vmem:[%s4 + $0x48] sm:$0xff]
    %v4792 = vld [vmem:[%s4 + $0x50] sm:$0xff]
    %v4793 = vld [vmem:[%s4 + $0x58] sm:$0xff]
    %v4794 = vld [vmem:[%s4 + $0x60] sm:$0xff]
    %v4795 = vld [vmem:[%s4 + $0x68] sm:$0xff]
    %v4796 = vld [vmem:[%s4 + $0x70] sm:$0xff]
    %v4797 = vld [vmem:[%s4 + $0x78] sm:$0xff]
    %v4798 = vld [vmem:[%s4 + $0x80] sm:$0xff]
    %v4799 = vld [vmem:[%s4 + $0x88] sm:$0xff]
    %v4800 = vld [vmem:[%s4 + $0x90] sm:$0xff]
    %v4801 = vld [vmem:[%s4 + $0x98] sm:$0xff]
    %v4802 = vld [vmem:[%s4 + $0xa0] sm:$0xff]
    %v4803 = vld [vmem:[%s4 + $0xa8] sm:$0xff]
    %v4804 = vld [vmem:[%s4 + $0xb0] sm:$0xff]
    %v4805 = vld [vmem:[%s4 + $0xb8] sm:$0xff]
    %v4806 = vld [vmem:[%s4 + $0xc0] sm:$0xff]
    %v4807 = vld [vmem:[%s4 + $0xc8] sm:$0xff]
    %v4808 = vld [vmem:[%s4 + $0xd0] sm:$0xff]
    %v4809 = vld [vmem:[%s4 + $0xd8] sm:$0xff]
    %v4810 = vld [vmem:[%s4 + $0xe0] sm:$0xff]
    %v4811 = vld [vmem:[%s4 + $0xe8] sm:$0xff]
    %v4812 = vld [vmem:[%s4 + $0xf0] sm:$0xff]
    %v4813 = vld [vmem:[%s4 + $0xf8] sm:$0xff]
    %v4814 = vld [vmem:[%s4 + $0x100] sm:$0xff]
    %v4815 = vld [vmem:[%s4 + $0x108] sm:$0xff]
    %v4816 = vld [vmem:[%s4 + $0x110] sm:$0xff]
    %v4817 = vld [vmem:[%s4 + $0x118] sm:$0xff]
    %v4818 = vld [vmem:[%s4 + $0x120] sm:$0xff]
    %v4819 = vld [vmem:[%s4 + $0x128] sm:$0xff]
    %v4820 = vld [vmem:[%s4 + $0x130] sm:$0xff]
    %v4821 = vld [vmem:[%s4 + $0x138] sm:$0xff]
    %v4822 = vld [vmem:[%s4 + $0x140] sm:$0xff]
    %v4823 = vld [vmem:[%s4 + $0x148] sm:$0xff]
    %v4824 = vld [vmem:[%s4 + $0x150] sm:$0xff]
    %v4825 = vld [vmem:[%s4 + $0x158] sm:$0xff]
    %v4826 = vld [vmem:[%s4 + $0x160] sm:$0xff]
    %v4827 = vld [vmem:[%s4 + $0x168] sm:$0xff]
    %v4828 = vld [vmem:[%s4 + $0x170] sm:$0xff]
    %v4829 = vld [vmem:[%s4 + $0x178] sm:$0xff]
    %v4830 = vld [vmem:[%s4 + $0x180] sm:$0xff]
    %v4831 = vld [vmem:[%s4 + $0x188] sm:$0xff]
    %v4832 = vld [vmem:[%s4 + $0x190] sm:$0xff]
    %v4833 = vld [vmem:[%s4 + $0x198] sm:$0xff]
    %v4834 = vld [vmem:[%s4 + $0x1a0] sm:$0xff]
    %v4835 = vld [vmem:[%s4 + $0x1a8] sm:$0xff]
    %v4836 = vld [vmem:[%s4 + $0x1b0] sm:$0xff]
    %v4837 = vld [vmem:[%s4 + $0x1b8] sm:$0xff]
    %v4838 = vld [vmem:[%s4 + $0x1c0] sm:$0xff]
    %v4839 = vld [vmem:[%s4 + $0x1c8] sm:$0xff]
    %v4840 = vld [vmem:[%s4 + $0x1d0] sm:$0xff]
    %v4841 = vld [vmem:[%s4 + $0x1d8] sm:$0xff]
    %v4842 = vld [vmem:[%s4 + $0x1e0] sm:$0xff]
    %v4843 = vld [vmem:[%s4 + $0x1e8] sm:$0xff]
    %v4844 = vld [vmem:[%s4 + $0x1f0] sm:$0xff]
    %v4845 = vld [vmem:[%s4 + $0x1f8] sm:$0xff]
    %v4847 = vsel %vm47, %v4782, 0
    %v4850 = vsel %vm47, %v4783, 0
    %v4853 = vsel %vm47, %v4784, 0
    %v4856 = vsel %vm47, %v4785, 0
    %v4859 = vsel %vm47, %v4786, 0
    %v4862 = vsel %vm47, %v4787, 0
    %v4865 = vsel %vm47, %v4788, 0
    %v4868 = vsel %vm47, %v4789, 0
    %v4871 = vsel %vm47, %v4790, 0
    %v4874 = vsel %vm47, %v4791, 0
    %v4877 = vsel %vm47, %v4792, 0
    %v4880 = vsel %vm47, %v4793, 0
    %v4883 = vsel %vm47, %v4794, 0
    %v4886 = vsel %vm47, %v4795, 0
    %v4889 = vsel %vm47, %v4796, 0
    %v4892 = vsel %vm47, %v4797, 0
    %v4895 = vsel %vm47, %v4798, 0
    %v4898 = vsel %vm47, %v4799, 0
    %v4901 = vsel %vm47, %v4800, 0
    %v4904 = vsel %vm47, %v4801, 0
    %v4907 = vsel %vm47, %v4802, 0
    %v4910 = vsel %vm47, %v4803, 0
    %v4913 = vsel %vm47, %v4804, 0
    %v4916 = vsel %vm47, %v4805, 0
    %v4919 = vsel %vm47, %v4806, 0
    %v4922 = vsel %vm47, %v4807, 0
    %v4925 = vsel %vm47, %v4808, 0
    %v4928 = vsel %vm47, %v4809, 0
    %v4931 = vsel %vm47, %v4810, 0
    %v4934 = vsel %vm47, %v4811, 0
    %v4937 = vsel %vm47, %v4812, 0
    %v4940 = vsel %vm47, %v4813, 0
    %v4943 = vsel %vm47, %v4814, 0
    %v4946 = vsel %vm47, %v4815, 0
    %v4949 = vsel %vm47, %v4816, 0
    %v4952 = vsel %vm47, %v4817, 0
    %v4955 = vsel %vm47, %v4818, 0
    %v4958 = vsel %vm47, %v4819, 0
    %v4961 = vsel %vm47, %v4820, 0
    %v4964 = vsel %vm47, %v4821, 0
    %v4967 = vsel %vm47, %v4822, 0
    %v4970 = vsel %vm47, %v4823, 0
    %v4973 = vsel %vm47, %v4824, 0
    %v4976 = vsel %vm47, %v4825, 0
    %v4979 = vsel %vm47, %v4826, 0
    %v4982 = vsel %vm47, %v4827, 0
    %v4985 = vsel %vm47, %v4828, 0
    %v4988 = vsel %vm47, %v4829, 0
    %v4991 = vsel %vm47, %v4830, 0
    %v4994 = vsel %vm47, %v4831, 0
    %v4997 = vsel %vm47, %v4832, 0
    %v5000 = vsel %vm47, %v4833, 0
    %v5003 = vsel %vm47, %v4834, 0
    %v5006 = vsel %vm47, %v4835, 0
    %v5009 = vsel %vm47, %v4836, 0
    %v5012 = vsel %vm47, %v4837, 0
    %v5015 = vsel %vm47, %v4838, 0
    %v5018 = vsel %vm47, %v4839, 0
    %v5021 = vsel %vm47, %v4840, 0
    %v5024 = vsel %vm47, %v4841, 0
    %v5027 = vsel %vm47, %v4842, 0
    %v5030 = vsel %vm47, %v4843, 0
    %v5033 = vsel %vm47, %v4844, 0
    %v5036 = vsel %vm47, %v4845, 0
    %5038 = vmatpush.msra.mxu0 0.0
    %5039 = vmatpush.msra.mxu0 0.0
    %5040 = vmatpush.msra.mxu0 0.0
    %5041 = vmatpush.msra.mxu0 0.0
    %5042 = vmatpush.msra.mxu0 0.0
    %5043 = vmatpush.msra.mxu0 0.0
    %5044 = vmatpush.msra.mxu0 0.0
    %5045 = vmatpush.msra.mxu0 0.0
    %5046 = vmatpush.msra.mxu0 0.0
    %5047 = vmatpush.msra.mxu0 0.0
    %5048 = vmatpush.msra.mxu0 0.0
    %5049 = vmatpush.msra.mxu0 0.0
    %5050 = vmatpush.msra.mxu0 %v4780
    %5051 = vmatpush.msra.mxu0 %v4777
    %5052 = vmatpush.msra.mxu0 %v4774
    %5053 = vmatpush.msra.mxu0 %v4771
    %5054 = vmatmul.f32.gmra.mxu0 %v4847
    %v5055 = vpop.f32.mrf.mxu0
    %v5056 = vadd.f32 0.0, %v5055
    %5057 = vmatmul.f32.gmra.mxu0 %v4850
    %v5058 = vpop.f32.mrf.mxu0
    %v5059 = vadd.f32 0.0, %v5058
    %5060 = vmatmul.f32.gmra.mxu0 %v4853
    %v5061 = vpop.f32.mrf.mxu0
    %v5062 = vadd.f32 0.0, %v5061
    %5063 = vmatmul.f32.gmra.mxu0 %v4856
    %v5064 = vpop.f32.mrf.mxu0
    %v5065 = vadd.f32 0.0, %v5064
    %5066 = vmatmul.f32.gmra.mxu0 %v4859
    %v5067 = vpop.f32.mrf.mxu0
    %v5068 = vadd.f32 0.0, %v5067
    %5069 = vmatmul.f32.gmra.mxu0 %v4862
    %v5070 = vpop.f32.mrf.mxu0
    %v5071 = vadd.f32 0.0, %v5070
    %5072 = vmatmul.f32.gmra.mxu0 %v4865
    %v5073 = vpop.f32.mrf.mxu0
    %v5074 = vadd.f32 0.0, %v5073
    %5075 = vmatmul.f32.gmra.mxu0 %v4868
    %v5076 = vpop.f32.mrf.mxu0
    %v5077 = vadd.f32 0.0, %v5076
    %5078 = vmatmul.f32.gmra.mxu0 %v4871
    %v5079 = vpop.f32.mrf.mxu0
    %v5080 = vadd.f32 0.0, %v5079
    %5081 = vmatmul.f32.gmra.mxu0 %v4874
    %v5082 = vpop.f32.mrf.mxu0
    %v5083 = vadd.f32 0.0, %v5082
    %5084 = vmatmul.f32.gmra.mxu0 %v4877
    %v5085 = vpop.f32.mrf.mxu0
    %v5086 = vadd.f32 0.0, %v5085
    %5087 = vmatmul.f32.gmra.mxu0 %v4880
    %v5088 = vpop.f32.mrf.mxu0
    %v5089 = vadd.f32 0.0, %v5088
    %5090 = vmatmul.f32.gmra.mxu0 %v4883
    %v5091 = vpop.f32.mrf.mxu0
    %v5092 = vadd.f32 0.0, %v5091
    %5093 = vmatmul.f32.gmra.mxu0 %v4886
    %v5094 = vpop.f32.mrf.mxu0
    %v5095 = vadd.f32 0.0, %v5094
    %5096 = vmatmul.f32.gmra.mxu0 %v4889
    %v5097 = vpop.f32.mrf.mxu0
    %v5098 = vadd.f32 0.0, %v5097
    %5099 = vmatmul.f32.gmra.mxu0 %v4892
    %v5100 = vpop.f32.mrf.mxu0
    %v5101 = vadd.f32 0.0, %v5100
    %5102 = vmatmul.f32.gmra.mxu0 %v4895
    %v5103 = vpop.f32.mrf.mxu0
    %v5104 = vadd.f32 0.0, %v5103
    %5105 = vmatmul.f32.gmra.mxu0 %v4898
    %v5106 = vpop.f32.mrf.mxu0
    %v5107 = vadd.f32 0.0, %v5106
    %5108 = vmatmul.f32.gmra.mxu0 %v4901
    %v5109 = vpop.f32.mrf.mxu0
    %v5110 = vadd.f32 0.0, %v5109
    %5111 = vmatmul.f32.gmra.mxu0 %v4904
    %v5112 = vpop.f32.mrf.mxu0
    %v5113 = vadd.f32 0.0, %v5112
    %5114 = vmatmul.f32.gmra.mxu0 %v4907
    %v5115 = vpop.f32.mrf.mxu0
    %v5116 = vadd.f32 0.0, %v5115
    %5117 = vmatmul.f32.gmra.mxu0 %v4910
    %v5118 = vpop.f32.mrf.mxu0
    %v5119 = vadd.f32 0.0, %v5118
    %5120 = vmatmul.f32.gmra.mxu0 %v4913
    %v5121 = vpop.f32.mrf.mxu0
    %v5122 = vadd.f32 0.0, %v5121
    %5123 = vmatmul.f32.gmra.mxu0 %v4916
    %v5124 = vpop.f32.mrf.mxu0
    %v5125 = vadd.f32 0.0, %v5124
    %5126 = vmatmul.f32.gmra.mxu0 %v4919
    %v5127 = vpop.f32.mrf.mxu0
    %v5128 = vadd.f32 0.0, %v5127
    %5129 = vmatmul.f32.gmra.mxu0 %v4922
    %v5130 = vpop.f32.mrf.mxu0
    %v5131 = vadd.f32 0.0, %v5130
    %5132 = vmatmul.f32.gmra.mxu0 %v4925
    %v5133 = vpop.f32.mrf.mxu0
    %v5134 = vadd.f32 0.0, %v5133
    %5135 = vmatmul.f32.gmra.mxu0 %v4928
    %v5136 = vpop.f32.mrf.mxu0
    %v5137 = vadd.f32 0.0, %v5136
    %5138 = vmatmul.f32.gmra.mxu0 %v4931
    %v5139 = vpop.f32.mrf.mxu0
    %v5140 = vadd.f32 0.0, %v5139
    %5141 = vmatmul.f32.gmra.mxu0 %v4934
    %v5142 = vpop.f32.mrf.mxu0
    %v5143 = vadd.f32 0.0, %v5142
    %5144 = vmatmul.f32.gmra.mxu0 %v4937
    %v5145 = vpop.f32.mrf.mxu0
    %v5146 = vadd.f32 0.0, %v5145
    %5147 = vmatmul.f32.gmra.mxu0 %v4940
    %v5148 = vpop.f32.mrf.mxu0
    %v5149 = vadd.f32 0.0, %v5148
    %5150 = vmatmul.f32.gmra.mxu0 %v4943
    %v5151 = vpop.f32.mrf.mxu0
    %v5152 = vadd.f32 0.0, %v5151
    %5153 = vmatmul.f32.gmra.mxu0 %v4946
    %v5154 = vpop.f32.mrf.mxu0
    %v5155 = vadd.f32 0.0, %v5154
    %5156 = vmatmul.f32.gmra.mxu0 %v4949
    %v5157 = vpop.f32.mrf.mxu0
    %v5158 = vadd.f32 0.0, %v5157
    %5159 = vmatmul.f32.gmra.mxu0 %v4952
    %v5160 = vpop.f32.mrf.mxu0
    %v5161 = vadd.f32 0.0, %v5160
    %5162 = vmatmul.f32.gmra.mxu0 %v4955
    %v5163 = vpop.f32.mrf.mxu0
    %v5164 = vadd.f32 0.0, %v5163
    %5165 = vmatmul.f32.gmra.mxu0 %v4958
    %v5166 = vpop.f32.mrf.mxu0
    %v5167 = vadd.f32 0.0, %v5166
    %5168 = vmatmul.f32.gmra.mxu0 %v4961
    %v5169 = vpop.f32.mrf.mxu0
    %v5170 = vadd.f32 0.0, %v5169
    %5171 = vmatmul.f32.gmra.mxu0 %v4964
    %v5172 = vpop.f32.mrf.mxu0
    %v5173 = vadd.f32 0.0, %v5172
    %5174 = vmatmul.f32.gmra.mxu0 %v4967
    %v5175 = vpop.f32.mrf.mxu0
    %v5176 = vadd.f32 0.0, %v5175
    %5177 = vmatmul.f32.gmra.mxu0 %v4970
    %v5178 = vpop.f32.mrf.mxu0
    %v5179 = vadd.f32 0.0, %v5178
    %5180 = vmatmul.f32.gmra.mxu0 %v4973
    %v5181 = vpop.f32.mrf.mxu0
    %v5182 = vadd.f32 0.0, %v5181
    %5183 = vmatmul.f32.gmra.mxu0 %v4976
    %v5184 = vpop.f32.mrf.mxu0
    %v5185 = vadd.f32 0.0, %v5184
    %5186 = vmatmul.f32.gmra.mxu0 %v4979
    %v5187 = vpop.f32.mrf.mxu0
    %v5188 = vadd.f32 0.0, %v5187
    %5189 = vmatmul.f32.gmra.mxu0 %v4982
    %v5190 = vpop.f32.mrf.mxu0
    %v5191 = vadd.f32 0.0, %v5190
    %5192 = vmatmul.f32.gmra.mxu0 %v4985
    %v5193 = vpop.f32.mrf.mxu0
    %v5194 = vadd.f32 0.0, %v5193
    %5195 = vmatmul.f32.gmra.mxu0 %v4988
    %v5196 = vpop.f32.mrf.mxu0
    %v5197 = vadd.f32 0.0, %v5196
    %5198 = vmatmul.f32.gmra.mxu0 %v4991
    %v5199 = vpop.f32.mrf.mxu0
    %v5200 = vadd.f32 0.0, %v5199
    %5201 = vmatmul.f32.gmra.mxu0 %v4994
    %v5202 = vpop.f32.mrf.mxu0
    %v5203 = vadd.f32 0.0, %v5202
    %5204 = vmatmul.f32.gmra.mxu0 %v4997
    %v5205 = vpop.f32.mrf.mxu0
    %v5206 = vadd.f32 0.0, %v5205
    %5207 = vmatmul.f32.gmra.mxu0 %v5000
    %v5208 = vpop.f32.mrf.mxu0
    %v5209 = vadd.f32 0.0, %v5208
    %5210 = vmatmul.f32.gmra.mxu0 %v5003
    %v5211 = vpop.f32.mrf.mxu0
    %v5212 = vadd.f32 0.0, %v5211
    %5213 = vmatmul.f32.gmra.mxu0 %v5006
    %v5214 = vpop.f32.mrf.mxu0
    %v5215 = vadd.f32 0.0, %v5214
    %5216 = vmatmul.f32.gmra.mxu0 %v5009
    %v5217 = vpop.f32.mrf.mxu0
    %v5218 = vadd.f32 0.0, %v5217
    %5219 = vmatmul.f32.gmra.mxu0 %v5012
    %v5220 = vpop.f32.mrf.mxu0
    %v5221 = vadd.f32 0.0, %v5220
    %5222 = vmatmul.f32.gmra.mxu0 %v5015
    %v5223 = vpop.f32.mrf.mxu0
    %v5224 = vadd.f32 0.0, %v5223
    %5225 = vmatmul.f32.gmra.mxu0 %v5018
    %v5226 = vpop.f32.mrf.mxu0
    %v5227 = vadd.f32 0.0, %v5226
    %5228 = vmatmul.f32.gmra.mxu0 %v5021
    %v5229 = vpop.f32.mrf.mxu0
    %v5230 = vadd.f32 0.0, %v5229
    %5231 = vmatmul.f32.gmra.mxu0 %v5024
    %v5232 = vpop.f32.mrf.mxu0
    %v5233 = vadd.f32 0.0, %v5232
    %5234 = vmatmul.f32.gmra.mxu0 %v5027
    %v5235 = vpop.f32.mrf.mxu0
    %v5236 = vadd.f32 0.0, %v5235
    %5237 = vmatmul.f32.gmra.mxu0 %v5030
    %v5238 = vpop.f32.mrf.mxu0
    %v5239 = vadd.f32 0.0, %v5238
    %5240 = vmatmul.f32.gmra.mxu0 %v5033
    %v5241 = vpop.f32.mrf.mxu0
    %v5242 = vadd.f32 0.0, %v5241
    %5243 = vmatmul.f32.gmra.mxu0 %v5036
    %v5244 = vpop.f32.mrf.mxu0
    %v5245 = vadd.f32 0.0, %v5244
    %5246 = vdwg.mxu0
    %5279 = vrot.lane.b32.xlu0 %v5152, 64
    %v5280 = vpop.permute.xlu0 %5279
    %5281 = vrot.lane.b32.xlu0 %v5155, 64
    %v5282 = vpop.permute.xlu0 %5281
    %5283 = vrot.lane.b32.xlu0 %v5158, 64
    %v5284 = vpop.permute.xlu0 %5283
    %5285 = vrot.lane.b32.xlu0 %v5161, 64
    %v5286 = vpop.permute.xlu0 %5285
    %5287 = vrot.lane.b32.xlu0 %v5164, 64
    %v5288 = vpop.permute.xlu0 %5287
    %5289 = vrot.lane.b32.xlu0 %v5167, 64
    %v5290 = vpop.permute.xlu0 %5289
    %5291 = vrot.lane.b32.xlu0 %v5170, 64
    %v5292 = vpop.permute.xlu0 %5291
    %5293 = vrot.lane.b32.xlu0 %v5173, 64
    %v5294 = vpop.permute.xlu0 %5293
    %5295 = vrot.lane.b32.xlu0 %v5176, 64
    %v5296 = vpop.permute.xlu0 %5295
    %5297 = vrot.lane.b32.xlu0 %v5179, 64
    %v5298 = vpop.permute.xlu0 %5297
    %5299 = vrot.lane.b32.xlu0 %v5182, 64
    %v5300 = vpop.permute.xlu0 %5299
    %5301 = vrot.lane.b32.xlu0 %v5185, 64
    %v5302 = vpop.permute.xlu0 %5301
    %5303 = vrot.lane.b32.xlu0 %v5188, 64
    %v5304 = vpop.permute.xlu0 %5303
    %5305 = vrot.lane.b32.xlu0 %v5191, 64
    %v5306 = vpop.permute.xlu0 %5305
    %5307 = vrot.lane.b32.xlu0 %v5194, 64
    %v5308 = vpop.permute.xlu0 %5307
    %5309 = vrot.lane.b32.xlu0 %v5197, 64
    %v5310 = vpop.permute.xlu0 %5309
    %5311 = vrot.lane.b32.xlu0 %v5200, 64
    %v5312 = vpop.permute.xlu0 %5311
    %5313 = vrot.lane.b32.xlu0 %v5203, 64
    %v5314 = vpop.permute.xlu0 %5313
    %5315 = vrot.lane.b32.xlu0 %v5206, 64
    %v5316 = vpop.permute.xlu0 %5315
    %5317 = vrot.lane.b32.xlu0 %v5209, 64
    %v5318 = vpop.permute.xlu0 %5317
    %5319 = vrot.lane.b32.xlu0 %v5212, 64
    %v5320 = vpop.permute.xlu0 %5319
    %5321 = vrot.lane.b32.xlu0 %v5215, 64
    %v5322 = vpop.permute.xlu0 %5321
    %5323 = vrot.lane.b32.xlu0 %v5218, 64
    %v5324 = vpop.permute.xlu0 %5323
    %5325 = vrot.lane.b32.xlu0 %v5221, 64
    %v5326 = vpop.permute.xlu0 %5325
    %5327 = vrot.lane.b32.xlu0 %v5224, 64
    %v5328 = vpop.permute.xlu0 %5327
    %5329 = vrot.lane.b32.xlu0 %v5227, 64
    %v5330 = vpop.permute.xlu0 %5329
    %5331 = vrot.lane.b32.xlu0 %v5230, 64
    %v5332 = vpop.permute.xlu0 %5331
    %5333 = vrot.lane.b32.xlu0 %v5233, 64
    %v5334 = vpop.permute.xlu0 %5333
    %5335 = vrot.lane.b32.xlu0 %v5236, 64
    %v5336 = vpop.permute.xlu0 %5335
    %5337 = vrot.lane.b32.xlu0 %v5239, 64
    %v5338 = vpop.permute.xlu0 %5337
    %5339 = vrot.lane.b32.xlu0 %v5242, 64
    %v5340 = vpop.permute.xlu0 %5339
    %5341 = vrot.lane.b32.xlu0 %v5245, 64
    %v5342 = vpop.permute.xlu0 %5341
    %v5375 = vsel %vm4608, %v5056, %v5280
    %v5376 = vsel %vm4608, %v5059, %v5282
    %v5377 = vsel %vm4608, %v5062, %v5284
    %v5378 = vsel %vm4608, %v5065, %v5286
    %v5379 = vsel %vm4608, %v5068, %v5288
    %v5380 = vsel %vm4608, %v5071, %v5290
    %v5381 = vsel %vm4608, %v5074, %v5292
    %v5382 = vsel %vm4608, %v5077, %v5294
    %v5383 = vsel %vm4608, %v5080, %v5296
    %v5384 = vsel %vm4608, %v5083, %v5298
    %v5385 = vsel %vm4608, %v5086, %v5300
    %v5386 = vsel %vm4608, %v5089, %v5302
    %v5387 = vsel %vm4608, %v5092, %v5304
    %v5388 = vsel %vm4608, %v5095, %v5306
    %v5389 = vsel %vm4608, %v5098, %v5308
    %v5390 = vsel %vm4608, %v5101, %v5310
    %v5391 = vsel %vm4608, %v5104, %v5312
    %v5392 = vsel %vm4608, %v5107, %v5314
    %v5393 = vsel %vm4608, %v5110, %v5316
    %v5394 = vsel %vm4608, %v5113, %v5318
    %v5395 = vsel %vm4608, %v5116, %v5320
    %v5396 = vsel %vm4608, %v5119, %v5322
    %v5397 = vsel %vm4608, %v5122, %v5324
    %v5398 = vsel %vm4608, %v5125, %v5326
    %v5399 = vsel %vm4608, %v5128, %v5328
    %v5400 = vsel %vm4608, %v5131, %v5330
    %v5401 = vsel %vm4608, %v5134, %v5332
    %v5402 = vsel %vm4608, %v5137, %v5334
    %v5403 = vsel %vm4608, %v5140, %v5336
    %v5404 = vsel %vm4608, %v5143, %v5338
    %v5405 = vsel %vm4608, %v5146, %v5340
    %v5406 = vsel %vm4608, %v5149, %v5342
    %s5407 = scalar_lea.vmem [#allocation2], 256
    %5408 = vst [vmem:[%s5407] sm:$0xff] %v5375
    %5409 = vst [vmem:[%s5407 + $0x8] sm:$0xff] %v5376
    %5410 = vst [vmem:[%s5407 + $0x10] sm:$0xff] %v5377
    %5411 = vst [vmem:[%s5407 + $0x18] sm:$0xff] %v5378
    %5412 = vst [vmem:[%s5407 + $0x20] sm:$0xff] %v5379
    %5413 = vst [vmem:[%s5407 + $0x28] sm:$0xff] %v5380
    %5414 = vst [vmem:[%s5407 + $0x30] sm:$0xff] %v5381
    %5415 = vst [vmem:[%s5407 + $0x38] sm:$0xff] %v5382
    %5416 = vst [vmem:[%s5407 + $0x40] sm:$0xff] %v5383
    %5417 = vst [vmem:[%s5407 + $0x48] sm:$0xff] %v5384
    %5418 = vst [vmem:[%s5407 + $0x50] sm:$0xff] %v5385
    %5419 = vst [vmem:[%s5407 + $0x58] sm:$0xff] %v5386
    %5420 = vst [vmem:[%s5407 + $0x60] sm:$0xff] %v5387
    %5421 = vst [vmem:[%s5407 + $0x68] sm:$0xff] %v5388
    %5422 = vst [vmem:[%s5407 + $0x70] sm:$0xff] %v5389
    %5423 = vst [vmem:[%s5407 + $0x78] sm:$0xff] %v5390
    %5424 = vst [vmem:[%s5407 + $0x80] sm:$0xff] %v5391
    %5425 = vst [vmem:[%s5407 + $0x88] sm:$0xff] %v5392
    %5426 = vst [vmem:[%s5407 + $0x90] sm:$0xff] %v5393
    %5427 = vst [vmem:[%s5407 + $0x98] sm:$0xff] %v5394
    %5428 = vst [vmem:[%s5407 + $0xa0] sm:$0xff] %v5395
    %5429 = vst [vmem:[%s5407 + $0xa8] sm:$0xff] %v5396
    %5430 = vst [vmem:[%s5407 + $0xb0] sm:$0xff] %v5397
    %5431 = vst [vmem:[%s5407 + $0xb8] sm:$0xff] %v5398
    %5432 = vst [vmem:[%s5407 + $0xc0] sm:$0xff] %v5399
    %5433 = vst [vmem:[%s5407 + $0xc8] sm:$0xff] %v5400
    %5434 = vst [vmem:[%s5407 + $0xd0] sm:$0xff] %v5401
    %5435 = vst [vmem:[%s5407 + $0xd8] sm:$0xff] %v5402
    %5436 = vst [vmem:[%s5407 + $0xe0] sm:$0xff] %v5403
    %5437 = vst [vmem:[%s5407 + $0xe8] sm:$0xff] %v5404
    %5438 = vst [vmem:[%s5407 + $0xf0] sm:$0xff] %v5405
    %5439 = vst [vmem:[%s5407 + $0xf8] sm:$0xff] %v5406
    // Predicated region
    $region22: #{tpu_custom_call.1} parent=1 // pred_check
      _
    $region23: #{tpu_custom_call.1} parent=1 // pred_check_branch
      %5441 = sbr.rel (0) target = $region25
    $region24: #{tpu_custom_call.1} parent=1 // pred_region
      %5443 = vsyncadd [#allocation3], 0
      %s5444 = sshll.u32 [#allocation2], 4
      %s5445 = int_to_ptr.vmem [resolvable:$true] %s5444
      %s5446 = sshll.u32 %s5, 4
      %s5447 = int_to_ptr.hbm [resolvable:$true] %s5446
      %5452 = dma.vmem_to_hbm [thread:$0]  %s5445, 8192, %s5447, [#allocation3], 128, 128, 8
    $region25: #{tpu_custom_call.1} parent=1 // pred_fallthru
      _
    // Predicated region
    $region26: #{tpu_custom_call.1} parent=1 // pred_check
      _
    $region27: #{tpu_custom_call.1} parent=1 // pred_check_branch
      %5454 = sbr.rel (0) target = $region29
    $region28: #{tpu_custom_call.1} parent=1 // pred_region
      %5456 = dma.done [#allocation3], 8192
    $region29: #{tpu_custom_call.1} parent=1 // pred_fallthru
      _
    %5457 = vsyncpa [#allocation3], 1

</llo_original>
